<compile_context>
chip_gen: v7x
topology: tpu7x:2x2x1
jax: 0.10.0
libtpu: 0.0.40
codegen_flags: <defaults>
</compile_context>

<pallas_src>
import functools

import jax
import jax.numpy as jnp
from jax.experimental import pallas as pl
from jax.experimental.pallas import tpu as pltpu

# bf16 operands for the MXU on all generations; accumulation stays f32.
MXU_DTYPE = jnp.bfloat16


# ----------------------------------------------------------------------------
# Fused kernel: 2 bidirectional LSTM layers + BatchNorm1d + mean pool + FC.
# ----------------------------------------------------------------------------
def fused_kernel(x_ref, w1x_ref, w1h_ref, b1_ref,
                 w2x_ref, w2h_ref, b2_ref,
                 dirmask_ref, bmask_ref, gamma_ref, beta_ref, wfc_ref, bfc_ref,
                 out_ref,
                 xp_ref, y1_ref, y2_ref,
                 *, n_valid, unroll):
    T, B, G8 = xp_ref.shape          # G8 = 8 * H (fused gate width)
    H = y1_ref.shape[2] // 2         # per-direction hidden size
    H2 = 2 * H                       # hidden_dim (= width of one fused gate)

    # Forward-direction column selector (per-gate [fwd H | bwd H] layout).
    fwd_sel = dirmask_ref[...] != 0.0          # (1, 8H) bool

    def project(x_flat, wx_ref, b_ref):
        """Hoisted input projection for all T*B rows (one MXU call), then
        pre-reverse the backward-direction gate columns in time so the serial
        recurrence reads a single xp_ref[s] slab per step."""
        xp = jnp.dot(x_flat.astype(wx_ref.dtype), wx_ref[...],
                     preferred_element_type=jnp.float32) + b_ref[...]
        xp_ref[...] = xp.reshape(T, B, G8)

        def swap(s, _):
            t = T - 1 - s
            a = xp_ref[s]
            b = xp_ref[t]
            xp_ref[s] = jnp.where(fwd_sel, a, b)
            xp_ref[t] = jnp.where(fwd_sel, b, a)
            return 0

        jax.lax.fori_loop(0, (T + 1) // 2, swap, 0, unroll=unroll)

    def bidir_layer(whh_ref, y_ref):
        """Fused fwd+bwd LSTM recurrence over the pre-reversed gate inputs."""
        whh = whh_ref[...]           # hoisted; block-diagonal (2H, 8H)

        def step(s, carry):
            h, c = carry                               # (B, 2H) each, f32
            g = xp_ref[s] + jnp.dot(h.astype(whh.dtype), whh,
                                    preferred_element_type=jnp.float32)
            # gate order (i, f, o, g): one sigmoid + one tanh per step.
            sig = jax.nn.sigmoid(g[:, :3 * H2])
            c_bar = jnp.tanh(g[:, 3 * H2:])
            c_new = sig[:, H2:2 * H2] * c + sig[:, :H2] * c_bar
            h_new = sig[:, 2 * H2:3 * H2] * jnp.tanh(c_new)
            # merged output scratch: fwd half at time s, bwd half at T-1-s.
            y_ref[s, :, :H] = h_new[:, :H]
            y_ref[T - 1 - s, :, H:] = h_new[:, H:]
            return h_new, c_new

        zeros = jnp.zeros((B, H2), jnp.float32)
        jax.lax.fori_loop(0, T, step, (zeros, zeros), unroll=unroll)

    # ---------------- layer 1 ----------------
    project(x_ref[...], w1x_ref, b1_ref)
    bidir_layer(w1h_ref, y1_ref)

    # ---------------- layer 2 (input = merged layer-1 output) ---------------
    project(y1_ref[...].reshape(T * B, H2), w2x_ref, b2_ref)
    bidir_layer(w2h_ref, y2_ref)

    # -------- head: BatchNorm1d (batch stats) + mean pool over T + Linear ----
    y2 = y2_ref[...]                                    # (T, B, 2H)
    sum_tb = jnp.sum(y2, axis=0)                        # (B, 2H)
    sumsq_tb = jnp.sum(y2 * y2, axis=0)                 # (B, 2H)
    bmask = bmask_ref[...]                              # (B, 1): 1.0 on real rows
    inv_n = 1.0 / float(n_valid * T)
    mu = jnp.sum(sum_tb * bmask, axis=0, keepdims=True) * inv_n        # (1, 2H)
    ex2 = jnp.sum(sumsq_tb * bmask, axis=0, keepdims=True) * inv_n
    var = ex2 - mu * mu                                 # biased (training BN)
    scale = jax.lax.rsqrt(var + 1e-5) * gamma_ref[...]
    # BatchNorm is a per-feature affine map, so it commutes with mean pooling.
    pooled = (sum_tb * (1.0 / T) - mu) * scale + beta_ref[...]
    # dropout (p=0.1): identity at inference
    out = jnp.dot(pooled.astype(wfc_ref.dtype), wfc_ref[...],
                  preferred_element_type=jnp.float32) + bfc_ref[...]
    out_ref[...] = out.astype(out_ref.dtype)


# ----------------------------------------------------------------------------
# Parameter construction / packing
# ----------------------------------------------------------------------------
def xavier_uniform(key, shape):
    fan_out, fan_in = shape
    bound = float(jnp.sqrt(6.0 / (fan_in + fan_out)))
    return jax.random.uniform(key, shape, jnp.float32, -bound, bound)


# PyTorch LSTM rows are (i, f, g, o) blocks; packed column order is (i, f, o, g)
# so the three sigmoid gates are contiguous in the fused gate vector.
_GATE_ORDER = (0, 1, 3, 2)


def pack_bidir_weights(wih_f, whh_f, b_f, wih_b, whh_b, b_b):
    """Pack PyTorch-layout per-direction LSTM weights into the fused layout.

    Column layout (gate-major, packed order i,f,o,g): for packed gate slot k:
      cols [k*2H, k*2H+H)     = forward-direction gate
      cols [k*2H+H, (k+1)*2H) = backward-direction gate
    Returns (W_x: (in_dim, 8H), W_h block-diag: (2H, 8H), bias: (1, 8H)).
    """
    fourH, in_dim = wih_f.shape
    H = fourH // 4
    wx = jnp.zeros((in_dim, 8 * H), jnp.float32)
    wh = jnp.zeros((2 * H, 8 * H), jnp.float32)
    bb = jnp.zeros((1, 8 * H), jnp.float32)
    for kp, kt in enumerate(_GATE_ORDER):
        cf, cb = kp * 2 * H, kp * 2 * H + H
        rs = slice(kt * H, (kt + 1) * H)
        wx = wx.at[:, cf:cf + H].set(wih_f[rs, :].T)
        wx = wx.at[:, cb:cb + H].set(wih_b[rs, :].T)
        wh = wh.at[0:H, cf:cf + H].set(whh_f[rs, :].T)
        wh = wh.at[H:2 * H, cb:cb + H].set(whh_b[rs, :].T)
        bb = bb.at[0, cf:cf + H].set(b_f[rs])
        bb = bb.at[0, cb:cb + H].set(b_b[rs])
    return wx, wh, bb


def init_params(key, vocab_size, embedding_dim, hidden_dim, output_dim):
    assert hidden_dim % 2 == 0
    H = hidden_dim // 2
    keys = jax.random.split(key, 8)

    # NewsEmbedding.init_weight: uniform(-0.05, 0.05)
    emb = jax.random.uniform(keys[0], (vocab_size, embedding_dim),
                             jnp.float32, -0.05, 0.05)

    def lstm_dir(k, in_dim):
        k1, k2 = jax.random.split(k)
        wih = xavier_uniform(k1, (4 * H, in_dim))
        whh = xavier_uniform(k2, (4 * H, H))
        b = jnp.zeros((4 * H,), jnp.float32)   # b_ih + b_hh (both zero-init)
        return wih, whh, b

    w1x, w1h, b1 = pack_bidir_weights(*lstm_dir(keys[1], embedding_dim),
                                      *lstm_dir(keys[2], embedding_dim))
    w2x, w2h, b2 = pack_bidir_weights(*lstm_dir(keys[3], hidden_dim),
                                      *lstm_dir(keys[4], hidden_dim))

    wfc = xavier_uniform(keys[5], (output_dim, hidden_dim)).T   # (hidden, out)
    bfc = jnp.zeros((1, output_dim), jnp.float32)
    gamma = jnp.ones((1, hidden_dim), jnp.float32)
    beta = jnp.zeros((1, hidden_dim), jnp.float32)

    # Forward-direction column selector for the fused (gate-major) layout.
    col = jnp.arange(8 * H)
    dirmask = ((col % (2 * H)) < H).astype(jnp.float32)[None, :]

    return dict(emb=emb, w1x=w1x, w1h=w1h, b1=b1, w2x=w2x, w2h=w2h, b2=b2,
                wfc=wfc, bfc=bfc, gamma=gamma, beta=beta, dirmask=dirmask)


# ----------------------------------------------------------------------------
# Forward pass
# ----------------------------------------------------------------------------
@jax.jit
def news_classifier_forward(params, tokens):
    B, T = tokens.shape
    E = params["emb"].shape[1]
    hidden = params["gamma"].shape[1]
    out_dim = params["bfc"].shape[1]

    # Pad the batch to a multiple of 8 sublanes (fills vregs / MXU rows).
    Bp = max(8, ((B + 7) // 8) * 8)
    tok = tokens if Bp == B else jnp.pad(tokens, ((0, Bp - B), (0, 0)))
    bmask = (jnp.arange(Bp) < B).astype(jnp.float32)[:, None]   # (Bp, 1)

    # NewsEmbedding: nn.Embedding lookup (single XLA gather), time-major flat.
    # TODO(synk): training-mode dropout masks (embedding p=0.3, head p=0.1)
    # and eval-mode BatchNorm running statistics.
    x = jnp.take(params["emb"], tok.T, axis=0)           # (T, Bp, E)
    x = x.reshape(T * Bp, E).astype(MXU_DTYPE)

    # Full unroll only for small T; modest unroll otherwise (vreg pressure).
    unroll = True if T <= 32 else 8

    kernel = functools.partial(fused_kernel, n_valid=B, unroll=unroll)
    vmem = pl.BlockSpec(memory_space=pltpu.MemorySpace.VMEM)
    out = pl.pallas_call(
        kernel,
        out_shape=jax.ShapeDtypeStruct((Bp, out_dim), jnp.float32),
        in_specs=[vmem] * 13,
        out_specs=vmem,
        scratch_shapes=[
            pltpu.VMEM((T, Bp, 4 * hidden), jnp.float32),  # pre-reversed gate inputs
            pltpu.VMEM((T, Bp, hidden), jnp.float32),      # layer-1 merged output
            pltpu.VMEM((T, Bp, hidden), jnp.float32),      # layer-2 merged output
        ],
        compiler_params=pltpu.CompilerParams(
            vmem_limit_bytes=32 * 1024 * 1024),
    )(x,
      params["w1x"].astype(MXU_DTYPE), params["w1h"].astype(MXU_DTYPE),
      params["b1"],
      params["w2x"].astype(MXU_DTYPE), params["w2h"].astype(MXU_DTYPE),
      params["b2"],
      params["dirmask"], bmask, params["gamma"], params["beta"],
      params["wfc"].astype(MXU_DTYPE), params["bfc"])
    return out[:B]


if __name__ == "__main__":
    vocab_size, embedding_dim, hidden_dim, output_dim = 100, 16, 32, 8
    B, T = 2, 8

    key = jax.random.PRNGKey(0)
    kp, kx = jax.random.split(key)
    params = init_params(kp, vocab_size, embedding_dim, hidden_dim, output_dim)
    tokens = jax.random.randint(kx, (B, T), 0, vocab_size, dtype=jnp.int32)

    out = news_classifier_forward(params, tokens)
    jax.block_until_ready(out)
    assert out.shape == (B, output_dim)
    print("KERNEL_OK")
</pallas_src>

<mosaic_0001>
module attributes {stable_mosaic.version = 11 : i64} {
  func.func @fused_kernel(%arg0: memref<64x16xbf16, #tpu.memory_space<vmem>>, %arg1: memref<16x128xbf16, #tpu.memory_space<vmem>>, %arg2: memref<32x128xbf16, #tpu.memory_space<vmem>>, %arg3: memref<1x128xf32, #tpu.memory_space<vmem>>, %arg4: memref<32x128xbf16, #tpu.memory_space<vmem>>, %arg5: memref<32x128xbf16, #tpu.memory_space<vmem>>, %arg6: memref<1x128xf32, #tpu.memory_space<vmem>>, %arg7: memref<1x128xf32, #tpu.memory_space<vmem>>, %arg8: memref<8x1xf32, #tpu.memory_space<vmem>>, %arg9: memref<1x32xf32, #tpu.memory_space<vmem>>, %arg10: memref<1x32xf32, #tpu.memory_space<vmem>>, %arg11: memref<32x8xbf16, #tpu.memory_space<vmem>>, %arg12: memref<1x8xf32, #tpu.memory_space<vmem>>, %arg13: memref<8x8xf32, #tpu.memory_space<vmem>>, %arg14: memref<8x8x128xf32, #tpu.memory_space<vmem>>, %arg15: memref<8x8x32xf32, #tpu.memory_space<vmem>>, %arg16: memref<8x8x32xf32, #tpu.memory_space<vmem>>) attributes {dimension_semantics = [], scalar_prefetch = 0 : i64, scratch_operands = 3 : i64, tpu.core_type = #tpu.core_type<tc>} {
    %c0 = arith.constant 0 : index
    %c0_0 = arith.constant 0 : index
    %0 = vector.load %arg7[%c0, %c0_0] : memref<1x128xf32, #tpu.memory_space<vmem>>, vector<1x128xf32>
    %cst = arith.constant 0.000000e+00 : f32
    %1 = vector.broadcast %cst : f32 to vector<1x128xf32>
    %2 = arith.cmpf one, %0, %1 : vector<1x128xf32>
    %c0_1 = arith.constant 0 : index
    %c0_2 = arith.constant 0 : index
    %3 = vector.load %arg0[%c0_1, %c0_2] : memref<64x16xbf16, #tpu.memory_space<vmem>>, vector<64x16xbf16>
    %c0_3 = arith.constant 0 : index
    %c0_4 = arith.constant 0 : index
    %4 = vector.load %arg1[%c0_3, %c0_4] : memref<16x128xbf16, #tpu.memory_space<vmem>>, vector<16x128xbf16>
    %cst_5 = arith.constant dense<0.000000e+00> : vector<64x128xf32>
    %5 = tpu.matmul %3, %4, %cst_5 {dimension_numbers = #tpu.dot_dimension_numbers<[1], [0], [0], [1], [0, 0, 1, 1], [], []>} : vector<64x16xbf16>, vector<16x128xbf16>, vector<64x128xf32> -> vector<64x128xf32>
    %c0_6 = arith.constant 0 : index
    %c0_7 = arith.constant 0 : index
    %6 = vector.load %arg3[%c0_6, %c0_7] : memref<1x128xf32, #tpu.memory_space<vmem>>, vector<1x128xf32>
    %7 = vector.broadcast %6 : vector<1x128xf32> to vector<64x128xf32>
    %8 = arith.addf %5, %7 : vector<64x128xf32>
    %9 = vector.shape_cast %8 : vector<64x128xf32> to vector<8x8x128xf32>
    %c0_8 = arith.constant 0 : index
    %c0_9 = arith.constant 0 : index
    %c0_10 = arith.constant 0 : index
    %10 = vector.load %arg14[%c0_8, %c0_9, %c0_10] : memref<8x8x128xf32, #tpu.memory_space<vmem>>, vector<8x8x128xf32>
    tpu.vector_store %arg14[%c0_8, %c0_9, %c0_10], %9 {strides = array<i32>} : memref<8x8x128xf32, #tpu.memory_space<vmem>>, vector<8x8x128xf32>,
    %c0_i32 = arith.constant 0 : i32
    %c7_i32 = arith.constant 7 : i32
    %11 = arith.subi %c7_i32, %c0_i32 : i32
    %12 = arith.index_cast %c0_i32 : i32 to index
    %c0_11 = arith.constant 0 : index
    %c0_12 = arith.constant 0 : index
    %13 = vector.load %arg14[%12, %c0_11, %c0_12] : memref<8x8x128xf32, #tpu.memory_space<vmem>>, vector<1x8x128xf32>
    %14 = vector.shape_cast %13 : vector<1x8x128xf32> to vector<8x128xf32>
    %15 = arith.index_cast %11 : i32 to index
    %c0_13 = arith.constant 0 : index
    %c0_14 = arith.constant 0 : index
    %16 = vector.load %arg14[%15, %c0_13, %c0_14] : memref<8x8x128xf32, #tpu.memory_space<vmem>>, vector<1x8x128xf32>
    %17 = vector.shape_cast %16 : vector<1x8x128xf32> to vector<8x128xf32>
    %18 = vector.shape_cast %2 : vector<1x128xi1> to vector<1x128xi1>
    %19 = vector.broadcast %18 : vector<1x128xi1> to vector<8x128xi1>
    %20 = arith.select %19, %14, %17 : vector<8x128xi1>, vector<8x128xf32>
    %21 = arith.index_cast %c0_i32 : i32 to index
    %c0_15 = arith.constant 0 : index
    %c0_16 = arith.constant 0 : index
    %22 = vector.load %arg14[%21, %c0_15, %c0_16] : memref<8x8x128xf32, #tpu.memory_space<vmem>>, vector<1x8x128xf32>
    %23 = vector.shape_cast %22 : vector<1x8x128xf32> to vector<8x128xf32>
    %24 = vector.shape_cast %20 : vector<8x128xf32> to vector<1x8x128xf32>
    tpu.vector_store %arg14[%21, %c0_15, %c0_16], %24 {strides = array<i32>} : memref<8x8x128xf32, #tpu.memory_space<vmem>>, vector<1x8x128xf32>,
    %25 = vector.shape_cast %2 : vector<1x128xi1> to vector<1x128xi1>
    %26 = vector.broadcast %25 : vector<1x128xi1> to vector<8x128xi1>
    %27 = arith.select %26, %17, %14 : vector<8x128xi1>, vector<8x128xf32>
    %28 = arith.index_cast %11 : i32 to index
    %c0_17 = arith.constant 0 : index
    %c0_18 = arith.constant 0 : index
    %29 = vector.load %arg14[%28, %c0_17, %c0_18] : memref<8x8x128xf32, #tpu.memory_space<vmem>>, vector<1x8x128xf32>
    %30 = vector.shape_cast %29 : vector<1x8x128xf32> to vector<8x128xf32>
    %31 = vector.shape_cast %27 : vector<8x128xf32> to vector<1x8x128xf32>
    tpu.vector_store %arg14[%28, %c0_17, %c0_18], %31 {strides = array<i32>} : memref<8x8x128xf32, #tpu.memory_space<vmem>>, vector<1x8x128xf32>,
    %c1_i32 = arith.constant 1 : i32
    %c7_i32_19 = arith.constant 7 : i32
    %32 = arith.subi %c7_i32_19, %c1_i32 : i32
    %33 = arith.index_cast %c1_i32 : i32 to index
    %c0_20 = arith.constant 0 : index
    %c0_21 = arith.constant 0 : index
    %34 = vector.load %arg14[%33, %c0_20, %c0_21] : memref<8x8x128xf32, #tpu.memory_space<vmem>>, vector<1x8x128xf32>
    %35 = vector.shape_cast %34 : vector<1x8x128xf32> to vector<8x128xf32>
    %36 = arith.index_cast %32 : i32 to index
    %c0_22 = arith.constant 0 : index
    %c0_23 = arith.constant 0 : index
    %37 = vector.load %arg14[%36, %c0_22, %c0_23] : memref<8x8x128xf32, #tpu.memory_space<vmem>>, vector<1x8x128xf32>
    %38 = vector.shape_cast %37 : vector<1x8x128xf32> to vector<8x128xf32>
    %39 = vector.shape_cast %2 : vector<1x128xi1> to vector<1x128xi1>
    %40 = vector.broadcast %39 : vector<1x128xi1> to vector<8x128xi1>
    %41 = arith.select %40, %35, %38 : vector<8x128xi1>, vector<8x128xf32>
    %42 = arith.index_cast %c1_i32 : i32 to index
    %c0_24 = arith.constant 0 : index
    %c0_25 = arith.constant 0 : index
    %43 = vector.load %arg14[%42, %c0_24, %c0_25] : memref<8x8x128xf32, #tpu.memory_space<vmem>>, vector<1x8x128xf32>
    %44 = vector.shape_cast %43 : vector<1x8x128xf32> to vector<8x128xf32>
    %45 = vector.shape_cast %41 : vector<8x128xf32> to vector<1x8x128xf32>
    tpu.vector_store %arg14[%42, %c0_24, %c0_25], %45 {strides = array<i32>} : memref<8x8x128xf32, #tpu.memory_space<vmem>>, vector<1x8x128xf32>,
    %46 = vector.shape_cast %2 : vector<1x128xi1> to vector<1x128xi1>
    %47 = vector.broadcast %46 : vector<1x128xi1> to vector<8x128xi1>
    %48 = arith.select %47, %38, %35 : vector<8x128xi1>, vector<8x128xf32>
    %49 = arith.index_cast %32 : i32 to index
    %c0_26 = arith.constant 0 : index
    %c0_27 = arith.constant 0 : index
    %50 = vector.load %arg14[%49, %c0_26, %c0_27] : memref<8x8x128xf32, #tpu.memory_space<vmem>>, vector<1x8x128xf32>
    %51 = vector.shape_cast %50 : vector<1x8x128xf32> to vector<8x128xf32>
    %52 = vector.shape_cast %48 : vector<8x128xf32> to vector<1x8x128xf32>
    tpu.vector_store %arg14[%49, %c0_26, %c0_27], %52 {strides = array<i32>} : memref<8x8x128xf32, #tpu.memory_space<vmem>>, vector<1x8x128xf32>,
    %c2_i32 = arith.constant 2 : i32
    %c7_i32_28 = arith.constant 7 : i32
    %53 = arith.subi %c7_i32_28, %c2_i32 : i32
    %54 = arith.index_cast %c2_i32 : i32 to index
    %c0_29 = arith.constant 0 : index
    %c0_30 = arith.constant 0 : index
    %55 = vector.load %arg14[%54, %c0_29, %c0_30] : memref<8x8x128xf32, #tpu.memory_space<vmem>>, vector<1x8x128xf32>
    %56 = vector.shape_cast %55 : vector<1x8x128xf32> to vector<8x128xf32>
    %57 = arith.index_cast %53 : i32 to index
    %c0_31 = arith.constant 0 : index
    %c0_32 = arith.constant 0 : index
    %58 = vector.load %arg14[%57, %c0_31, %c0_32] : memref<8x8x128xf32, #tpu.memory_space<vmem>>, vector<1x8x128xf32>
    %59 = vector.shape_cast %58 : vector<1x8x128xf32> to vector<8x128xf32>
    %60 = vector.shape_cast %2 : vector<1x128xi1> to vector<1x128xi1>
    %61 = vector.broadcast %60 : vector<1x128xi1> to vector<8x128xi1>
    %62 = arith.select %61, %56, %59 : vector<8x128xi1>, vector<8x128xf32>
    %63 = arith.index_cast %c2_i32 : i32 to index
    %c0_33 = arith.constant 0 : index
    %c0_34 = arith.constant 0 : index
    %64 = vector.load %arg14[%63, %c0_33, %c0_34] : memref<8x8x128xf32, #tpu.memory_space<vmem>>, vector<1x8x128xf32>
    %65 = vector.shape_cast %64 : vector<1x8x128xf32> to vector<8x128xf32>
    %66 = vector.shape_cast %62 : vector<8x128xf32> to vector<1x8x128xf32>
    tpu.vector_store %arg14[%63, %c0_33, %c0_34], %66 {strides = array<i32>} : memref<8x8x128xf32, #tpu.memory_space<vmem>>, vector<1x8x128xf32>,
    %67 = vector.shape_cast %2 : vector<1x128xi1> to vector<1x128xi1>
    %68 = vector.broadcast %67 : vector<1x128xi1> to vector<8x128xi1>
    %69 = arith.select %68, %59, %56 : vector<8x128xi1>, vector<8x128xf32>
    %70 = arith.index_cast %53 : i32 to index
    %c0_35 = arith.constant 0 : index
    %c0_36 = arith.constant 0 : index
    %71 = vector.load %arg14[%70, %c0_35, %c0_36] : memref<8x8x128xf32, #tpu.memory_space<vmem>>, vector<1x8x128xf32>
    %72 = vector.shape_cast %71 : vector<1x8x128xf32> to vector<8x128xf32>
    %73 = vector.shape_cast %69 : vector<8x128xf32> to vector<1x8x128xf32>
    tpu.vector_store %arg14[%70, %c0_35, %c0_36], %73 {strides = array<i32>} : memref<8x8x128xf32, #tpu.memory_space<vmem>>, vector<1x8x128xf32>,
    %c3_i32 = arith.constant 3 : i32
    %c7_i32_37 = arith.constant 7 : i32
    %74 = arith.subi %c7_i32_37, %c3_i32 : i32
    %75 = arith.index_cast %c3_i32 : i32 to index
    %c0_38 = arith.constant 0 : index
    %c0_39 = arith.constant 0 : index
    %76 = vector.load %arg14[%75, %c0_38, %c0_39] : memref<8x8x128xf32, #tpu.memory_space<vmem>>, vector<1x8x128xf32>
    %77 = vector.shape_cast %76 : vector<1x8x128xf32> to vector<8x128xf32>
    %78 = arith.index_cast %74 : i32 to index
    %c0_40 = arith.constant 0 : index
    %c0_41 = arith.constant 0 : index
    %79 = vector.load %arg14[%78, %c0_40, %c0_41] : memref<8x8x128xf32, #tpu.memory_space<vmem>>, vector<1x8x128xf32>
    %80 = vector.shape_cast %79 : vector<1x8x128xf32> to vector<8x128xf32>
    %81 = vector.shape_cast %2 : vector<1x128xi1> to vector<1x128xi1>
    %82 = vector.broadcast %81 : vector<1x128xi1> to vector<8x128xi1>
    %83 = arith.select %82, %77, %80 : vector<8x128xi1>, vector<8x128xf32>
    %84 = arith.index_cast %c3_i32 : i32 to index
    %c0_42 = arith.constant 0 : index
    %c0_43 = arith.constant 0 : index
    %85 = vector.load %arg14[%84, %c0_42, %c0_43] : memref<8x8x128xf32, #tpu.memory_space<vmem>>, vector<1x8x128xf32>
    %86 = vector.shape_cast %85 : vector<1x8x128xf32> to vector<8x128xf32>
    %87 = vector.shape_cast %83 : vector<8x128xf32> to vector<1x8x128xf32>
    tpu.vector_store %arg14[%84, %c0_42, %c0_43], %87 {strides = array<i32>} : memref<8x8x128xf32, #tpu.memory_space<vmem>>, vector<1x8x128xf32>,
    %88 = vector.shape_cast %2 : vector<1x128xi1> to vector<1x128xi1>
    %89 = vector.broadcast %88 : vector<1x128xi1> to vector<8x128xi1>
    %90 = arith.select %89, %80, %77 : vector<8x128xi1>, vector<8x128xf32>
    %91 = arith.index_cast %74 : i32 to index
    %c0_44 = arith.constant 0 : index
    %c0_45 = arith.constant 0 : index
    %92 = vector.load %arg14[%91, %c0_44, %c0_45] : memref<8x8x128xf32, #tpu.memory_space<vmem>>, vector<1x8x128xf32>
    %93 = vector.shape_cast %92 : vector<1x8x128xf32> to vector<8x128xf32>
    %94 = vector.shape_cast %90 : vector<8x128xf32> to vector<1x8x128xf32>
    tpu.vector_store %arg14[%91, %c0_44, %c0_45], %94 {strides = array<i32>} : memref<8x8x128xf32, #tpu.memory_space<vmem>>, vector<1x8x128xf32>,
    %c4_i32 = arith.constant 4 : i32
    %c0_46 = arith.constant 0 : index
    %c0_47 = arith.constant 0 : index
    %95 = vector.load %arg2[%c0_46, %c0_47] : memref<32x128xbf16, #tpu.memory_space<vmem>>, vector<32x128xbf16>
    %cst_48 = arith.constant 0.000000e+00 : f32
    %96 = vector.broadcast %cst_48 : f32 to vector<8x32xf32>
    %c0_i32_49 = arith.constant 0 : i32
    %97 = arith.index_cast %c0_i32_49 : i32 to index
    %c0_50 = arith.constant 0 : index
    %c0_51 = arith.constant 0 : index
    %98 = vector.load %arg14[%97, %c0_50, %c0_51] : memref<8x8x128xf32, #tpu.memory_space<vmem>>, vector<1x8x128xf32>
    %99 = vector.shape_cast %98 : vector<1x8x128xf32> to vector<8x128xf32>
    %100 = arith.truncf %96 : vector<8x32xf32> to vector<8x32xbf16>
    %cst_52 = arith.constant dense<0.000000e+00> : vector<8x128xf32>
    %101 = tpu.matmul %100, %95, %cst_52 {dimension_numbers = #tpu.dot_dimension_numbers<[1], [0], [0], [1], [0, 0, 1, 1], [], []>} : vector<8x32xbf16>, vector<32x128xbf16>, vector<8x128xf32> -> vector<8x128xf32>
    %102 = arith.addf %99, %101 : vector<8x128xf32>
    %103 = vector.extract_strided_slice %102 {offsets = [0, 0], sizes = [8, 96], strides = [1, 1]} : vector<8x128xf32> to vector<8x96xf32>
    %104 = arith.negf %103 : vector<8x96xf32>
    %105 = math.exp %104 : vector<8x96xf32>
    %cst_53 = arith.constant 1.000000e+00 : f32
    %106 = vector.broadcast %cst_53 : f32 to vector<8x96xf32>
    %107 = arith.addf %106, %105 : vector<8x96xf32>
    %108 = arith.divf %106, %107 : vector<8x96xf32>
    %109 = vector.extract_strided_slice %102 {offsets = [0, 96], sizes = [8, 32], strides = [1, 1]} : vector<8x128xf32> to vector<8x32xf32>
    %110 = math.tanh %109 : vector<8x32xf32>
    %111 = vector.extract_strided_slice %108 {offsets = [0, 32], sizes = [8, 32], strides = [1, 1]} : vector<8x96xf32> to vector<8x32xf32>
    %112 = arith.mulf %111, %96 : vector<8x32xf32>
    %113 = vector.extract_strided_slice %108 {offsets = [0, 0], sizes = [8, 32], strides = [1, 1]} : vector<8x96xf32> to vector<8x32xf32>
    %114 = arith.mulf %113, %110 : vector<8x32xf32>
    %115 = arith.addf %112, %114 : vector<8x32xf32>
    %116 = vector.extract_strided_slice %108 {offsets = [0, 64], sizes = [8, 32], strides = [1, 1]} : vector<8x96xf32> to vector<8x32xf32>
    %117 = math.tanh %115 : vector<8x32xf32>
    %118 = arith.mulf %116, %117 : vector<8x32xf32>
    %119 = vector.extract_strided_slice %118 {offsets = [0, 0], sizes = [8, 16], strides = [1, 1]} : vector<8x32xf32> to vector<8x16xf32>
    %120 = arith.index_cast %c0_i32_49 : i32 to index
    %c0_54 = arith.constant 0 : index
    %c0_55 = arith.constant 0 : index
    %121 = vector.load %arg15[%120, %c0_54, %c0_55] : memref<8x8x32xf32, #tpu.memory_space<vmem>>, vector<1x8x16xf32>
    %122 = vector.shape_cast %121 : vector<1x8x16xf32> to vector<8x16xf32>
    %123 = vector.shape_cast %119 : vector<8x16xf32> to vector<1x8x16xf32>
    tpu.vector_store %arg15[%120, %c0_54, %c0_55], %123 {strides = array<i32>} : memref<8x8x32xf32, #tpu.memory_space<vmem>>, vector<1x8x16xf32>,
    %124 = vector.extract_strided_slice %118 {offsets = [0, 16], sizes = [8, 16], strides = [1, 1]} : vector<8x32xf32> to vector<8x16xf32>
    %c7_i32_56 = arith.constant 7 : i32
    %125 = arith.subi %c7_i32_56, %c0_i32_49 : i32
    %126 = arith.index_cast %125 : i32 to index
    %c0_57 = arith.constant 0 : index
    %c16 = arith.constant 16 : index
    %127 = vector.load %arg15[%126, %c0_57, %c16] : memref<8x8x32xf32, #tpu.memory_space<vmem>>, vector<1x8x16xf32>
    %128 = vector.shape_cast %127 : vector<1x8x16xf32> to vector<8x16xf32>
    %129 = vector.shape_cast %124 : vector<8x16xf32> to vector<1x8x16xf32>
    tpu.vector_store %arg15[%126, %c0_57, %c16], %129 {strides = array<i32>} : memref<8x8x32xf32, #tpu.memory_space<vmem>>, vector<1x8x16xf32>,
    %c1_i32_58 = arith.constant 1 : i32
    %130 = arith.index_cast %c1_i32_58 : i32 to index
    %c0_59 = arith.constant 0 : index
    %c0_60 = arith.constant 0 : index
    %131 = vector.load %arg14[%130, %c0_59, %c0_60] : memref<8x8x128xf32, #tpu.memory_space<vmem>>, vector<1x8x128xf32>
    %132 = vector.shape_cast %131 : vector<1x8x128xf32> to vector<8x128xf32>
    %133 = arith.truncf %118 : vector<8x32xf32> to vector<8x32xbf16>
    %cst_61 = arith.constant dense<0.000000e+00> : vector<8x128xf32>
    %134 = tpu.matmul %133, %95, %cst_61 {dimension_numbers = #tpu.dot_dimension_numbers<[1], [0], [0], [1], [0, 0, 1, 1], [], []>} : vector<8x32xbf16>, vector<32x128xbf16>, vector<8x128xf32> -> vector<8x128xf32>
    %135 = arith.addf %132, %134 : vector<8x128xf32>
    %136 = vector.extract_strided_slice %135 {offsets = [0, 0], sizes = [8, 96], strides = [1, 1]} : vector<8x128xf32> to vector<8x96xf32>
    %137 = arith.negf %136 : vector<8x96xf32>
    %138 = math.exp %137 : vector<8x96xf32>
    %cst_62 = arith.constant 1.000000e+00 : f32
    %139 = vector.broadcast %cst_62 : f32 to vector<8x96xf32>
    %140 = arith.addf %139, %138 : vector<8x96xf32>
    %141 = arith.divf %139, %140 : vector<8x96xf32>
    %142 = vector.extract_strided_slice %135 {offsets = [0, 96], sizes = [8, 32], strides = [1, 1]} : vector<8x128xf32> to vector<8x32xf32>
    %143 = math.tanh %142 : vector<8x32xf32>
    %144 = vector.extract_strided_slice %141 {offsets = [0, 32], sizes = [8, 32], strides = [1, 1]} : vector<8x96xf32> to vector<8x32xf32>
    %145 = arith.mulf %144, %115 : vector<8x32xf32>
    %146 = vector.extract_strided_slice %141 {offsets = [0, 0], sizes = [8, 32], strides = [1, 1]} : vector<8x96xf32> to vector<8x32xf32>
    %147 = arith.mulf %146, %143 : vector<8x32xf32>
    %148 = arith.addf %145, %147 : vector<8x32xf32>
    %149 = vector.extract_strided_slice %141 {offsets = [0, 64], sizes = [8, 32], strides = [1, 1]} : vector<8x96xf32> to vector<8x32xf32>
    %150 = math.tanh %148 : vector<8x32xf32>
    %151 = arith.mulf %149, %150 : vector<8x32xf32>
    %152 = vector.extract_strided_slice %151 {offsets = [0, 0], sizes = [8, 16], strides = [1, 1]} : vector<8x32xf32> to vector<8x16xf32>
    %153 = arith.index_cast %c1_i32_58 : i32 to index
    %c0_63 = arith.constant 0 : index
    %c0_64 = arith.constant 0 : index
    %154 = vector.load %arg15[%153, %c0_63, %c0_64] : memref<8x8x32xf32, #tpu.memory_space<vmem>>, vector<1x8x16xf32>
    %155 = vector.shape_cast %154 : vector<1x8x16xf32> to vector<8x16xf32>
    %156 = vector.shape_cast %152 : vector<8x16xf32> to vector<1x8x16xf32>
    tpu.vector_store %arg15[%153, %c0_63, %c0_64], %156 {strides = array<i32>} : memref<8x8x32xf32, #tpu.memory_space<vmem>>, vector<1x8x16xf32>,
    %157 = vector.extract_strided_slice %151 {offsets = [0, 16], sizes = [8, 16], strides = [1, 1]} : vector<8x32xf32> to vector<8x16xf32>
    %c7_i32_65 = arith.constant 7 : i32
    %158 = arith.subi %c7_i32_65, %c1_i32_58 : i32
    %159 = arith.index_cast %158 : i32 to index
    %c0_66 = arith.constant 0 : index
    %c16_67 = arith.constant 16 : index
    %160 = vector.load %arg15[%159, %c0_66, %c16_67] : memref<8x8x32xf32, #tpu.memory_space<vmem>>, vector<1x8x16xf32>
    %161 = vector.shape_cast %160 : vector<1x8x16xf32> to vector<8x16xf32>
    %162 = vector.shape_cast %157 : vector<8x16xf32> to vector<1x8x16xf32>
    tpu.vector_store %arg15[%159, %c0_66, %c16_67], %162 {strides = array<i32>} : memref<8x8x32xf32, #tpu.memory_space<vmem>>, vector<1x8x16xf32>,
    %c2_i32_68 = arith.constant 2 : i32
    %163 = arith.index_cast %c2_i32_68 : i32 to index
    %c0_69 = arith.constant 0 : index
    %c0_70 = arith.constant 0 : index
    %164 = vector.load %arg14[%163, %c0_69, %c0_70] : memref<8x8x128xf32, #tpu.memory_space<vmem>>, vector<1x8x128xf32>
    %165 = vector.shape_cast %164 : vector<1x8x128xf32> to vector<8x128xf32>
    %166 = arith.truncf %151 : vector<8x32xf32> to vector<8x32xbf16>
    %cst_71 = arith.constant dense<0.000000e+00> : vector<8x128xf32>
    %167 = tpu.matmul %166, %95, %cst_71 {dimension_numbers = #tpu.dot_dimension_numbers<[1], [0], [0], [1], [0, 0, 1, 1], [], []>} : vector<8x32xbf16>, vector<32x128xbf16>, vector<8x128xf32> -> vector<8x128xf32>
    %168 = arith.addf %165, %167 : vector<8x128xf32>
    %169 = vector.extract_strided_slice %168 {offsets = [0, 0], sizes = [8, 96], strides = [1, 1]} : vector<8x128xf32> to vector<8x96xf32>
    %170 = arith.negf %169 : vector<8x96xf32>
    %171 = math.exp %170 : vector<8x96xf32>
    %cst_72 = arith.constant 1.000000e+00 : f32
    %172 = vector.broadcast %cst_72 : f32 to vector<8x96xf32>
    %173 = arith.addf %172, %171 : vector<8x96xf32>
    %174 = arith.divf %172, %173 : vector<8x96xf32>
    %175 = vector.extract_strided_slice %168 {offsets = [0, 96], sizes = [8, 32], strides = [1, 1]} : vector<8x128xf32> to vector<8x32xf32>
    %176 = math.tanh %175 : vector<8x32xf32>
    %177 = vector.extract_strided_slice %174 {offsets = [0, 32], sizes = [8, 32], strides = [1, 1]} : vector<8x96xf32> to vector<8x32xf32>
    %178 = arith.mulf %177, %148 : vector<8x32xf32>
    %179 = vector.extract_strided_slice %174 {offsets = [0, 0], sizes = [8, 32], strides = [1, 1]} : vector<8x96xf32> to vector<8x32xf32>
    %180 = arith.mulf %179, %176 : vector<8x32xf32>
    %181 = arith.addf %178, %180 : vector<8x32xf32>
    %182 = vector.extract_strided_slice %174 {offsets = [0, 64], sizes = [8, 32], strides = [1, 1]} : vector<8x96xf32> to vector<8x32xf32>
    %183 = math.tanh %181 : vector<8x32xf32>
    %184 = arith.mulf %182, %183 : vector<8x32xf32>
    %185 = vector.extract_strided_slice %184 {offsets = [0, 0], sizes = [8, 16], strides = [1, 1]} : vector<8x32xf32> to vector<8x16xf32>
    %186 = arith.index_cast %c2_i32_68 : i32 to index
    %c0_73 = arith.constant 0 : index
    %c0_74 = arith.constant 0 : index
    %187 = vector.load %arg15[%186, %c0_73, %c0_74] : memref<8x8x32xf32, #tpu.memory_space<vmem>>, vector<1x8x16xf32>
    %188 = vector.shape_cast %187 : vector<1x8x16xf32> to vector<8x16xf32>
    %189 = vector.shape_cast %185 : vector<8x16xf32> to vector<1x8x16xf32>
    tpu.vector_store %arg15[%186, %c0_73, %c0_74], %189 {strides = array<i32>} : memref<8x8x32xf32, #tpu.memory_space<vmem>>, vector<1x8x16xf32>,
    %190 = vector.extract_strided_slice %184 {offsets = [0, 16], sizes = [8, 16], strides = [1, 1]} : vector<8x32xf32> to vector<8x16xf32>
    %c7_i32_75 = arith.constant 7 : i32
    %191 = arith.subi %c7_i32_75, %c2_i32_68 : i32
    %192 = arith.index_cast %191 : i32 to index
    %c0_76 = arith.constant 0 : index
    %c16_77 = arith.constant 16 : index
    %193 = vector.load %arg15[%192, %c0_76, %c16_77] : memref<8x8x32xf32, #tpu.memory_space<vmem>>, vector<1x8x16xf32>
    %194 = vector.shape_cast %193 : vector<1x8x16xf32> to vector<8x16xf32>
    %195 = vector.shape_cast %190 : vector<8x16xf32> to vector<1x8x16xf32>
    tpu.vector_store %arg15[%192, %c0_76, %c16_77], %195 {strides = array<i32>} : memref<8x8x32xf32, #tpu.memory_space<vmem>>, vector<1x8x16xf32>,
    %c3_i32_78 = arith.constant 3 : i32
    %196 = arith.index_cast %c3_i32_78 : i32 to index
    %c0_79 = arith.constant 0 : index
    %c0_80 = arith.constant 0 : index
    %197 = vector.load %arg14[%196, %c0_79, %c0_80] : memref<8x8x128xf32, #tpu.memory_space<vmem>>, vector<1x8x128xf32>
    %198 = vector.shape_cast %197 : vector<1x8x128xf32> to vector<8x128xf32>
    %199 = arith.truncf %184 : vector<8x32xf32> to vector<8x32xbf16>
    %cst_81 = arith.constant dense<0.000000e+00> : vector<8x128xf32>
    %200 = tpu.matmul %199, %95, %cst_81 {dimension_numbers = #tpu.dot_dimension_numbers<[1], [0], [0], [1], [0, 0, 1, 1], [], []>} : vector<8x32xbf16>, vector<32x128xbf16>, vector<8x128xf32> -> vector<8x128xf32>
    %201 = arith.addf %198, %200 : vector<8x128xf32>
    %202 = vector.extract_strided_slice %201 {offsets = [0, 0], sizes = [8, 96], strides = [1, 1]} : vector<8x128xf32> to vector<8x96xf32>
    %203 = arith.negf %202 : vector<8x96xf32>
    %204 = math.exp %203 : vector<8x96xf32>
    %cst_82 = arith.constant 1.000000e+00 : f32
    %205 = vector.broadcast %cst_82 : f32 to vector<8x96xf32>
    %206 = arith.addf %205, %204 : vector<8x96xf32>
    %207 = arith.divf %205, %206 : vector<8x96xf32>
    %208 = vector.extract_strided_slice %201 {offsets = [0, 96], sizes = [8, 32], strides = [1, 1]} : vector<8x128xf32> to vector<8x32xf32>
    %209 = math.tanh %208 : vector<8x32xf32>
    %210 = vector.extract_strided_slice %207 {offsets = [0, 32], sizes = [8, 32], strides = [1, 1]} : vector<8x96xf32> to vector<8x32xf32>
    %211 = arith.mulf %210, %181 : vector<8x32xf32>
    %212 = vector.extract_strided_slice %207 {offsets = [0, 0], sizes = [8, 32], strides = [1, 1]} : vector<8x96xf32> to vector<8x32xf32>
    %213 = arith.mulf %212, %209 : vector<8x32xf32>
    %214 = arith.addf %211, %213 : vector<8x32xf32>
    %215 = vector.extract_strided_slice %207 {offsets = [0, 64], sizes = [8, 32], strides = [1, 1]} : vector<8x96xf32> to vector<8x32xf32>
    %216 = math.tanh %214 : vector<8x32xf32>
    %217 = arith.mulf %215, %216 : vector<8x32xf32>
    %218 = vector.extract_strided_slice %217 {offsets = [0, 0], sizes = [8, 16], strides = [1, 1]} : vector<8x32xf32> to vector<8x16xf32>
    %219 = arith.index_cast %c3_i32_78 : i32 to index
    %c0_83 = arith.constant 0 : index
    %c0_84 = arith.constant 0 : index
    %220 = vector.load %arg15[%219, %c0_83, %c0_84] : memref<8x8x32xf32, #tpu.memory_space<vmem>>, vector<1x8x16xf32>
    %221 = vector.shape_cast %220 : vector<1x8x16xf32> to vector<8x16xf32>
    %222 = vector.shape_cast %218 : vector<8x16xf32> to vector<1x8x16xf32>
    tpu.vector_store %arg15[%219, %c0_83, %c0_84], %222 {strides = array<i32>} : memref<8x8x32xf32, #tpu.memory_space<vmem>>, vector<1x8x16xf32>,
    %223 = vector.extract_strided_slice %217 {offsets = [0, 16], sizes = [8, 16], strides = [1, 1]} : vector<8x32xf32> to vector<8x16xf32>
    %c7_i32_85 = arith.constant 7 : i32
    %224 = arith.subi %c7_i32_85, %c3_i32_78 : i32
    %225 = arith.index_cast %224 : i32 to index
    %c0_86 = arith.constant 0 : index
    %c16_87 = arith.constant 16 : index
    %226 = vector.load %arg15[%225, %c0_86, %c16_87] : memref<8x8x32xf32, #tpu.memory_space<vmem>>, vector<1x8x16xf32>
    %227 = vector.shape_cast %226 : vector<1x8x16xf32> to vector<8x16xf32>
    %228 = vector.shape_cast %223 : vector<8x16xf32> to vector<1x8x16xf32>
    tpu.vector_store %arg15[%225, %c0_86, %c16_87], %228 {strides = array<i32>} : memref<8x8x32xf32, #tpu.memory_space<vmem>>, vector<1x8x16xf32>,
    %c4_i32_88 = arith.constant 4 : i32
    %229 = arith.index_cast %c4_i32_88 : i32 to index
    %c0_89 = arith.constant 0 : index
    %c0_90 = arith.constant 0 : index
    %230 = vector.load %arg14[%229, %c0_89, %c0_90] : memref<8x8x128xf32, #tpu.memory_space<vmem>>, vector<1x8x128xf32>
    %231 = vector.shape_cast %230 : vector<1x8x128xf32> to vector<8x128xf32>
    %232 = arith.truncf %217 : vector<8x32xf32> to vector<8x32xbf16>
    %cst_91 = arith.constant dense<0.000000e+00> : vector<8x128xf32>
    %233 = tpu.matmul %232, %95, %cst_91 {dimension_numbers = #tpu.dot_dimension_numbers<[1], [0], [0], [1], [0, 0, 1, 1], [], []>} : vector<8x32xbf16>, vector<32x128xbf16>, vector<8x128xf32> -> vector<8x128xf32>
    %234 = arith.addf %231, %233 : vector<8x128xf32>
    %235 = vector.extract_strided_slice %234 {offsets = [0, 0], sizes = [8, 96], strides = [1, 1]} : vector<8x128xf32> to vector<8x96xf32>
    %236 = arith.negf %235 : vector<8x96xf32>
    %237 = math.exp %236 : vector<8x96xf32>
    %cst_92 = arith.constant 1.000000e+00 : f32
    %238 = vector.broadcast %cst_92 : f32 to vector<8x96xf32>
    %239 = arith.addf %238, %237 : vector<8x96xf32>
    %240 = arith.divf %238, %239 : vector<8x96xf32>
    %241 = vector.extract_strided_slice %234 {offsets = [0, 96], sizes = [8, 32], strides = [1, 1]} : vector<8x128xf32> to vector<8x32xf32>
    %242 = math.tanh %241 : vector<8x32xf32>
    %243 = vector.extract_strided_slice %240 {offsets = [0, 32], sizes = [8, 32], strides = [1, 1]} : vector<8x96xf32> to vector<8x32xf32>
    %244 = arith.mulf %243, %214 : vector<8x32xf32>
    %245 = vector.extract_strided_slice %240 {offsets = [0, 0], sizes = [8, 32], strides = [1, 1]} : vector<8x96xf32> to vector<8x32xf32>
    %246 = arith.mulf %245, %242 : vector<8x32xf32>
    %247 = arith.addf %244, %246 : vector<8x32xf32>
    %248 = vector.extract_strided_slice %240 {offsets = [0, 64], sizes = [8, 32], strides = [1, 1]} : vector<8x96xf32> to vector<8x32xf32>
    %249 = math.tanh %247 : vector<8x32xf32>
    %250 = arith.mulf %248, %249 : vector<8x32xf32>
    %251 = vector.extract_strided_slice %250 {offsets = [0, 0], sizes = [8, 16], strides = [1, 1]} : vector<8x32xf32> to vector<8x16xf32>
    %252 = arith.index_cast %c4_i32_88 : i32 to index
    %c0_93 = arith.constant 0 : index
    %c0_94 = arith.constant 0 : index
    %253 = vector.load %arg15[%252, %c0_93, %c0_94] : memref<8x8x32xf32, #tpu.memory_space<vmem>>, vector<1x8x16xf32>
    %254 = vector.shape_cast %253 : vector<1x8x16xf32> to vector<8x16xf32>
    %255 = vector.shape_cast %251 : vector<8x16xf32> to vector<1x8x16xf32>
    tpu.vector_store %arg15[%252, %c0_93, %c0_94], %255 {strides = array<i32>} : memref<8x8x32xf32, #tpu.memory_space<vmem>>, vector<1x8x16xf32>,
    %256 = vector.extract_strided_slice %250 {offsets = [0, 16], sizes = [8, 16], strides = [1, 1]} : vector<8x32xf32> to vector<8x16xf32>
    %c7_i32_95 = arith.constant 7 : i32
    %257 = arith.subi %c7_i32_95, %c4_i32_88 : i32
    %258 = arith.index_cast %257 : i32 to index
    %c0_96 = arith.constant 0 : index
    %c16_97 = arith.constant 16 : index
    %259 = vector.load %arg15[%258, %c0_96, %c16_97] : memref<8x8x32xf32, #tpu.memory_space<vmem>>, vector<1x8x16xf32>
    %260 = vector.shape_cast %259 : vector<1x8x16xf32> to vector<8x16xf32>
    %261 = vector.shape_cast %256 : vector<8x16xf32> to vector<1x8x16xf32>
    tpu.vector_store %arg15[%258, %c0_96, %c16_97], %261 {strides = array<i32>} : memref<8x8x32xf32, #tpu.memory_space<vmem>>, vector<1x8x16xf32>,
    %c5_i32 = arith.constant 5 : i32
    %262 = arith.index_cast %c5_i32 : i32 to index
    %c0_98 = arith.constant 0 : index
    %c0_99 = arith.constant 0 : index
    %263 = vector.load %arg14[%262, %c0_98, %c0_99] : memref<8x8x128xf32, #tpu.memory_space<vmem>>, vector<1x8x128xf32>
    %264 = vector.shape_cast %263 : vector<1x8x128xf32> to vector<8x128xf32>
    %265 = arith.truncf %250 : vector<8x32xf32> to vector<8x32xbf16>
    %cst_100 = arith.constant dense<0.000000e+00> : vector<8x128xf32>
    %266 = tpu.matmul %265, %95, %cst_100 {dimension_numbers = #tpu.dot_dimension_numbers<[1], [0], [0], [1], [0, 0, 1, 1], [], []>} : vector<8x32xbf16>, vector<32x128xbf16>, vector<8x128xf32> -> vector<8x128xf32>
    %267 = arith.addf %264, %266 : vector<8x128xf32>
    %268 = vector.extract_strided_slice %267 {offsets = [0, 0], sizes = [8, 96], strides = [1, 1]} : vector<8x128xf32> to vector<8x96xf32>
    %269 = arith.negf %268 : vector<8x96xf32>
    %270 = math.exp %269 : vector<8x96xf32>
    %cst_101 = arith.constant 1.000000e+00 : f32
    %271 = vector.broadcast %cst_101 : f32 to vector<8x96xf32>
    %272 = arith.addf %271, %270 : vector<8x96xf32>
    %273 = arith.divf %271, %272 : vector<8x96xf32>
    %274 = vector.extract_strided_slice %267 {offsets = [0, 96], sizes = [8, 32], strides = [1, 1]} : vector<8x128xf32> to vector<8x32xf32>
    %275 = math.tanh %274 : vector<8x32xf32>
    %276 = vector.extract_strided_slice %273 {offsets = [0, 32], sizes = [8, 32], strides = [1, 1]} : vector<8x96xf32> to vector<8x32xf32>
    %277 = arith.mulf %276, %247 : vector<8x32xf32>
    %278 = vector.extract_strided_slice %273 {offsets = [0, 0], sizes = [8, 32], strides = [1, 1]} : vector<8x96xf32> to vector<8x32xf32>
    %279 = arith.mulf %278, %275 : vector<8x32xf32>
    %280 = arith.addf %277, %279 : vector<8x32xf32>
    %281 = vector.extract_strided_slice %273 {offsets = [0, 64], sizes = [8, 32], strides = [1, 1]} : vector<8x96xf32> to vector<8x32xf32>
    %282 = math.tanh %280 : vector<8x32xf32>
    %283 = arith.mulf %281, %282 : vector<8x32xf32>
    %284 = vector.extract_strided_slice %283 {offsets = [0, 0], sizes = [8, 16], strides = [1, 1]} : vector<8x32xf32> to vector<8x16xf32>
    %285 = arith.index_cast %c5_i32 : i32 to index
    %c0_102 = arith.constant 0 : index
    %c0_103 = arith.constant 0 : index
    %286 = vector.load %arg15[%285, %c0_102, %c0_103] : memref<8x8x32xf32, #tpu.memory_space<vmem>>, vector<1x8x16xf32>
    %287 = vector.shape_cast %286 : vector<1x8x16xf32> to vector<8x16xf32>
    %288 = vector.shape_cast %284 : vector<8x16xf32> to vector<1x8x16xf32>
    tpu.vector_store %arg15[%285, %c0_102, %c0_103], %288 {strides = array<i32>} : memref<8x8x32xf32, #tpu.memory_space<vmem>>, vector<1x8x16xf32>,
    %289 = vector.extract_strided_slice %283 {offsets = [0, 16], sizes = [8, 16], strides = [1, 1]} : vector<8x32xf32> to vector<8x16xf32>
    %c7_i32_104 = arith.constant 7 : i32
    %290 = arith.subi %c7_i32_104, %c5_i32 : i32
    %291 = arith.index_cast %290 : i32 to index
    %c0_105 = arith.constant 0 : index
    %c16_106 = arith.constant 16 : index
    %292 = vector.load %arg15[%291, %c0_105, %c16_106] : memref<8x8x32xf32, #tpu.memory_space<vmem>>, vector<1x8x16xf32>
    %293 = vector.shape_cast %292 : vector<1x8x16xf32> to vector<8x16xf32>
    %294 = vector.shape_cast %289 : vector<8x16xf32> to vector<1x8x16xf32>
    tpu.vector_store %arg15[%291, %c0_105, %c16_106], %294 {strides = array<i32>} : memref<8x8x32xf32, #tpu.memory_space<vmem>>, vector<1x8x16xf32>,
    %c6_i32 = arith.constant 6 : i32
    %295 = arith.index_cast %c6_i32 : i32 to index
    %c0_107 = arith.constant 0 : index
    %c0_108 = arith.constant 0 : index
    %296 = vector.load %arg14[%295, %c0_107, %c0_108] : memref<8x8x128xf32, #tpu.memory_space<vmem>>, vector<1x8x128xf32>
    %297 = vector.shape_cast %296 : vector<1x8x128xf32> to vector<8x128xf32>
    %298 = arith.truncf %283 : vector<8x32xf32> to vector<8x32xbf16>
    %cst_109 = arith.constant dense<0.000000e+00> : vector<8x128xf32>
    %299 = tpu.matmul %298, %95, %cst_109 {dimension_numbers = #tpu.dot_dimension_numbers<[1], [0], [0], [1], [0, 0, 1, 1], [], []>} : vector<8x32xbf16>, vector<32x128xbf16>, vector<8x128xf32> -> vector<8x128xf32>
    %300 = arith.addf %297, %299 : vector<8x128xf32>
    %301 = vector.extract_strided_slice %300 {offsets = [0, 0], sizes = [8, 96], strides = [1, 1]} : vector<8x128xf32> to vector<8x96xf32>
    %302 = arith.negf %301 : vector<8x96xf32>
    %303 = math.exp %302 : vector<8x96xf32>
    %cst_110 = arith.constant 1.000000e+00 : f32
    %304 = vector.broadcast %cst_110 : f32 to vector<8x96xf32>
    %305 = arith.addf %304, %303 : vector<8x96xf32>
    %306 = arith.divf %304, %305 : vector<8x96xf32>
    %307 = vector.extract_strided_slice %300 {offsets = [0, 96], sizes = [8, 32], strides = [1, 1]} : vector<8x128xf32> to vector<8x32xf32>
    %308 = math.tanh %307 : vector<8x32xf32>
    %309 = vector.extract_strided_slice %306 {offsets = [0, 32], sizes = [8, 32], strides = [1, 1]} : vector<8x96xf32> to vector<8x32xf32>
    %310 = arith.mulf %309, %280 : vector<8x32xf32>
    %311 = vector.extract_strided_slice %306 {offsets = [0, 0], sizes = [8, 32], strides = [1, 1]} : vector<8x96xf32> to vector<8x32xf32>
    %312 = arith.mulf %311, %308 : vector<8x32xf32>
    %313 = arith.addf %310, %312 : vector<8x32xf32>
    %314 = vector.extract_strided_slice %306 {offsets = [0, 64], sizes = [8, 32], strides = [1, 1]} : vector<8x96xf32> to vector<8x32xf32>
    %315 = math.tanh %313 : vector<8x32xf32>
    %316 = arith.mulf %314, %315 : vector<8x32xf32>
    %317 = vector.extract_strided_slice %316 {offsets = [0, 0], sizes = [8, 16], strides = [1, 1]} : vector<8x32xf32> to vector<8x16xf32>
    %318 = arith.index_cast %c6_i32 : i32 to index
    %c0_111 = arith.constant 0 : index
    %c0_112 = arith.constant 0 : index
    %319 = vector.load %arg15[%318, %c0_111, %c0_112] : memref<8x8x32xf32, #tpu.memory_space<vmem>>, vector<1x8x16xf32>
    %320 = vector.shape_cast %319 : vector<1x8x16xf32> to vector<8x16xf32>
    %321 = vector.shape_cast %317 : vector<8x16xf32> to vector<1x8x16xf32>
    tpu.vector_store %arg15[%318, %c0_111, %c0_112], %321 {strides = array<i32>} : memref<8x8x32xf32, #tpu.memory_space<vmem>>, vector<1x8x16xf32>,
    %322 = vector.extract_strided_slice %316 {offsets = [0, 16], sizes = [8, 16], strides = [1, 1]} : vector<8x32xf32> to vector<8x16xf32>
    %c7_i32_113 = arith.constant 7 : i32
    %323 = arith.subi %c7_i32_113, %c6_i32 : i32
    %324 = arith.index_cast %323 : i32 to index
    %c0_114 = arith.constant 0 : index
    %c16_115 = arith.constant 16 : index
    %325 = vector.load %arg15[%324, %c0_114, %c16_115] : memref<8x8x32xf32, #tpu.memory_space<vmem>>, vector<1x8x16xf32>
    %326 = vector.shape_cast %325 : vector<1x8x16xf32> to vector<8x16xf32>
    %327 = vector.shape_cast %322 : vector<8x16xf32> to vector<1x8x16xf32>
    tpu.vector_store %arg15[%324, %c0_114, %c16_115], %327 {strides = array<i32>} : memref<8x8x32xf32, #tpu.memory_space<vmem>>, vector<1x8x16xf32>,
    %c7_i32_116 = arith.constant 7 : i32
    %328 = arith.index_cast %c7_i32_116 : i32 to index
    %c0_117 = arith.constant 0 : index
    %c0_118 = arith.constant 0 : index
    %329 = vector.load %arg14[%328, %c0_117, %c0_118] : memref<8x8x128xf32, #tpu.memory_space<vmem>>, vector<1x8x128xf32>
    %330 = vector.shape_cast %329 : vector<1x8x128xf32> to vector<8x128xf32>
    %331 = arith.truncf %316 : vector<8x32xf32> to vector<8x32xbf16>
    %cst_119 = arith.constant dense<0.000000e+00> : vector<8x128xf32>
    %332 = tpu.matmul %331, %95, %cst_119 {dimension_numbers = #tpu.dot_dimension_numbers<[1], [0], [0], [1], [0, 0, 1, 1], [], []>} : vector<8x32xbf16>, vector<32x128xbf16>, vector<8x128xf32> -> vector<8x128xf32>
    %333 = arith.addf %330, %332 : vector<8x128xf32>
    %334 = vector.extract_strided_slice %333 {offsets = [0, 0], sizes = [8, 96], strides = [1, 1]} : vector<8x128xf32> to vector<8x96xf32>
    %335 = arith.negf %334 : vector<8x96xf32>
    %336 = math.exp %335 : vector<8x96xf32>
    %cst_120 = arith.constant 1.000000e+00 : f32
    %337 = vector.broadcast %cst_120 : f32 to vector<8x96xf32>
    %338 = arith.addf %337, %336 : vector<8x96xf32>
    %339 = arith.divf %337, %338 : vector<8x96xf32>
    %340 = vector.extract_strided_slice %333 {offsets = [0, 96], sizes = [8, 32], strides = [1, 1]} : vector<8x128xf32> to vector<8x32xf32>
    %341 = math.tanh %340 : vector<8x32xf32>
    %342 = vector.extract_strided_slice %339 {offsets = [0, 32], sizes = [8, 32], strides = [1, 1]} : vector<8x96xf32> to vector<8x32xf32>
    %343 = arith.mulf %342, %313 : vector<8x32xf32>
    %344 = vector.extract_strided_slice %339 {offsets = [0, 0], sizes = [8, 32], strides = [1, 1]} : vector<8x96xf32> to vector<8x32xf32>
    %345 = arith.mulf %344, %341 : vector<8x32xf32>
    %346 = arith.addf %343, %345 : vector<8x32xf32>
    %347 = vector.extract_strided_slice %339 {offsets = [0, 64], sizes = [8, 32], strides = [1, 1]} : vector<8x96xf32> to vector<8x32xf32>
    %348 = math.tanh %346 : vector<8x32xf32>
    %349 = arith.mulf %347, %348 : vector<8x32xf32>
    %350 = vector.extract_strided_slice %349 {offsets = [0, 0], sizes = [8, 16], strides = [1, 1]} : vector<8x32xf32> to vector<8x16xf32>
    %351 = arith.index_cast %c7_i32_116 : i32 to index
    %c0_121 = arith.constant 0 : index
    %c0_122 = arith.constant 0 : index
    %352 = vector.load %arg15[%351, %c0_121, %c0_122] : memref<8x8x32xf32, #tpu.memory_space<vmem>>, vector<1x8x16xf32>
    %353 = vector.shape_cast %352 : vector<1x8x16xf32> to vector<8x16xf32>
    %354 = vector.shape_cast %350 : vector<8x16xf32> to vector<1x8x16xf32>
    tpu.vector_store %arg15[%351, %c0_121, %c0_122], %354 {strides = array<i32>} : memref<8x8x32xf32, #tpu.memory_space<vmem>>, vector<1x8x16xf32>,
    %355 = vector.extract_strided_slice %349 {offsets = [0, 16], sizes = [8, 16], strides = [1, 1]} : vector<8x32xf32> to vector<8x16xf32>
    %c7_i32_123 = arith.constant 7 : i32
    %356 = arith.subi %c7_i32_123, %c7_i32_116 : i32
    %357 = arith.index_cast %356 : i32 to index
    %c0_124 = arith.constant 0 : index
    %c16_125 = arith.constant 16 : index
    %358 = vector.load %arg15[%357, %c0_124, %c16_125] : memref<8x8x32xf32, #tpu.memory_space<vmem>>, vector<1x8x16xf32>
    %359 = vector.shape_cast %358 : vector<1x8x16xf32> to vector<8x16xf32>
    %360 = vector.shape_cast %355 : vector<8x16xf32> to vector<1x8x16xf32>
    tpu.vector_store %arg15[%357, %c0_124, %c16_125], %360 {strides = array<i32>} : memref<8x8x32xf32, #tpu.memory_space<vmem>>, vector<1x8x16xf32>,
    %c8_i32 = arith.constant 8 : i32
    %c0_126 = arith.constant 0 : index
    %c0_127 = arith.constant 0 : index
    %c0_128 = arith.constant 0 : index
    %361 = vector.load %arg15[%c0_126, %c0_127, %c0_128] : memref<8x8x32xf32, #tpu.memory_space<vmem>>, vector<8x8x32xf32>
    %362 = vector.shape_cast %361 : vector<8x8x32xf32> to vector<64x32xf32>
    %363 = arith.truncf %362 : vector<64x32xf32> to vector<64x32xbf16>
    %c0_129 = arith.constant 0 : index
    %c0_130 = arith.constant 0 : index
    %364 = vector.load %arg4[%c0_129, %c0_130] : memref<32x128xbf16, #tpu.memory_space<vmem>>, vector<32x128xbf16>
    %cst_131 = arith.constant dense<0.000000e+00> : vector<64x128xf32>
    %365 = tpu.matmul %363, %364, %cst_131 {dimension_numbers = #tpu.dot_dimension_numbers<[1], [0], [0], [1], [0, 0, 1, 1], [], []>} : vector<64x32xbf16>, vector<32x128xbf16>, vector<64x128xf32> -> vector<64x128xf32>
    %c0_132 = arith.constant 0 : index
    %c0_133 = arith.constant 0 : index
    %366 = vector.load %arg6[%c0_132, %c0_133] : memref<1x128xf32, #tpu.memory_space<vmem>>, vector<1x128xf32>
    %367 = vector.broadcast %366 : vector<1x128xf32> to vector<64x128xf32>
    %368 = arith.addf %365, %367 : vector<64x128xf32>
    %369 = vector.shape_cast %368 : vector<64x128xf32> to vector<8x8x128xf32>
    %c0_134 = arith.constant 0 : index
    %c0_135 = arith.constant 0 : index
    %c0_136 = arith.constant 0 : index
    %370 = vector.load %arg14[%c0_134, %c0_135, %c0_136] : memref<8x8x128xf32, #tpu.memory_space<vmem>>, vector<8x8x128xf32>
    tpu.vector_store %arg14[%c0_134, %c0_135, %c0_136], %369 {strides = array<i32>} : memref<8x8x128xf32, #tpu.memory_space<vmem>>, vector<8x8x128xf32>,
    %c0_i32_137 = arith.constant 0 : i32
    %c7_i32_138 = arith.constant 7 : i32
    %371 = arith.subi %c7_i32_138, %c0_i32_137 : i32
    %372 = arith.index_cast %c0_i32_137 : i32 to index
    %c0_139 = arith.constant 0 : index
    %c0_140 = arith.constant 0 : index
    %373 = vector.load %arg14[%372, %c0_139, %c0_140] : memref<8x8x128xf32, #tpu.memory_space<vmem>>, vector<1x8x128xf32>
    %374 = vector.shape_cast %373 : vector<1x8x128xf32> to vector<8x128xf32>
    %375 = arith.index_cast %371 : i32 to index
    %c0_141 = arith.constant 0 : index
    %c0_142 = arith.constant 0 : index
    %376 = vector.load %arg14[%375, %c0_141, %c0_142] : memref<8x8x128xf32, #tpu.memory_space<vmem>>, vector<1x8x128xf32>
    %377 = vector.shape_cast %376 : vector<1x8x128xf32> to vector<8x128xf32>
    %378 = vector.shape_cast %2 : vector<1x128xi1> to vector<1x128xi1>
    %379 = vector.broadcast %378 : vector<1x128xi1> to vector<8x128xi1>
    %380 = arith.select %379, %374, %377 : vector<8x128xi1>, vector<8x128xf32>
    %381 = arith.index_cast %c0_i32_137 : i32 to index
    %c0_143 = arith.constant 0 : index
    %c0_144 = arith.constant 0 : index
    %382 = vector.load %arg14[%381, %c0_143, %c0_144] : memref<8x8x128xf32, #tpu.memory_space<vmem>>, vector<1x8x128xf32>
    %383 = vector.shape_cast %382 : vector<1x8x128xf32> to vector<8x128xf32>
    %384 = vector.shape_cast %380 : vector<8x128xf32> to vector<1x8x128xf32>
    tpu.vector_store %arg14[%381, %c0_143, %c0_144], %384 {strides = array<i32>} : memref<8x8x128xf32, #tpu.memory_space<vmem>>, vector<1x8x128xf32>,
    %385 = vector.shape_cast %2 : vector<1x128xi1> to vector<1x128xi1>
    %386 = vector.broadcast %385 : vector<1x128xi1> to vector<8x128xi1>
    %387 = arith.select %386, %377, %374 : vector<8x128xi1>, vector<8x128xf32>
    %388 = arith.index_cast %371 : i32 to index
    %c0_145 = arith.constant 0 : index
    %c0_146 = arith.constant 0 : index
    %389 = vector.load %arg14[%388, %c0_145, %c0_146] : memref<8x8x128xf32, #tpu.memory_space<vmem>>, vector<1x8x128xf32>
    %390 = vector.shape_cast %389 : vector<1x8x128xf32> to vector<8x128xf32>
    %391 = vector.shape_cast %387 : vector<8x128xf32> to vector<1x8x128xf32>
    tpu.vector_store %arg14[%388, %c0_145, %c0_146], %391 {strides = array<i32>} : memref<8x8x128xf32, #tpu.memory_space<vmem>>, vector<1x8x128xf32>,
    %c1_i32_147 = arith.constant 1 : i32
    %c7_i32_148 = arith.constant 7 : i32
    %392 = arith.subi %c7_i32_148, %c1_i32_147 : i32
    %393 = arith.index_cast %c1_i32_147 : i32 to index
    %c0_149 = arith.constant 0 : index
    %c0_150 = arith.constant 0 : index
    %394 = vector.load %arg14[%393, %c0_149, %c0_150] : memref<8x8x128xf32, #tpu.memory_space<vmem>>, vector<1x8x128xf32>
    %395 = vector.shape_cast %394 : vector<1x8x128xf32> to vector<8x128xf32>
    %396 = arith.index_cast %392 : i32 to index
    %c0_151 = arith.constant 0 : index
    %c0_152 = arith.constant 0 : index
    %397 = vector.load %arg14[%396, %c0_151, %c0_152] : memref<8x8x128xf32, #tpu.memory_space<vmem>>, vector<1x8x128xf32>
    %398 = vector.shape_cast %397 : vector<1x8x128xf32> to vector<8x128xf32>
    %399 = vector.shape_cast %2 : vector<1x128xi1> to vector<1x128xi1>
    %400 = vector.broadcast %399 : vector<1x128xi1> to vector<8x128xi1>
    %401 = arith.select %400, %395, %398 : vector<8x128xi1>, vector<8x128xf32>
    %402 = arith.index_cast %c1_i32_147 : i32 to index
    %c0_153 = arith.constant 0 : index
    %c0_154 = arith.constant 0 : index
    %403 = vector.load %arg14[%402, %c0_153, %c0_154] : memref<8x8x128xf32, #tpu.memory_space<vmem>>, vector<1x8x128xf32>
    %404 = vector.shape_cast %403 : vector<1x8x128xf32> to vector<8x128xf32>
    %405 = vector.shape_cast %401 : vector<8x128xf32> to vector<1x8x128xf32>
    tpu.vector_store %arg14[%402, %c0_153, %c0_154], %405 {strides = array<i32>} : memref<8x8x128xf32, #tpu.memory_space<vmem>>, vector<1x8x128xf32>,
    %406 = vector.shape_cast %2 : vector<1x128xi1> to vector<1x128xi1>
    %407 = vector.broadcast %406 : vector<1x128xi1> to vector<8x128xi1>
    %408 = arith.select %407, %398, %395 : vector<8x128xi1>, vector<8x128xf32>
    %409 = arith.index_cast %392 : i32 to index
    %c0_155 = arith.constant 0 : index
    %c0_156 = arith.constant 0 : index
    %410 = vector.load %arg14[%409, %c0_155, %c0_156] : memref<8x8x128xf32, #tpu.memory_space<vmem>>, vector<1x8x128xf32>
    %411 = vector.shape_cast %410 : vector<1x8x128xf32> to vector<8x128xf32>
    %412 = vector.shape_cast %408 : vector<8x128xf32> to vector<1x8x128xf32>
    tpu.vector_store %arg14[%409, %c0_155, %c0_156], %412 {strides = array<i32>} : memref<8x8x128xf32, #tpu.memory_space<vmem>>, vector<1x8x128xf32>,
    %c2_i32_157 = arith.constant 2 : i32
    %c7_i32_158 = arith.constant 7 : i32
    %413 = arith.subi %c7_i32_158, %c2_i32_157 : i32
    %414 = arith.index_cast %c2_i32_157 : i32 to index
    %c0_159 = arith.constant 0 : index
    %c0_160 = arith.constant 0 : index
    %415 = vector.load %arg14[%414, %c0_159, %c0_160] : memref<8x8x128xf32, #tpu.memory_space<vmem>>, vector<1x8x128xf32>
    %416 = vector.shape_cast %415 : vector<1x8x128xf32> to vector<8x128xf32>
    %417 = arith.index_cast %413 : i32 to index
    %c0_161 = arith.constant 0 : index
    %c0_162 = arith.constant 0 : index
    %418 = vector.load %arg14[%417, %c0_161, %c0_162] : memref<8x8x128xf32, #tpu.memory_space<vmem>>, vector<1x8x128xf32>
    %419 = vector.shape_cast %418 : vector<1x8x128xf32> to vector<8x128xf32>
    %420 = vector.shape_cast %2 : vector<1x128xi1> to vector<1x128xi1>
    %421 = vector.broadcast %420 : vector<1x128xi1> to vector<8x128xi1>
    %422 = arith.select %421, %416, %419 : vector<8x128xi1>, vector<8x128xf32>
    %423 = arith.index_cast %c2_i32_157 : i32 to index
    %c0_163 = arith.constant 0 : index
    %c0_164 = arith.constant 0 : index
    %424 = vector.load %arg14[%423, %c0_163, %c0_164] : memref<8x8x128xf32, #tpu.memory_space<vmem>>, vector<1x8x128xf32>
    %425 = vector.shape_cast %424 : vector<1x8x128xf32> to vector<8x128xf32>
    %426 = vector.shape_cast %422 : vector<8x128xf32> to vector<1x8x128xf32>
    tpu.vector_store %arg14[%423, %c0_163, %c0_164], %426 {strides = array<i32>} : memref<8x8x128xf32, #tpu.memory_space<vmem>>, vector<1x8x128xf32>,
    %427 = vector.shape_cast %2 : vector<1x128xi1> to vector<1x128xi1>
    %428 = vector.broadcast %427 : vector<1x128xi1> to vector<8x128xi1>
    %429 = arith.select %428, %419, %416 : vector<8x128xi1>, vector<8x128xf32>
    %430 = arith.index_cast %413 : i32 to index
    %c0_165 = arith.constant 0 : index
    %c0_166 = arith.constant 0 : index
    %431 = vector.load %arg14[%430, %c0_165, %c0_166] : memref<8x8x128xf32, #tpu.memory_space<vmem>>, vector<1x8x128xf32>
    %432 = vector.shape_cast %431 : vector<1x8x128xf32> to vector<8x128xf32>
    %433 = vector.shape_cast %429 : vector<8x128xf32> to vector<1x8x128xf32>
    tpu.vector_store %arg14[%430, %c0_165, %c0_166], %433 {strides = array<i32>} : memref<8x8x128xf32, #tpu.memory_space<vmem>>, vector<1x8x128xf32>,
    %c3_i32_167 = arith.constant 3 : i32
    %c7_i32_168 = arith.constant 7 : i32
    %434 = arith.subi %c7_i32_168, %c3_i32_167 : i32
    %435 = arith.index_cast %c3_i32_167 : i32 to index
    %c0_169 = arith.constant 0 : index
    %c0_170 = arith.constant 0 : index
    %436 = vector.load %arg14[%435, %c0_169, %c0_170] : memref<8x8x128xf32, #tpu.memory_space<vmem>>, vector<1x8x128xf32>
    %437 = vector.shape_cast %436 : vector<1x8x128xf32> to vector<8x128xf32>
    %438 = arith.index_cast %434 : i32 to index
    %c0_171 = arith.constant 0 : index
    %c0_172 = arith.constant 0 : index
    %439 = vector.load %arg14[%438, %c0_171, %c0_172] : memref<8x8x128xf32, #tpu.memory_space<vmem>>, vector<1x8x128xf32>
    %440 = vector.shape_cast %439 : vector<1x8x128xf32> to vector<8x128xf32>
    %441 = vector.shape_cast %2 : vector<1x128xi1> to vector<1x128xi1>
    %442 = vector.broadcast %441 : vector<1x128xi1> to vector<8x128xi1>
    %443 = arith.select %442, %437, %440 : vector<8x128xi1>, vector<8x128xf32>
    %444 = arith.index_cast %c3_i32_167 : i32 to index
    %c0_173 = arith.constant 0 : index
    %c0_174 = arith.constant 0 : index
    %445 = vector.load %arg14[%444, %c0_173, %c0_174] : memref<8x8x128xf32, #tpu.memory_space<vmem>>, vector<1x8x128xf32>
    %446 = vector.shape_cast %445 : vector<1x8x128xf32> to vector<8x128xf32>
    %447 = vector.shape_cast %443 : vector<8x128xf32> to vector<1x8x128xf32>
    tpu.vector_store %arg14[%444, %c0_173, %c0_174], %447 {strides = array<i32>} : memref<8x8x128xf32, #tpu.memory_space<vmem>>, vector<1x8x128xf32>,
    %448 = vector.shape_cast %2 : vector<1x128xi1> to vector<1x128xi1>
    %449 = vector.broadcast %448 : vector<1x128xi1> to vector<8x128xi1>
    %450 = arith.select %449, %440, %437 : vector<8x128xi1>, vector<8x128xf32>
    %451 = arith.index_cast %434 : i32 to index
    %c0_175 = arith.constant 0 : index
    %c0_176 = arith.constant 0 : index
    %452 = vector.load %arg14[%451, %c0_175, %c0_176] : memref<8x8x128xf32, #tpu.memory_space<vmem>>, vector<1x8x128xf32>
    %453 = vector.shape_cast %452 : vector<1x8x128xf32> to vector<8x128xf32>
    %454 = vector.shape_cast %450 : vector<8x128xf32> to vector<1x8x128xf32>
    tpu.vector_store %arg14[%451, %c0_175, %c0_176], %454 {strides = array<i32>} : memref<8x8x128xf32, #tpu.memory_space<vmem>>, vector<1x8x128xf32>,
    %c4_i32_177 = arith.constant 4 : i32
    %c0_178 = arith.constant 0 : index
    %c0_179 = arith.constant 0 : index
    %455 = vector.load %arg5[%c0_178, %c0_179] : memref<32x128xbf16, #tpu.memory_space<vmem>>, vector<32x128xbf16>
    %cst_180 = arith.constant 0.000000e+00 : f32
    %456 = vector.broadcast %cst_180 : f32 to vector<8x32xf32>
    %c0_i32_181 = arith.constant 0 : i32
    %457 = arith.index_cast %c0_i32_181 : i32 to index
    %c0_182 = arith.constant 0 : index
    %c0_183 = arith.constant 0 : index
    %458 = vector.load %arg14[%457, %c0_182, %c0_183] : memref<8x8x128xf32, #tpu.memory_space<vmem>>, vector<1x8x128xf32>
    %459 = vector.shape_cast %458 : vector<1x8x128xf32> to vector<8x128xf32>
    %460 = arith.truncf %456 : vector<8x32xf32> to vector<8x32xbf16>
    %cst_184 = arith.constant dense<0.000000e+00> : vector<8x128xf32>
    %461 = tpu.matmul %460, %455, %cst_184 {dimension_numbers = #tpu.dot_dimension_numbers<[1], [0], [0], [1], [0, 0, 1, 1], [], []>} : vector<8x32xbf16>, vector<32x128xbf16>, vector<8x128xf32> -> vector<8x128xf32>
    %462 = arith.addf %459, %461 : vector<8x128xf32>
    %463 = vector.extract_strided_slice %462 {offsets = [0, 0], sizes = [8, 96], strides = [1, 1]} : vector<8x128xf32> to vector<8x96xf32>
    %464 = arith.negf %463 : vector<8x96xf32>
    %465 = math.exp %464 : vector<8x96xf32>
    %cst_185 = arith.constant 1.000000e+00 : f32
    %466 = vector.broadcast %cst_185 : f32 to vector<8x96xf32>
    %467 = arith.addf %466, %465 : vector<8x96xf32>
    %468 = arith.divf %466, %467 : vector<8x96xf32>
    %469 = vector.extract_strided_slice %462 {offsets = [0, 96], sizes = [8, 32], strides = [1, 1]} : vector<8x128xf32> to vector<8x32xf32>
    %470 = math.tanh %469 : vector<8x32xf32>
    %471 = vector.extract_strided_slice %468 {offsets = [0, 32], sizes = [8, 32], strides = [1, 1]} : vector<8x96xf32> to vector<8x32xf32>
    %472 = arith.mulf %471, %456 : vector<8x32xf32>
    %473 = vector.extract_strided_slice %468 {offsets = [0, 0], sizes = [8, 32], strides = [1, 1]} : vector<8x96xf32> to vector<8x32xf32>
    %474 = arith.mulf %473, %470 : vector<8x32xf32>
    %475 = arith.addf %472, %474 : vector<8x32xf32>
    %476 = vector.extract_strided_slice %468 {offsets = [0, 64], sizes = [8, 32], strides = [1, 1]} : vector<8x96xf32> to vector<8x32xf32>
    %477 = math.tanh %475 : vector<8x32xf32>
    %478 = arith.mulf %476, %477 : vector<8x32xf32>
    %479 = vector.extract_strided_slice %478 {offsets = [0, 0], sizes = [8, 16], strides = [1, 1]} : vector<8x32xf32> to vector<8x16xf32>
    %480 = arith.index_cast %c0_i32_181 : i32 to index
    %c0_186 = arith.constant 0 : index
    %c0_187 = arith.constant 0 : index
    %481 = vector.load %arg16[%480, %c0_186, %c0_187] : memref<8x8x32xf32, #tpu.memory_space<vmem>>, vector<1x8x16xf32>
    %482 = vector.shape_cast %481 : vector<1x8x16xf32> to vector<8x16xf32>
    %483 = vector.shape_cast %479 : vector<8x16xf32> to vector<1x8x16xf32>
    tpu.vector_store %arg16[%480, %c0_186, %c0_187], %483 {strides = array<i32>} : memref<8x8x32xf32, #tpu.memory_space<vmem>>, vector<1x8x16xf32>,
    %484 = vector.extract_strided_slice %478 {offsets = [0, 16], sizes = [8, 16], strides = [1, 1]} : vector<8x32xf32> to vector<8x16xf32>
    %c7_i32_188 = arith.constant 7 : i32
    %485 = arith.subi %c7_i32_188, %c0_i32_181 : i32
    %486 = arith.index_cast %485 : i32 to index
    %c0_189 = arith.constant 0 : index
    %c16_190 = arith.constant 16 : index
    %487 = vector.load %arg16[%486, %c0_189, %c16_190] : memref<8x8x32xf32, #tpu.memory_space<vmem>>, vector<1x8x16xf32>
    %488 = vector.shape_cast %487 : vector<1x8x16xf32> to vector<8x16xf32>
    %489 = vector.shape_cast %484 : vector<8x16xf32> to vector<1x8x16xf32>
    tpu.vector_store %arg16[%486, %c0_189, %c16_190], %489 {strides = array<i32>} : memref<8x8x32xf32, #tpu.memory_space<vmem>>, vector<1x8x16xf32>,
    %c1_i32_191 = arith.constant 1 : i32
    %490 = arith.index_cast %c1_i32_191 : i32 to index
    %c0_192 = arith.constant 0 : index
    %c0_193 = arith.constant 0 : index
    %491 = vector.load %arg14[%490, %c0_192, %c0_193] : memref<8x8x128xf32, #tpu.memory_space<vmem>>, vector<1x8x128xf32>
    %492 = vector.shape_cast %491 : vector<1x8x128xf32> to vector<8x128xf32>
    %493 = arith.truncf %478 : vector<8x32xf32> to vector<8x32xbf16>
    %cst_194 = arith.constant dense<0.000000e+00> : vector<8x128xf32>
    %494 = tpu.matmul %493, %455, %cst_194 {dimension_numbers = #tpu.dot_dimension_numbers<[1], [0], [0], [1], [0, 0, 1, 1], [], []>} : vector<8x32xbf16>, vector<32x128xbf16>, vector<8x128xf32> -> vector<8x128xf32>
    %495 = arith.addf %492, %494 : vector<8x128xf32>
    %496 = vector.extract_strided_slice %495 {offsets = [0, 0], sizes = [8, 96], strides = [1, 1]} : vector<8x128xf32> to vector<8x96xf32>
    %497 = arith.negf %496 : vector<8x96xf32>
    %498 = math.exp %497 : vector<8x96xf32>
    %cst_195 = arith.constant 1.000000e+00 : f32
    %499 = vector.broadcast %cst_195 : f32 to vector<8x96xf32>
    %500 = arith.addf %499, %498 : vector<8x96xf32>
    %501 = arith.divf %499, %500 : vector<8x96xf32>
    %502 = vector.extract_strided_slice %495 {offsets = [0, 96], sizes = [8, 32], strides = [1, 1]} : vector<8x128xf32> to vector<8x32xf32>
    %503 = math.tanh %502 : vector<8x32xf32>
    %504 = vector.extract_strided_slice %501 {offsets = [0, 32], sizes = [8, 32], strides = [1, 1]} : vector<8x96xf32> to vector<8x32xf32>
    %505 = arith.mulf %504, %475 : vector<8x32xf32>
    %506 = vector.extract_strided_slice %501 {offsets = [0, 0], sizes = [8, 32], strides = [1, 1]} : vector<8x96xf32> to vector<8x32xf32>
    %507 = arith.mulf %506, %503 : vector<8x32xf32>
    %508 = arith.addf %505, %507 : vector<8x32xf32>
    %509 = vector.extract_strided_slice %501 {offsets = [0, 64], sizes = [8, 32], strides = [1, 1]} : vector<8x96xf32> to vector<8x32xf32>
    %510 = math.tanh %508 : vector<8x32xf32>
    %511 = arith.mulf %509, %510 : vector<8x32xf32>
    %512 = vector.extract_strided_slice %511 {offsets = [0, 0], sizes = [8, 16], strides = [1, 1]} : vector<8x32xf32> to vector<8x16xf32>
    %513 = arith.index_cast %c1_i32_191 : i32 to index
    %c0_196 = arith.constant 0 : index
    %c0_197 = arith.constant 0 : index
    %514 = vector.load %arg16[%513, %c0_196, %c0_197] : memref<8x8x32xf32, #tpu.memory_space<vmem>>, vector<1x8x16xf32>
    %515 = vector.shape_cast %514 : vector<1x8x16xf32> to vector<8x16xf32>
    %516 = vector.shape_cast %512 : vector<8x16xf32> to vector<1x8x16xf32>
    tpu.vector_store %arg16[%513, %c0_196, %c0_197], %516 {strides = array<i32>} : memref<8x8x32xf32, #tpu.memory_space<vmem>>, vector<1x8x16xf32>,
    %517 = vector.extract_strided_slice %511 {offsets = [0, 16], sizes = [8, 16], strides = [1, 1]} : vector<8x32xf32> to vector<8x16xf32>
    %c7_i32_198 = arith.constant 7 : i32
    %518 = arith.subi %c7_i32_198, %c1_i32_191 : i32
    %519 = arith.index_cast %518 : i32 to index
    %c0_199 = arith.constant 0 : index
    %c16_200 = arith.constant 16 : index
    %520 = vector.load %arg16[%519, %c0_199, %c16_200] : memref<8x8x32xf32, #tpu.memory_space<vmem>>, vector<1x8x16xf32>
    %521 = vector.shape_cast %520 : vector<1x8x16xf32> to vector<8x16xf32>
    %522 = vector.shape_cast %517 : vector<8x16xf32> to vector<1x8x16xf32>
    tpu.vector_store %arg16[%519, %c0_199, %c16_200], %522 {strides = array<i32>} : memref<8x8x32xf32, #tpu.memory_space<vmem>>, vector<1x8x16xf32>,
    %c2_i32_201 = arith.constant 2 : i32
    %523 = arith.index_cast %c2_i32_201 : i32 to index
    %c0_202 = arith.constant 0 : index
    %c0_203 = arith.constant 0 : index
    %524 = vector.load %arg14[%523, %c0_202, %c0_203] : memref<8x8x128xf32, #tpu.memory_space<vmem>>, vector<1x8x128xf32>
    %525 = vector.shape_cast %524 : vector<1x8x128xf32> to vector<8x128xf32>
    %526 = arith.truncf %511 : vector<8x32xf32> to vector<8x32xbf16>
    %cst_204 = arith.constant dense<0.000000e+00> : vector<8x128xf32>
    %527 = tpu.matmul %526, %455, %cst_204 {dimension_numbers = #tpu.dot_dimension_numbers<[1], [0], [0], [1], [0, 0, 1, 1], [], []>} : vector<8x32xbf16>, vector<32x128xbf16>, vector<8x128xf32> -> vector<8x128xf32>
    %528 = arith.addf %525, %527 : vector<8x128xf32>
    %529 = vector.extract_strided_slice %528 {offsets = [0, 0], sizes = [8, 96], strides = [1, 1]} : vector<8x128xf32> to vector<8x96xf32>
    %530 = arith.negf %529 : vector<8x96xf32>
    %531 = math.exp %530 : vector<8x96xf32>
    %cst_205 = arith.constant 1.000000e+00 : f32
    %532 = vector.broadcast %cst_205 : f32 to vector<8x96xf32>
    %533 = arith.addf %532, %531 : vector<8x96xf32>
    %534 = arith.divf %532, %533 : vector<8x96xf32>
    %535 = vector.extract_strided_slice %528 {offsets = [0, 96], sizes = [8, 32], strides = [1, 1]} : vector<8x128xf32> to vector<8x32xf32>
    %536 = math.tanh %535 : vector<8x32xf32>
    %537 = vector.extract_strided_slice %534 {offsets = [0, 32], sizes = [8, 32], strides = [1, 1]} : vector<8x96xf32> to vector<8x32xf32>
    %538 = arith.mulf %537, %508 : vector<8x32xf32>
    %539 = vector.extract_strided_slice %534 {offsets = [0, 0], sizes = [8, 32], strides = [1, 1]} : vector<8x96xf32> to vector<8x32xf32>
    %540 = arith.mulf %539, %536 : vector<8x32xf32>
    %541 = arith.addf %538, %540 : vector<8x32xf32>
    %542 = vector.extract_strided_slice %534 {offsets = [0, 64], sizes = [8, 32], strides = [1, 1]} : vector<8x96xf32> to vector<8x32xf32>
    %543 = math.tanh %541 : vector<8x32xf32>
    %544 = arith.mulf %542, %543 : vector<8x32xf32>
    %545 = vector.extract_strided_slice %544 {offsets = [0, 0], sizes = [8, 16], strides = [1, 1]} : vector<8x32xf32> to vector<8x16xf32>
    %546 = arith.index_cast %c2_i32_201 : i32 to index
    %c0_206 = arith.constant 0 : index
    %c0_207 = arith.constant 0 : index
    %547 = vector.load %arg16[%546, %c0_206, %c0_207] : memref<8x8x32xf32, #tpu.memory_space<vmem>>, vector<1x8x16xf32>
    %548 = vector.shape_cast %547 : vector<1x8x16xf32> to vector<8x16xf32>
    %549 = vector.shape_cast %545 : vector<8x16xf32> to vector<1x8x16xf32>
    tpu.vector_store %arg16[%546, %c0_206, %c0_207], %549 {strides = array<i32>} : memref<8x8x32xf32, #tpu.memory_space<vmem>>, vector<1x8x16xf32>,
    %550 = vector.extract_strided_slice %544 {offsets = [0, 16], sizes = [8, 16], strides = [1, 1]} : vector<8x32xf32> to vector<8x16xf32>
    %c7_i32_208 = arith.constant 7 : i32
    %551 = arith.subi %c7_i32_208, %c2_i32_201 : i32
    %552 = arith.index_cast %551 : i32 to index
    %c0_209 = arith.constant 0 : index
    %c16_210 = arith.constant 16 : index
    %553 = vector.load %arg16[%552, %c0_209, %c16_210] : memref<8x8x32xf32, #tpu.memory_space<vmem>>, vector<1x8x16xf32>
    %554 = vector.shape_cast %553 : vector<1x8x16xf32> to vector<8x16xf32>
    %555 = vector.shape_cast %550 : vector<8x16xf32> to vector<1x8x16xf32>
    tpu.vector_store %arg16[%552, %c0_209, %c16_210], %555 {strides = array<i32>} : memref<8x8x32xf32, #tpu.memory_space<vmem>>, vector<1x8x16xf32>,
    %c3_i32_211 = arith.constant 3 : i32
    %556 = arith.index_cast %c3_i32_211 : i32 to index
    %c0_212 = arith.constant 0 : index
    %c0_213 = arith.constant 0 : index
    %557 = vector.load %arg14[%556, %c0_212, %c0_213] : memref<8x8x128xf32, #tpu.memory_space<vmem>>, vector<1x8x128xf32>
    %558 = vector.shape_cast %557 : vector<1x8x128xf32> to vector<8x128xf32>
    %559 = arith.truncf %544 : vector<8x32xf32> to vector<8x32xbf16>
    %cst_214 = arith.constant dense<0.000000e+00> : vector<8x128xf32>
    %560 = tpu.matmul %559, %455, %cst_214 {dimension_numbers = #tpu.dot_dimension_numbers<[1], [0], [0], [1], [0, 0, 1, 1], [], []>} : vector<8x32xbf16>, vector<32x128xbf16>, vector<8x128xf32> -> vector<8x128xf32>
    %561 = arith.addf %558, %560 : vector<8x128xf32>
    %562 = vector.extract_strided_slice %561 {offsets = [0, 0], sizes = [8, 96], strides = [1, 1]} : vector<8x128xf32> to vector<8x96xf32>
    %563 = arith.negf %562 : vector<8x96xf32>
    %564 = math.exp %563 : vector<8x96xf32>
    %cst_215 = arith.constant 1.000000e+00 : f32
    %565 = vector.broadcast %cst_215 : f32 to vector<8x96xf32>
    %566 = arith.addf %565, %564 : vector<8x96xf32>
    %567 = arith.divf %565, %566 : vector<8x96xf32>
    %568 = vector.extract_strided_slice %561 {offsets = [0, 96], sizes = [8, 32], strides = [1, 1]} : vector<8x128xf32> to vector<8x32xf32>
    %569 = math.tanh %568 : vector<8x32xf32>
    %570 = vector.extract_strided_slice %567 {offsets = [0, 32], sizes = [8, 32], strides = [1, 1]} : vector<8x96xf32> to vector<8x32xf32>
    %571 = arith.mulf %570, %541 : vector<8x32xf32>
    %572 = vector.extract_strided_slice %567 {offsets = [0, 0], sizes = [8, 32], strides = [1, 1]} : vector<8x96xf32> to vector<8x32xf32>
    %573 = arith.mulf %572, %569 : vector<8x32xf32>
    %574 = arith.addf %571, %573 : vector<8x32xf32>
    %575 = vector.extract_strided_slice %567 {offsets = [0, 64], sizes = [8, 32], strides = [1, 1]} : vector<8x96xf32> to vector<8x32xf32>
    %576 = math.tanh %574 : vector<8x32xf32>
    %577 = arith.mulf %575, %576 : vector<8x32xf32>
    %578 = vector.extract_strided_slice %577 {offsets = [0, 0], sizes = [8, 16], strides = [1, 1]} : vector<8x32xf32> to vector<8x16xf32>
    %579 = arith.index_cast %c3_i32_211 : i32 to index
    %c0_216 = arith.constant 0 : index
    %c0_217 = arith.constant 0 : index
    %580 = vector.load %arg16[%579, %c0_216, %c0_217] : memref<8x8x32xf32, #tpu.memory_space<vmem>>, vector<1x8x16xf32>
    %581 = vector.shape_cast %580 : vector<1x8x16xf32> to vector<8x16xf32>
    %582 = vector.shape_cast %578 : vector<8x16xf32> to vector<1x8x16xf32>
    tpu.vector_store %arg16[%579, %c0_216, %c0_217], %582 {strides = array<i32>} : memref<8x8x32xf32, #tpu.memory_space<vmem>>, vector<1x8x16xf32>,
    %583 = vector.extract_strided_slice %577 {offsets = [0, 16], sizes = [8, 16], strides = [1, 1]} : vector<8x32xf32> to vector<8x16xf32>
    %c7_i32_218 = arith.constant 7 : i32
    %584 = arith.subi %c7_i32_218, %c3_i32_211 : i32
    %585 = arith.index_cast %584 : i32 to index
    %c0_219 = arith.constant 0 : index
    %c16_220 = arith.constant 16 : index
    %586 = vector.load %arg16[%585, %c0_219, %c16_220] : memref<8x8x32xf32, #tpu.memory_space<vmem>>, vector<1x8x16xf32>
    %587 = vector.shape_cast %586 : vector<1x8x16xf32> to vector<8x16xf32>
    %588 = vector.shape_cast %583 : vector<8x16xf32> to vector<1x8x16xf32>
    tpu.vector_store %arg16[%585, %c0_219, %c16_220], %588 {strides = array<i32>} : memref<8x8x32xf32, #tpu.memory_space<vmem>>, vector<1x8x16xf32>,
    %c4_i32_221 = arith.constant 4 : i32
    %589 = arith.index_cast %c4_i32_221 : i32 to index
    %c0_222 = arith.constant 0 : index
    %c0_223 = arith.constant 0 : index
    %590 = vector.load %arg14[%589, %c0_222, %c0_223] : memref<8x8x128xf32, #tpu.memory_space<vmem>>, vector<1x8x128xf32>
    %591 = vector.shape_cast %590 : vector<1x8x128xf32> to vector<8x128xf32>
    %592 = arith.truncf %577 : vector<8x32xf32> to vector<8x32xbf16>
    %cst_224 = arith.constant dense<0.000000e+00> : vector<8x128xf32>
    %593 = tpu.matmul %592, %455, %cst_224 {dimension_numbers = #tpu.dot_dimension_numbers<[1], [0], [0], [1], [0, 0, 1, 1], [], []>} : vector<8x32xbf16>, vector<32x128xbf16>, vector<8x128xf32> -> vector<8x128xf32>
    %594 = arith.addf %591, %593 : vector<8x128xf32>
    %595 = vector.extract_strided_slice %594 {offsets = [0, 0], sizes = [8, 96], strides = [1, 1]} : vector<8x128xf32> to vector<8x96xf32>
    %596 = arith.negf %595 : vector<8x96xf32>
    %597 = math.exp %596 : vector<8x96xf32>
    %cst_225 = arith.constant 1.000000e+00 : f32
    %598 = vector.broadcast %cst_225 : f32 to vector<8x96xf32>
    %599 = arith.addf %598, %597 : vector<8x96xf32>
    %600 = arith.divf %598, %599 : vector<8x96xf32>
    %601 = vector.extract_strided_slice %594 {offsets = [0, 96], sizes = [8, 32], strides = [1, 1]} : vector<8x128xf32> to vector<8x32xf32>
    %602 = math.tanh %601 : vector<8x32xf32>
    %603 = vector.extract_strided_slice %600 {offsets = [0, 32], sizes = [8, 32], strides = [1, 1]} : vector<8x96xf32> to vector<8x32xf32>
    %604 = arith.mulf %603, %574 : vector<8x32xf32>
    %605 = vector.extract_strided_slice %600 {offsets = [0, 0], sizes = [8, 32], strides = [1, 1]} : vector<8x96xf32> to vector<8x32xf32>
    %606 = arith.mulf %605, %602 : vector<8x32xf32>
    %607 = arith.addf %604, %606 : vector<8x32xf32>
    %608 = vector.extract_strided_slice %600 {offsets = [0, 64], sizes = [8, 32], strides = [1, 1]} : vector<8x96xf32> to vector<8x32xf32>
    %609 = math.tanh %607 : vector<8x32xf32>
    %610 = arith.mulf %608, %609 : vector<8x32xf32>
    %611 = vector.extract_strided_slice %610 {offsets = [0, 0], sizes = [8, 16], strides = [1, 1]} : vector<8x32xf32> to vector<8x16xf32>
    %612 = arith.index_cast %c4_i32_221 : i32 to index
    %c0_226 = arith.constant 0 : index
    %c0_227 = arith.constant 0 : index
    %613 = vector.load %arg16[%612, %c0_226, %c0_227] : memref<8x8x32xf32, #tpu.memory_space<vmem>>, vector<1x8x16xf32>
    %614 = vector.shape_cast %613 : vector<1x8x16xf32> to vector<8x16xf32>
    %615 = vector.shape_cast %611 : vector<8x16xf32> to vector<1x8x16xf32>
    tpu.vector_store %arg16[%612, %c0_226, %c0_227], %615 {strides = array<i32>} : memref<8x8x32xf32, #tpu.memory_space<vmem>>, vector<1x8x16xf32>,
    %616 = vector.extract_strided_slice %610 {offsets = [0, 16], sizes = [8, 16], strides = [1, 1]} : vector<8x32xf32> to vector<8x16xf32>
    %c7_i32_228 = arith.constant 7 : i32
    %617 = arith.subi %c7_i32_228, %c4_i32_221 : i32
    %618 = arith.index_cast %617 : i32 to index
    %c0_229 = arith.constant 0 : index
    %c16_230 = arith.constant 16 : index
    %619 = vector.load %arg16[%618, %c0_229, %c16_230] : memref<8x8x32xf32, #tpu.memory_space<vmem>>, vector<1x8x16xf32>
    %620 = vector.shape_cast %619 : vector<1x8x16xf32> to vector<8x16xf32>
    %621 = vector.shape_cast %616 : vector<8x16xf32> to vector<1x8x16xf32>
    tpu.vector_store %arg16[%618, %c0_229, %c16_230], %621 {strides = array<i32>} : memref<8x8x32xf32, #tpu.memory_space<vmem>>, vector<1x8x16xf32>,
    %c5_i32_231 = arith.constant 5 : i32
    %622 = arith.index_cast %c5_i32_231 : i32 to index
    %c0_232 = arith.constant 0 : index
    %c0_233 = arith.constant 0 : index
    %623 = vector.load %arg14[%622, %c0_232, %c0_233] : memref<8x8x128xf32, #tpu.memory_space<vmem>>, vector<1x8x128xf32>
    %624 = vector.shape_cast %623 : vector<1x8x128xf32> to vector<8x128xf32>
    %625 = arith.truncf %610 : vector<8x32xf32> to vector<8x32xbf16>
    %cst_234 = arith.constant dense<0.000000e+00> : vector<8x128xf32>
    %626 = tpu.matmul %625, %455, %cst_234 {dimension_numbers = #tpu.dot_dimension_numbers<[1], [0], [0], [1], [0, 0, 1, 1], [], []>} : vector<8x32xbf16>, vector<32x128xbf16>, vector<8x128xf32> -> vector<8x128xf32>
    %627 = arith.addf %624, %626 : vector<8x128xf32>
    %628 = vector.extract_strided_slice %627 {offsets = [0, 0], sizes = [8, 96], strides = [1, 1]} : vector<8x128xf32> to vector<8x96xf32>
    %629 = arith.negf %628 : vector<8x96xf32>
    %630 = math.exp %629 : vector<8x96xf32>
    %cst_235 = arith.constant 1.000000e+00 : f32
    %631 = vector.broadcast %cst_235 : f32 to vector<8x96xf32>
    %632 = arith.addf %631, %630 : vector<8x96xf32>
    %633 = arith.divf %631, %632 : vector<8x96xf32>
    %634 = vector.extract_strided_slice %627 {offsets = [0, 96], sizes = [8, 32], strides = [1, 1]} : vector<8x128xf32> to vector<8x32xf32>
    %635 = math.tanh %634 : vector<8x32xf32>
    %636 = vector.extract_strided_slice %633 {offsets = [0, 32], sizes = [8, 32], strides = [1, 1]} : vector<8x96xf32> to vector<8x32xf32>
    %637 = arith.mulf %636, %607 : vector<8x32xf32>
    %638 = vector.extract_strided_slice %633 {offsets = [0, 0], sizes = [8, 32], strides = [1, 1]} : vector<8x96xf32> to vector<8x32xf32>
    %639 = arith.mulf %638, %635 : vector<8x32xf32>
    %640 = arith.addf %637, %639 : vector<8x32xf32>
    %641 = vector.extract_strided_slice %633 {offsets = [0, 64], sizes = [8, 32], strides = [1, 1]} : vector<8x96xf32> to vector<8x32xf32>
    %642 = math.tanh %640 : vector<8x32xf32>
    %643 = arith.mulf %641, %642 : vector<8x32xf32>
    %644 = vector.extract_strided_slice %643 {offsets = [0, 0], sizes = [8, 16], strides = [1, 1]} : vector<8x32xf32> to vector<8x16xf32>
    %645 = arith.index_cast %c5_i32_231 : i32 to index
    %c0_236 = arith.constant 0 : index
    %c0_237 = arith.constant 0 : index
    %646 = vector.load %arg16[%645, %c0_236, %c0_237] : memref<8x8x32xf32, #tpu.memory_space<vmem>>, vector<1x8x16xf32>
    %647 = vector.shape_cast %646 : vector<1x8x16xf32> to vector<8x16xf32>
    %648 = vector.shape_cast %644 : vector<8x16xf32> to vector<1x8x16xf32>
    tpu.vector_store %arg16[%645, %c0_236, %c0_237], %648 {strides = array<i32>} : memref<8x8x32xf32, #tpu.memory_space<vmem>>, vector<1x8x16xf32>,
    %649 = vector.extract_strided_slice %643 {offsets = [0, 16], sizes = [8, 16], strides = [1, 1]} : vector<8x32xf32> to vector<8x16xf32>
    %c7_i32_238 = arith.constant 7 : i32
    %650 = arith.subi %c7_i32_238, %c5_i32_231 : i32
    %651 = arith.index_cast %650 : i32 to index
    %c0_239 = arith.constant 0 : index
    %c16_240 = arith.constant 16 : index
    %652 = vector.load %arg16[%651, %c0_239, %c16_240] : memref<8x8x32xf32, #tpu.memory_space<vmem>>, vector<1x8x16xf32>
    %653 = vector.shape_cast %652 : vector<1x8x16xf32> to vector<8x16xf32>
    %654 = vector.shape_cast %649 : vector<8x16xf32> to vector<1x8x16xf32>
    tpu.vector_store %arg16[%651, %c0_239, %c16_240], %654 {strides = array<i32>} : memref<8x8x32xf32, #tpu.memory_space<vmem>>, vector<1x8x16xf32>,
    %c6_i32_241 = arith.constant 6 : i32
    %655 = arith.index_cast %c6_i32_241 : i32 to index
    %c0_242 = arith.constant 0 : index
    %c0_243 = arith.constant 0 : index
    %656 = vector.load %arg14[%655, %c0_242, %c0_243] : memref<8x8x128xf32, #tpu.memory_space<vmem>>, vector<1x8x128xf32>
    %657 = vector.shape_cast %656 : vector<1x8x128xf32> to vector<8x128xf32>
    %658 = arith.truncf %643 : vector<8x32xf32> to vector<8x32xbf16>
    %cst_244 = arith.constant dense<0.000000e+00> : vector<8x128xf32>
    %659 = tpu.matmul %658, %455, %cst_244 {dimension_numbers = #tpu.dot_dimension_numbers<[1], [0], [0], [1], [0, 0, 1, 1], [], []>} : vector<8x32xbf16>, vector<32x128xbf16>, vector<8x128xf32> -> vector<8x128xf32>
    %660 = arith.addf %657, %659 : vector<8x128xf32>
    %661 = vector.extract_strided_slice %660 {offsets = [0, 0], sizes = [8, 96], strides = [1, 1]} : vector<8x128xf32> to vector<8x96xf32>
    %662 = arith.negf %661 : vector<8x96xf32>
    %663 = math.exp %662 : vector<8x96xf32>
    %cst_245 = arith.constant 1.000000e+00 : f32
    %664 = vector.broadcast %cst_245 : f32 to vector<8x96xf32>
    %665 = arith.addf %664, %663 : vector<8x96xf32>
    %666 = arith.divf %664, %665 : vector<8x96xf32>
    %667 = vector.extract_strided_slice %660 {offsets = [0, 96], sizes = [8, 32], strides = [1, 1]} : vector<8x128xf32> to vector<8x32xf32>
    %668 = math.tanh %667 : vector<8x32xf32>
    %669 = vector.extract_strided_slice %666 {offsets = [0, 32], sizes = [8, 32], strides = [1, 1]} : vector<8x96xf32> to vector<8x32xf32>
    %670 = arith.mulf %669, %640 : vector<8x32xf32>
    %671 = vector.extract_strided_slice %666 {offsets = [0, 0], sizes = [8, 32], strides = [1, 1]} : vector<8x96xf32> to vector<8x32xf32>
    %672 = arith.mulf %671, %668 : vector<8x32xf32>
    %673 = arith.addf %670, %672 : vector<8x32xf32>
    %674 = vector.extract_strided_slice %666 {offsets = [0, 64], sizes = [8, 32], strides = [1, 1]} : vector<8x96xf32> to vector<8x32xf32>
    %675 = math.tanh %673 : vector<8x32xf32>
    %676 = arith.mulf %674, %675 : vector<8x32xf32>
    %677 = vector.extract_strided_slice %676 {offsets = [0, 0], sizes = [8, 16], strides = [1, 1]} : vector<8x32xf32> to vector<8x16xf32>
    %678 = arith.index_cast %c6_i32_241 : i32 to index
    %c0_246 = arith.constant 0 : index
    %c0_247 = arith.constant 0 : index
    %679 = vector.load %arg16[%678, %c0_246, %c0_247] : memref<8x8x32xf32, #tpu.memory_space<vmem>>, vector<1x8x16xf32>
    %680 = vector.shape_cast %679 : vector<1x8x16xf32> to vector<8x16xf32>
    %681 = vector.shape_cast %677 : vector<8x16xf32> to vector<1x8x16xf32>
    tpu.vector_store %arg16[%678, %c0_246, %c0_247], %681 {strides = array<i32>} : memref<8x8x32xf32, #tpu.memory_space<vmem>>, vector<1x8x16xf32>,
    %682 = vector.extract_strided_slice %676 {offsets = [0, 16], sizes = [8, 16], strides = [1, 1]} : vector<8x32xf32> to vector<8x16xf32>
    %c7_i32_248 = arith.constant 7 : i32
    %683 = arith.subi %c7_i32_248, %c6_i32_241 : i32
    %684 = arith.index_cast %683 : i32 to index
    %c0_249 = arith.constant 0 : index
    %c16_250 = arith.constant 16 : index
    %685 = vector.load %arg16[%684, %c0_249, %c16_250] : memref<8x8x32xf32, #tpu.memory_space<vmem>>, vector<1x8x16xf32>
    %686 = vector.shape_cast %685 : vector<1x8x16xf32> to vector<8x16xf32>
    %687 = vector.shape_cast %682 : vector<8x16xf32> to vector<1x8x16xf32>
    tpu.vector_store %arg16[%684, %c0_249, %c16_250], %687 {strides = array<i32>} : memref<8x8x32xf32, #tpu.memory_space<vmem>>, vector<1x8x16xf32>,
    %c7_i32_251 = arith.constant 7 : i32
    %688 = arith.index_cast %c7_i32_251 : i32 to index
    %c0_252 = arith.constant 0 : index
    %c0_253 = arith.constant 0 : index
    %689 = vector.load %arg14[%688, %c0_252, %c0_253] : memref<8x8x128xf32, #tpu.memory_space<vmem>>, vector<1x8x128xf32>
    %690 = vector.shape_cast %689 : vector<1x8x128xf32> to vector<8x128xf32>
    %691 = arith.truncf %676 : vector<8x32xf32> to vector<8x32xbf16>
    %cst_254 = arith.constant dense<0.000000e+00> : vector<8x128xf32>
    %692 = tpu.matmul %691, %455, %cst_254 {dimension_numbers = #tpu.dot_dimension_numbers<[1], [0], [0], [1], [0, 0, 1, 1], [], []>} : vector<8x32xbf16>, vector<32x128xbf16>, vector<8x128xf32> -> vector<8x128xf32>
    %693 = arith.addf %690, %692 : vector<8x128xf32>
    %694 = vector.extract_strided_slice %693 {offsets = [0, 0], sizes = [8, 96], strides = [1, 1]} : vector<8x128xf32> to vector<8x96xf32>
    %695 = arith.negf %694 : vector<8x96xf32>
    %696 = math.exp %695 : vector<8x96xf32>
    %cst_255 = arith.constant 1.000000e+00 : f32
    %697 = vector.broadcast %cst_255 : f32 to vector<8x96xf32>
    %698 = arith.addf %697, %696 : vector<8x96xf32>
    %699 = arith.divf %697, %698 : vector<8x96xf32>
    %700 = vector.extract_strided_slice %693 {offsets = [0, 96], sizes = [8, 32], strides = [1, 1]} : vector<8x128xf32> to vector<8x32xf32>
    %701 = math.tanh %700 : vector<8x32xf32>
    %702 = vector.extract_strided_slice %699 {offsets = [0, 32], sizes = [8, 32], strides = [1, 1]} : vector<8x96xf32> to vector<8x32xf32>
    %703 = arith.mulf %702, %673 : vector<8x32xf32>
    %704 = vector.extract_strided_slice %699 {offsets = [0, 0], sizes = [8, 32], strides = [1, 1]} : vector<8x96xf32> to vector<8x32xf32>
    %705 = arith.mulf %704, %701 : vector<8x32xf32>
    %706 = arith.addf %703, %705 : vector<8x32xf32>
    %707 = vector.extract_strided_slice %699 {offsets = [0, 64], sizes = [8, 32], strides = [1, 1]} : vector<8x96xf32> to vector<8x32xf32>
    %708 = math.tanh %706 : vector<8x32xf32>
    %709 = arith.mulf %707, %708 : vector<8x32xf32>
    %710 = vector.extract_strided_slice %709 {offsets = [0, 0], sizes = [8, 16], strides = [1, 1]} : vector<8x32xf32> to vector<8x16xf32>
    %711 = arith.index_cast %c7_i32_251 : i32 to index
    %c0_256 = arith.constant 0 : index
    %c0_257 = arith.constant 0 : index
    %712 = vector.load %arg16[%711, %c0_256, %c0_257] : memref<8x8x32xf32, #tpu.memory_space<vmem>>, vector<1x8x16xf32>
    %713 = vector.shape_cast %712 : vector<1x8x16xf32> to vector<8x16xf32>
    %714 = vector.shape_cast %710 : vector<8x16xf32> to vector<1x8x16xf32>
    tpu.vector_store %arg16[%711, %c0_256, %c0_257], %714 {strides = array<i32>} : memref<8x8x32xf32, #tpu.memory_space<vmem>>, vector<1x8x16xf32>,
    %715 = vector.extract_strided_slice %709 {offsets = [0, 16], sizes = [8, 16], strides = [1, 1]} : vector<8x32xf32> to vector<8x16xf32>
    %c7_i32_258 = arith.constant 7 : i32
    %716 = arith.subi %c7_i32_258, %c7_i32_251 : i32
    %717 = arith.index_cast %716 : i32 to index
    %c0_259 = arith.constant 0 : index
    %c16_260 = arith.constant 16 : index
    %718 = vector.load %arg16[%717, %c0_259, %c16_260] : memref<8x8x32xf32, #tpu.memory_space<vmem>>, vector<1x8x16xf32>
    %719 = vector.shape_cast %718 : vector<1x8x16xf32> to vector<8x16xf32>
    %720 = vector.shape_cast %715 : vector<8x16xf32> to vector<1x8x16xf32>
    tpu.vector_store %arg16[%717, %c0_259, %c16_260], %720 {strides = array<i32>} : memref<8x8x32xf32, #tpu.memory_space<vmem>>, vector<1x8x16xf32>,
    %c8_i32_261 = arith.constant 8 : i32
    %c0_262 = arith.constant 0 : index
    %c0_263 = arith.constant 0 : index
    %c0_264 = arith.constant 0 : index
    %721 = vector.load %arg16[%c0_262, %c0_263, %c0_264] : memref<8x8x32xf32, #tpu.memory_space<vmem>>, vector<8x8x32xf32>
    %cst_265 = arith.constant dense<0.000000e+00> : vector<8x32xf32>
    %722 = vector.multi_reduction <add>, %721, %cst_265 [0] : vector<8x8x32xf32> to vector<8x32xf32>
    %723 = arith.mulf %721, %721 : vector<8x8x32xf32>
    %cst_266 = arith.constant dense<0.000000e+00> : vector<8x32xf32>
    %724 = vector.multi_reduction <add>, %723, %cst_266 [0] : vector<8x8x32xf32> to vector<8x32xf32>
    %c0_267 = arith.constant 0 : index
    %c0_268 = arith.constant 0 : index
    %725 = vector.load %arg8[%c0_267, %c0_268] : memref<8x1xf32, #tpu.memory_space<vmem>>, vector<8x1xf32>
    %726 = vector.broadcast %725 : vector<8x1xf32> to vector<8x32xf32>
    %727 = arith.mulf %722, %726 : vector<8x32xf32>
    %cst_269 = arith.constant dense<0.000000e+00> : vector<32xf32>
    %728 = vector.multi_reduction <add>, %727, %cst_269 [0] : vector<8x32xf32> to vector<32xf32>
    %729 = vector.shape_cast %728 : vector<32xf32> to vector<1x32xf32>
    %cst_270 = arith.constant 6.250000e-02 : f32
    %730 = vector.broadcast %cst_270 : f32 to vector<1x32xf32>
    %731 = arith.mulf %729, %730 : vector<1x32xf32>
    %732 = vector.broadcast %725 : vector<8x1xf32> to vector<8x32xf32>
    %733 = arith.mulf %724, %732 : vector<8x32xf32>
    %cst_271 = arith.constant dense<0.000000e+00> : vector<32xf32>
    %734 = vector.multi_reduction <add>, %733, %cst_271 [0] : vector<8x32xf32> to vector<32xf32>
    %735 = vector.shape_cast %734 : vector<32xf32> to vector<1x32xf32>
    %cst_272 = arith.constant 6.250000e-02 : f32
    %736 = vector.broadcast %cst_272 : f32 to vector<1x32xf32>
    %737 = arith.mulf %735, %736 : vector<1x32xf32>
    %738 = arith.mulf %731, %731 : vector<1x32xf32>
    %739 = arith.subf %737, %738 : vector<1x32xf32>
    %cst_273 = arith.constant 9.99999974E-6 : f32
    %740 = vector.broadcast %cst_273 : f32 to vector<1x32xf32>
    %741 = arith.addf %739, %740 : vector<1x32xf32>
    %742 = math.rsqrt %741 : vector<1x32xf32>
    %c0_274 = arith.constant 0 : index
    %c0_275 = arith.constant 0 : index
    %743 = vector.load %arg9[%c0_274, %c0_275] : memref<1x32xf32, #tpu.memory_space<vmem>>, vector<1x32xf32>
    %744 = arith.mulf %742, %743 : vector<1x32xf32>
    %cst_276 = arith.constant 1.250000e-01 : f32
    %745 = vector.broadcast %cst_276 : f32 to vector<8x32xf32>
    %746 = arith.mulf %722, %745 : vector<8x32xf32>
    %747 = vector.broadcast %731 : vector<1x32xf32> to vector<8x32xf32>
    %748 = arith.subf %746, %747 : vector<8x32xf32>
    %749 = vector.broadcast %744 : vector<1x32xf32> to vector<8x32xf32>
    %750 = arith.mulf %748, %749 : vector<8x32xf32>
    %c0_277 = arith.constant 0 : index
    %c0_278 = arith.constant 0 : index
    %751 = vector.load %arg10[%c0_277, %c0_278] : memref<1x32xf32, #tpu.memory_space<vmem>>, vector<1x32xf32>
    %752 = vector.broadcast %751 : vector<1x32xf32> to vector<8x32xf32>
    %753 = arith.addf %750, %752 : vector<8x32xf32>
    %754 = arith.truncf %753 : vector<8x32xf32> to vector<8x32xbf16>
    %c0_279 = arith.constant 0 : index
    %c0_280 = arith.constant 0 : index
    %755 = vector.load %arg11[%c0_279, %c0_280] : memref<32x8xbf16, #tpu.memory_space<vmem>>, vector<32x8xbf16>
    %cst_281 = arith.constant dense<0.000000e+00> : vector<8x8xf32>
    %756 = tpu.matmul %754, %755, %cst_281 {dimension_numbers = #tpu.dot_dimension_numbers<[1], [0], [0], [1], [0, 0, 1, 1], [], []>} : vector<8x32xbf16>, vector<32x8xbf16>, vector<8x8xf32> -> vector<8x8xf32>
    %c0_282 = arith.constant 0 : index
    %c0_283 = arith.constant 0 : index
    %757 = vector.load %arg12[%c0_282, %c0_283] : memref<1x8xf32, #tpu.memory_space<vmem>>, vector<1x8xf32>
    %758 = vector.broadcast %757 : vector<1x8xf32> to vector<8x8xf32>
    %759 = arith.addf %756, %758 : vector<8x8xf32>
    %c0_284 = arith.constant 0 : index
    %c0_285 = arith.constant 0 : index
    %760 = vector.load %arg13[%c0_284, %c0_285] : memref<8x8xf32, #tpu.memory_space<vmem>>, vector<8x8xf32>
    tpu.vector_store %arg13[%c0_284, %c0_285], %759 {strides = array<i32>} : memref<8x8xf32, #tpu.memory_space<vmem>>, vector<8x8xf32>,
    return
  }
}

</mosaic_0001>

<llo_original>
// kernel: news_classifier_forward.1
$region0: #{news_classifier_forward.1}
  #allocation0 [shape = 'u32[]', space=smem, size = 0x4, offset = 0x4, fixed_abs, tag = 'smem constant byte address 0x4 - core index']
  #allocation1 [shape = 'u32[144,128]{1,0:T(1,128)}', space=vmem, size = 0x12000, scoped, tag = 'internal scratch']
  #allocation2 [shape = 'f32[8,8,128]{2,1,0:T(8,128)}', space=vmem, size = 0x8000, scoped, tag = 'scratch operand']
  #allocation3 [shape = 'f32[8,8,32]{2,1,0:T(8,128)}', space=vmem, size = 0x8000, scoped, tag = 'scratch operand']
  #allocation4 [shape = 'f32[8,8,32]{2,1,0:T(8,128)}', space=vmem, size = 0x8000, scoped, tag = 'scratch operand']
  %s0 = inlined_call_operand.vmem [shape: bf16[64,16], index: 0, kind: input, shape index: {}]
  %s1 = inlined_call_operand.vmem [shape: bf16[16,128], index: 1, kind: input, shape index: {}]
  %s2 = inlined_call_operand.vmem [shape: bf16[32,128], index: 2, kind: input, shape index: {}]
  %s3 = inlined_call_operand.vmem [shape: f32[1,128], index: 3, kind: input, shape index: {}]
  %s4 = inlined_call_operand.vmem [shape: bf16[32,128], index: 4, kind: input, shape index: {}]
  %s5 = inlined_call_operand.vmem [shape: bf16[32,128], index: 5, kind: input, shape index: {}]
  %s6 = inlined_call_operand.vmem [shape: f32[1,128], index: 6, kind: input, shape index: {}]
  %s7 = inlined_call_operand.vmem [shape: f32[1,128], index: 7, kind: input, shape index: {}]
  %s8 = inlined_call_operand.vmem [shape: f32[8,1], index: 8, kind: input, shape index: {}]
  %s9 = inlined_call_operand.vmem [shape: f32[1,32], index: 9, kind: input, shape index: {}]
  %s10 = inlined_call_operand.vmem [shape: f32[1,32], index: 10, kind: input, shape index: {}]
  %s11 = inlined_call_operand.vmem [shape: bf16[32,8], index: 11, kind: input, shape index: {}]
  %s12 = inlined_call_operand.vmem [shape: f32[1,8], index: 12, kind: input, shape index: {}]
  %s13 = inlined_call_operand.vmem [shape: f32[8,8], index: 13, kind: output, shape index: {}]
  %s14 = sld [smem:[#allocation0]]
  $region62: #{news_classifier_forward.1} parent=0
    _
  %s16 = ssub.s32 1, %s14
  %s17 = scalar_select 0, %s16, %s14
  // Predicated region
  $region2: #{news_classifier_forward.1} parent=0 // pred_check
    _
  $region3: #{news_classifier_forward.1} parent=0 // pred_check_branch
    %19 = sbr.rel (0) target = $region5
  $region4: #{news_classifier_forward.1} parent=0 // pred_region
    _
  $region5: #{news_classifier_forward.1} parent=0 // pred_fallthru
    _
  // Predicated region
  $region6: #{news_classifier_forward.1} parent=0 // pred_check
    _
  $region7: #{news_classifier_forward.1} parent=0 // pred_check_branch
    %21 = sbr.rel (0) target = $region9
  $region8: #{news_classifier_forward.1} parent=0 // pred_region
    _
  $region9: #{news_classifier_forward.1} parent=0 // pred_fallthru
    _
  // Predicated region
  $region10: #{news_classifier_forward.1} parent=0 // pred_check
    _
  $region11: #{news_classifier_forward.1} parent=0 // pred_check_branch
    %23 = sbr.rel (0) target = $region13
  $region12: #{news_classifier_forward.1} parent=0 // pred_region
    _
  $region13: #{news_classifier_forward.1} parent=0 // pred_fallthru
    _
  // Predicated region
  $region14: #{news_classifier_forward.1} parent=0 // pred_check
    _
  $region15: #{news_classifier_forward.1} parent=0 // pred_check_branch
    %25 = sbr.rel (0) target = $region17
  $region16: #{news_classifier_forward.1} parent=0 // pred_region
    _
  $region17: #{news_classifier_forward.1} parent=0 // pred_fallthru
    _
  // Predicated region
  $region18: #{news_classifier_forward.1} parent=0 // pred_check
    _
  $region19: #{news_classifier_forward.1} parent=0 // pred_check_branch
    %27 = sbr.rel (0) target = $region21
  $region20: #{news_classifier_forward.1} parent=0 // pred_region
    _
  $region21: #{news_classifier_forward.1} parent=0 // pred_fallthru
    _
  // Predicated region
  $region22: #{news_classifier_forward.1} parent=0 // pred_check
    _
  $region23: #{news_classifier_forward.1} parent=0 // pred_check_branch
    %29 = sbr.rel (0) target = $region25
  $region24: #{news_classifier_forward.1} parent=0 // pred_region
    _
  $region25: #{news_classifier_forward.1} parent=0 // pred_fallthru
    _
  // Predicated region
  $region26: #{news_classifier_forward.1} parent=0 // pred_check
    _
  $region27: #{news_classifier_forward.1} parent=0 // pred_check_branch
    %31 = sbr.rel (0) target = $region29
  $region28: #{news_classifier_forward.1} parent=0 // pred_region
    _
  $region29: #{news_classifier_forward.1} parent=0 // pred_fallthru
    _
  // Predicated region
  $region30: #{news_classifier_forward.1} parent=0 // pred_check
    _
  $region31: #{news_classifier_forward.1} parent=0 // pred_check_branch
    %33 = sbr.rel (0) target = $region33
  $region32: #{news_classifier_forward.1} parent=0 // pred_region
    _
  $region33: #{news_classifier_forward.1} parent=0 // pred_fallthru
    _
  // Predicated region
  $region34: #{news_classifier_forward.1} parent=0 // pred_check
    _
  $region35: #{news_classifier_forward.1} parent=0 // pred_check_branch
    %35 = sbr.rel (0) target = $region37
  $region36: #{news_classifier_forward.1} parent=0 // pred_region
    _
  $region37: #{news_classifier_forward.1} parent=0 // pred_fallthru
    _
  // Predicated region
  $region38: #{news_classifier_forward.1} parent=0 // pred_check
    _
  $region39: #{news_classifier_forward.1} parent=0 // pred_check_branch
    %37 = sbr.rel (0) target = $region41
  $region40: #{news_classifier_forward.1} parent=0 // pred_region
    _
  $region41: #{news_classifier_forward.1} parent=0 // pred_fallthru
    _
  // Predicated region
  $region42: #{news_classifier_forward.1} parent=0 // pred_check
    _
  $region43: #{news_classifier_forward.1} parent=0 // pred_check_branch
    %39 = sbr.rel (0) target = $region45
  $region44: #{news_classifier_forward.1} parent=0 // pred_region
    _
  $region45: #{news_classifier_forward.1} parent=0 // pred_fallthru
    _
  // Predicated region
  $region46: #{news_classifier_forward.1} parent=0 // pred_check
    _
  $region47: #{news_classifier_forward.1} parent=0 // pred_check_branch
    %41 = sbr.rel (0) target = $region49
  $region48: #{news_classifier_forward.1} parent=0 // pred_region
    _
  $region49: #{news_classifier_forward.1} parent=0 // pred_fallthru
    _
  // Predicated region
  $region50: #{news_classifier_forward.1} parent=0 // pred_check
    _
  $region51: #{news_classifier_forward.1} parent=0 // pred_check_branch
    %43 = sbr.rel (0) target = $region53
  $region52: #{news_classifier_forward.1} parent=0 // pred_region
    _
  $region53: #{news_classifier_forward.1} parent=0 // pred_fallthru
    _
  %v45 = vld [vmem:[%s7] sm:$0x1]
  %vm46 = vcmp.ne.f32.partialorder %v45, 0.0
  %v47 = vld [vmem:[%s0] sm:$0xf]
  %v48 = vld [vmem:[%s0 + $0x4] sm:$0xf]
  %v49 = vld [vmem:[%s0 + $0x8] sm:$0xf]
  %v50 = vld [vmem:[%s0 + $0xc] sm:$0xf]
  %v51 = vld [vmem:[%s0 + $0x10] sm:$0xf]
  %v52 = vld [vmem:[%s0 + $0x14] sm:$0xf]
  %v53 = vld [vmem:[%s0 + $0x18] sm:$0xf]
  %v54 = vld [vmem:[%s0 + $0x1c] sm:$0xf]
  %v55 = vld [vmem:[%s1] sm:$0xf]
  %v56 = vld [vmem:[%s1 + $0x4] sm:$0xf]
  %v57 = vld [vmem:[%s3] sm:$0x1]
  %v59 = vlaneseq
  %v60 = vshrl.u32 %v59, 7
  %v61 = vsub.s32 0, %v60
  %v62 = vrot.slane %v57, %v61
  %v72 = vunpack.c.l.b16 %v47
  %v73 = vunpack.c.l.b16 %v48
  %v74 = vunpack.c.l.b16 %v49
  %v75 = vunpack.c.l.b16 %v50
  %v76 = vunpack.c.l.b16 %v51
  %v77 = vunpack.c.l.b16 %v52
  %v78 = vunpack.c.l.b16 %v53
  %v79 = vunpack.c.l.b16 %v54
  %v80 = vpack.c.b16 %v73, %v72
  %v81 = vpack.c.b16 %v75, %v74
  %v82 = vpack.c.b16 %v77, %v76
  %v83 = vpack.c.b16 %v79, %v78
  %v86 = vunpack.c.l.b16 %v55
  %v87 = vunpack.c.l.b16 %v56
  %v88 = vpack.c.b16 %v87, %v86
  %vm90 = vcmask 130048
  %v92 = vsel %vm90, %v80, 0
  %v95 = vsel %vm90, %v81, 0
  %v98 = vsel %vm90, %v82, 0
  %v101 = vsel %vm90, %v83, 0
  %103 = vmatprep.subr.bf16.mxu0 0
  %104 = vmatpush1.bf16.msra.mxu0 %v88
  %105 = vmatprep.subr.bf16.mxu0 0
  %106 = vmatpush1.bf16.msra.mxu0 0
  %107 = vmatprep.subr.bf16.mxu0 0
  %108 = vmatpush1.bf16.msra.mxu0 0
  %109 = vmatprep.subr.bf16.mxu0 0
  %110 = vmatpush1.bf16.msra.mxu0 0
  %111 = vmatprep.subr.bf16.mxu0 0
  %112 = vmatpush1.bf16.msra.mxu0 0
  %113 = vmatprep.subr.bf16.mxu0 0
  %114 = vmatpush1.bf16.msra.mxu0 0
  %115 = vmatprep.subr.bf16.mxu0 0
  %116 = vmatpush1.bf16.msra.mxu0 0
  %117 = vmatprep.subr.bf16.mxu0 0
  %118 = vmatpush1.bf16.msra.mxu0 0
  %119 = vmatprep.subr.bf16.mxu0 0
  %120 = vmatpush1.bf16.msra.mxu0 0
  %121 = vmatprep.subr.bf16.mxu0 0
  %122 = vmatpush1.bf16.msra.mxu0 0
  %123 = vmatprep.subr.bf16.mxu0 0
  %124 = vmatpush1.bf16.msra.mxu0 0
  %125 = vmatprep.subr.bf16.mxu0 0
  %126 = vmatpush1.bf16.msra.mxu0 0
  %127 = vmatprep.subr.bf16.mxu0 0
  %128 = vmatpush1.bf16.msra.mxu0 0
  %129 = vmatprep.subr.bf16.mxu0 0
  %130 = vmatpush1.bf16.msra.mxu0 0
  %131 = vmatprep.subr.bf16.mxu0 0
  %132 = vmatpush1.bf16.msra.mxu0 0
  %133 = vmatprep.subr.bf16.mxu0 0
  %134 = vmatpush1.bf16.msra.mxu0 0
  %135 = vmatprep.mubr.bf16.mxu0 0
  %136 = vmatmul.mubr.bf16.gmra.mrb[0].mxu0 %v92
  %v137 = vpop.f32.mrb[0].mxu0
  %v138 = vadd.f32 %v62, %v137
  %v139 = vpop.f32.mrb[0].mxu0
  %v140 = vpop.f32.mrb[0].mxu0
  %v141 = vadd.f32 %v62, %v140
  %v142 = vpop.f32.mrb[0].mxu0
  %143 = vmatprep.mubr.bf16.mxu0 0
  %144 = vmatmul.mubr.bf16.gmra.mrb[0].mxu0 %v95
  %v145 = vpop.f32.mrb[0].mxu0
  %v146 = vadd.f32 %v62, %v145
  %v147 = vpop.f32.mrb[0].mxu0
  %v148 = vpop.f32.mrb[0].mxu0
  %v149 = vadd.f32 %v62, %v148
  %v150 = vpop.f32.mrb[0].mxu0
  %151 = vmatprep.mubr.bf16.mxu0 0
  %152 = vmatmul.mubr.bf16.gmra.mrb[0].mxu0 %v98
  %v153 = vpop.f32.mrb[0].mxu0
  %v154 = vadd.f32 %v62, %v153
  %v155 = vpop.f32.mrb[0].mxu0
  %v156 = vpop.f32.mrb[0].mxu0
  %v157 = vadd.f32 %v62, %v156
  %v158 = vpop.f32.mrb[0].mxu0
  %159 = vmatprep.mubr.bf16.mxu0 0
  %160 = vmatmul.mubr.bf16.gmra.mrb[0].mxu0 %v101
  %v161 = vpop.f32.mrb[0].mxu0
  %v162 = vadd.f32 %v62, %v161
  %v163 = vpop.f32.mrb[0].mxu0
  %v164 = vpop.f32.mrb[0].mxu0
  %v165 = vadd.f32 %v62, %v164
  %v166 = vpop.f32.mrb[0].mxu0
  %167 = vdwg.mxu0
  %168 = vst [vmem:[#allocation2] sm:$0xff] %v138
  %169 = vst [vmem:[#allocation2 + $0x8] sm:$0xff] %v141
  %170 = vst [vmem:[#allocation2 + $0x10] sm:$0xff] %v146
  %171 = vst [vmem:[#allocation2 + $0x18] sm:$0xff] %v149
  %172 = vst [vmem:[#allocation2 + $0x20] sm:$0xff] %v154
  %173 = vst [vmem:[#allocation2 + $0x28] sm:$0xff] %v157
  %174 = vst [vmem:[#allocation2 + $0x30] sm:$0xff] %v162
  %175 = vst [vmem:[#allocation2 + $0x38] sm:$0xff] %v165
  %v176 = vld [vmem:[#allocation2] sm:$0xff]
  %s177 = scalar_lea.vmem [#allocation2], 56
  %v178 = vld [vmem:[%s177] sm:$0xff]
  %v179 = vsel %vm46, 1, 0
  %v180 = vlaneseq
  %v181 = vshrl.u32 %v180, 7
  %v182 = vsub.s32 0, %v181
  %v183 = vrot.slane %v179, %v182
  %vm184 = vcmp.eq.s32.totalorder %v183, 1
  %v185 = vsel %vm184, %v176, %v178
  %186 = vst [vmem:[#allocation2] sm:$0xff] %v185
  %v187 = vsel %vm184, %v178, %v176
  %188 = vst [vmem:[%s177] sm:$0xff] %v187
  %s189 = scalar_lea.vmem [#allocation2], 8
  %v190 = vld [vmem:[%s189] sm:$0xff]
  %s191 = scalar_lea.vmem [#allocation2], 48
  %v192 = vld [vmem:[%s191] sm:$0xff]
  %v193 = vsel %vm184, %v190, %v192
  %194 = vst [vmem:[%s189] sm:$0xff] %v193
  %v195 = vsel %vm184, %v192, %v190
  %196 = vst [vmem:[%s191] sm:$0xff] %v195
  %s197 = scalar_lea.vmem [#allocation2], 16
  %v198 = vld [vmem:[%s197] sm:$0xff]
  %s199 = scalar_lea.vmem [#allocation2], 40
  %v200 = vld [vmem:[%s199] sm:$0xff]
  %v201 = vsel %vm184, %v198, %v200
  %202 = vst [vmem:[%s197] sm:$0xff] %v201
  %v203 = vsel %vm184, %v200, %v198
  %204 = vst [vmem:[%s199] sm:$0xff] %v203
  %s205 = scalar_lea.vmem [#allocation2], 24
  %v206 = vld [vmem:[%s205] sm:$0xff]
  %s207 = scalar_lea.vmem [#allocation2], 32
  %v208 = vld [vmem:[%s207] sm:$0xff]
  %v209 = vsel %vm184, %v206, %v208
  %210 = vst [vmem:[%s205] sm:$0xff] %v209
  %v211 = vsel %vm184, %v208, %v206
  %212 = vst [vmem:[%s207] sm:$0xff] %v211
  %v213 = vld [vmem:[%s2] sm:$0xf]
  %v214 = vld [vmem:[%s2 + $0x4] sm:$0xf]
  %v215 = vld [vmem:[%s2 + $0x8] sm:$0xf]
  %v216 = vld [vmem:[%s2 + $0xc] sm:$0xf]
  %v217 = vld [vmem:[#allocation2] sm:$0xff]
  %v222 = vunpack.c.l.b16 %v213
  %v223 = vunpack.c.l.b16 %v214
  %v224 = vunpack.c.l.b16 %v215
  %v225 = vunpack.c.l.b16 %v216
  %v226 = vpack.c.b16 %v223, %v222
  %v227 = vpack.c.b16 %v225, %v224
  %vm230 = vcmask 261120
  %v232 = vsel %vm230, 0, 0
  %234 = vmatprep.subr.bf16.mxu0 0
  %235 = vmatpush1.bf16.msra.mxu0 %v226
  %236 = vmatprep.subr.bf16.mxu0 0
  %237 = vmatpush1.bf16.msra.mxu0 %v227
  %238 = vmatprep.subr.bf16.mxu0 0
  %239 = vmatpush1.bf16.msra.mxu0 0
  %240 = vmatprep.subr.bf16.mxu0 0
  %241 = vmatpush1.bf16.msra.mxu0 0
  %242 = vmatprep.subr.bf16.mxu0 0
  %243 = vmatpush1.bf16.msra.mxu0 0
  %244 = vmatprep.subr.bf16.mxu0 0
  %245 = vmatpush1.bf16.msra.mxu0 0
  %246 = vmatprep.subr.bf16.mxu0 0
  %247 = vmatpush1.bf16.msra.mxu0 0
  %248 = vmatprep.subr.bf16.mxu0 0
  %249 = vmatpush1.bf16.msra.mxu0 0
  %250 = vmatprep.subr.bf16.mxu0 0
  %251 = vmatpush1.bf16.msra.mxu0 0
  %252 = vmatprep.subr.bf16.mxu0 0
  %253 = vmatpush1.bf16.msra.mxu0 0
  %254 = vmatprep.subr.bf16.mxu0 0
  %255 = vmatpush1.bf16.msra.mxu0 0
  %256 = vmatprep.subr.bf16.mxu0 0
  %257 = vmatpush1.bf16.msra.mxu0 0
  %258 = vmatprep.subr.bf16.mxu0 0
  %259 = vmatpush1.bf16.msra.mxu0 0
  %260 = vmatprep.subr.bf16.mxu0 0
  %261 = vmatpush1.bf16.msra.mxu0 0
  %262 = vmatprep.subr.bf16.mxu0 0
  %263 = vmatpush1.bf16.msra.mxu0 0
  %264 = vmatprep.subr.bf16.mxu0 0
  %265 = vmatpush1.bf16.msra.mxu0 0
  %266 = vmatprep.mubr.bf16.mxu0 0
  %267 = vmatmul.mubr.bf16.gmra.mrb[0].mxu0 %v232
  %v268 = vpop.f32.mrb[0].mxu0
  %v269 = vadd.f32 0.0, %v268
  %v270 = vpop.f32.mrb[0].mxu0
  %v271 = vpop.f32.mrb[0].mxu0
  %v272 = vpop.f32.mrb[0].mxu0
  %273 = vdwg.mxu0
  %v274 = vadd.f32 %v217, %v269
  %v275 = vxor.u32 %v274, 2147483648
  %v276 = vmul.f32 %v275, 1.442695
  %v277 = vpow.pop %v276
  %v278 = vadd.f32 %v277, 1.0
  %v279 = vrcp.pop %v278
  %v280 = vmul.f32 1.0, %v279
  %v281 = vtanh.pop %v274
  %v282 = vmul.f32 %v280, 0.0
  %284 = vrot.lane.b32.xlu0 %v281, 32
  %v285 = vpop.permute.xlu0 %284
  %v287 = vmul.f32 %v280, %v285
  %289 = vrot.lane.b32.xlu0 %v287, 32
  %v290 = vpop.permute.xlu0 %289
  %v292 = vadd.f32 %v282, %v290
  %v293 = vtanh.pop %v292
  %295 = vrot.lane.b32.xlu0 %v293, 32
  %v296 = vpop.permute.xlu0 %295
  %v298 = vmul.f32 %v280, %v296
  %300 = vrot.lane.b32.xlu0 %v298, 64
  %v301 = vpop.permute.xlu0 %300
  %303 = vst.msk [vmem:[#allocation3] sm:$0xff] %vm90, %v301
  %s304 = scalar_lea.vmem [#allocation3], 56
  %vm305 = vcmask 261248
  %306 = vst.msk [vmem:[%s304] sm:$0xff] %vm305, %v301
  %v307 = vld [vmem:[%s189] sm:$0xff]
  %v308 = vpack.c.bf16 %v298, %v298
  %310 = vrot.lane.b32.xlu0 %v308, 64
  %v311 = vpop.permute.xlu0 %310
  %v313 = vsel %vm230, %v311, 0
  %315 = vmatprep.subr.bf16.mxu0 0
  %316 = vmatpush1.bf16.msra.mxu0 %v226
  %317 = vmatprep.subr.bf16.mxu0 0
  %318 = vmatpush1.bf16.msra.mxu0 %v227
  %319 = vmatprep.subr.bf16.mxu0 0
  %320 = vmatpush1.bf16.msra.mxu0 0
  %321 = vmatprep.subr.bf16.mxu0 0
  %322 = vmatpush1.bf16.msra.mxu0 0
  %323 = vmatprep.subr.bf16.mxu0 0
  %324 = vmatpush1.bf16.msra.mxu0 0
  %325 = vmatprep.subr.bf16.mxu0 0
  %326 = vmatpush1.bf16.msra.mxu0 0
  %327 = vmatprep.subr.bf16.mxu0 0
  %328 = vmatpush1.bf16.msra.mxu0 0
  %329 = vmatprep.subr.bf16.mxu0 0
  %330 = vmatpush1.bf16.msra.mxu0 0
  %331 = vmatprep.subr.bf16.mxu0 0
  %332 = vmatpush1.bf16.msra.mxu0 0
  %333 = vmatprep.subr.bf16.mxu0 0
  %334 = vmatpush1.bf16.msra.mxu0 0
  %335 = vmatprep.subr.bf16.mxu0 0
  %336 = vmatpush1.bf16.msra.mxu0 0
  %337 = vmatprep.subr.bf16.mxu0 0
  %338 = vmatpush1.bf16.msra.mxu0 0
  %339 = vmatprep.subr.bf16.mxu0 0
  %340 = vmatpush1.bf16.msra.mxu0 0
  %341 = vmatprep.subr.bf16.mxu0 0
  %342 = vmatpush1.bf16.msra.mxu0 0
  %343 = vmatprep.subr.bf16.mxu0 0
  %344 = vmatpush1.bf16.msra.mxu0 0
  %345 = vmatprep.subr.bf16.mxu0 0
  %346 = vmatpush1.bf16.msra.mxu0 0
  %347 = vmatprep.mubr.bf16.mxu0 0
  %348 = vmatmul.mubr.bf16.gmra.mrb[0].mxu0 %v313
  %v349 = vpop.f32.mrb[0].mxu0
  %v350 = vadd.f32 0.0, %v349
  %v351 = vpop.f32.mrb[0].mxu0
  %v352 = vpop.f32.mrb[0].mxu0
  %v353 = vpop.f32.mrb[0].mxu0
  %354 = vdwg.mxu0
  %v355 = vadd.f32 %v307, %v350
  %v356 = vxor.u32 %v355, 2147483648
  %v357 = vmul.f32 %v356, 1.442695
  %v358 = vpow.pop %v357
  %v359 = vadd.f32 %v358, 1.0
  %v360 = vrcp.pop %v359
  %v361 = vmul.f32 1.0, %v360
  %v362 = vtanh.pop %v355
  %v363 = vmul.f32 %v361, %v292
  %365 = vrot.lane.b32.xlu0 %v362, 32
  %v366 = vpop.permute.xlu0 %365
  %v368 = vmul.f32 %v361, %v366
  %370 = vrot.lane.b32.xlu0 %v368, 32
  %v371 = vpop.permute.xlu0 %370
  %v373 = vadd.f32 %v363, %v371
  %v374 = vtanh.pop %v373
  %376 = vrot.lane.b32.xlu0 %v374, 32
  %v377 = vpop.permute.xlu0 %376
  %v379 = vmul.f32 %v361, %v377
  %381 = vrot.lane.b32.xlu0 %v379, 64
  %v382 = vpop.permute.xlu0 %381
  %s384 = scalar_lea.vmem [#allocation3], 8
  %385 = vst.msk [vmem:[%s384] sm:$0xff] %vm90, %v382
  %s386 = scalar_lea.vmem [#allocation3], 48
  %387 = vst.msk [vmem:[%s386] sm:$0xff] %vm305, %v382
  %v388 = vld [vmem:[%s197] sm:$0xff]
  %v389 = vpack.c.bf16 %v379, %v379
  %391 = vrot.lane.b32.xlu0 %v389, 64
  %v392 = vpop.permute.xlu0 %391
  %v394 = vsel %vm230, %v392, 0
  %396 = vmatprep.subr.bf16.mxu0 0
  %397 = vmatpush1.bf16.msra.mxu0 %v226
  %398 = vmatprep.subr.bf16.mxu0 0
  %399 = vmatpush1.bf16.msra.mxu0 %v227
  %400 = vmatprep.subr.bf16.mxu0 0
  %401 = vmatpush1.bf16.msra.mxu0 0
  %402 = vmatprep.subr.bf16.mxu0 0
  %403 = vmatpush1.bf16.msra.mxu0 0
  %404 = vmatprep.subr.bf16.mxu0 0
  %405 = vmatpush1.bf16.msra.mxu0 0
  %406 = vmatprep.subr.bf16.mxu0 0
  %407 = vmatpush1.bf16.msra.mxu0 0
  %408 = vmatprep.subr.bf16.mxu0 0
  %409 = vmatpush1.bf16.msra.mxu0 0
  %410 = vmatprep.subr.bf16.mxu0 0
  %411 = vmatpush1.bf16.msra.mxu0 0
  %412 = vmatprep.subr.bf16.mxu0 0
  %413 = vmatpush1.bf16.msra.mxu0 0
  %414 = vmatprep.subr.bf16.mxu0 0
  %415 = vmatpush1.bf16.msra.mxu0 0
  %416 = vmatprep.subr.bf16.mxu0 0
  %417 = vmatpush1.bf16.msra.mxu0 0
  %418 = vmatprep.subr.bf16.mxu0 0
  %419 = vmatpush1.bf16.msra.mxu0 0
  %420 = vmatprep.subr.bf16.mxu0 0
  %421 = vmatpush1.bf16.msra.mxu0 0
  %422 = vmatprep.subr.bf16.mxu0 0
  %423 = vmatpush1.bf16.msra.mxu0 0
  %424 = vmatprep.subr.bf16.mxu0 0
  %425 = vmatpush1.bf16.msra.mxu0 0
  %426 = vmatprep.subr.bf16.mxu0 0
  %427 = vmatpush1.bf16.msra.mxu0 0
  %428 = vmatprep.mubr.bf16.mxu0 0
  %429 = vmatmul.mubr.bf16.gmra.mrb[0].mxu0 %v394
  %v430 = vpop.f32.mrb[0].mxu0
  %v431 = vadd.f32 0.0, %v430
  %v432 = vpop.f32.mrb[0].mxu0
  %v433 = vpop.f32.mrb[0].mxu0
  %v434 = vpop.f32.mrb[0].mxu0
  %435 = vdwg.mxu0
  %v436 = vadd.f32 %v388, %v431
  %v437 = vxor.u32 %v436, 2147483648
  %v438 = vmul.f32 %v437, 1.442695
  %v439 = vpow.pop %v438
  %v440 = vadd.f32 %v439, 1.0
  %v441 = vrcp.pop %v440
  %v442 = vmul.f32 1.0, %v441
  %v443 = vtanh.pop %v436
  %v444 = vmul.f32 %v442, %v373
  %446 = vrot.lane.b32.xlu0 %v443, 32
  %v447 = vpop.permute.xlu0 %446
  %v449 = vmul.f32 %v442, %v447
  %451 = vrot.lane.b32.xlu0 %v449, 32
  %v452 = vpop.permute.xlu0 %451
  %v454 = vadd.f32 %v444, %v452
  %v455 = vtanh.pop %v454
  %457 = vrot.lane.b32.xlu0 %v455, 32
  %v458 = vpop.permute.xlu0 %457
  %v460 = vmul.f32 %v442, %v458
  %462 = vrot.lane.b32.xlu0 %v460, 64
  %v463 = vpop.permute.xlu0 %462
  %s465 = scalar_lea.vmem [#allocation3], 16
  %466 = vst.msk [vmem:[%s465] sm:$0xff] %vm90, %v463
  %s467 = scalar_lea.vmem [#allocation3], 40
  %468 = vst.msk [vmem:[%s467] sm:$0xff] %vm305, %v463
  %v469 = vld [vmem:[%s205] sm:$0xff]
  %v470 = vpack.c.bf16 %v460, %v460
  %472 = vrot.lane.b32.xlu0 %v470, 64
  %v473 = vpop.permute.xlu0 %472
  %v475 = vsel %vm230, %v473, 0
  %477 = vmatprep.subr.bf16.mxu0 0
  %478 = vmatpush1.bf16.msra.mxu0 %v226
  %479 = vmatprep.subr.bf16.mxu0 0
  %480 = vmatpush1.bf16.msra.mxu0 %v227
  %481 = vmatprep.subr.bf16.mxu0 0
  %482 = vmatpush1.bf16.msra.mxu0 0
  %483 = vmatprep.subr.bf16.mxu0 0
  %484 = vmatpush1.bf16.msra.mxu0 0
  %485 = vmatprep.subr.bf16.mxu0 0
  %486 = vmatpush1.bf16.msra.mxu0 0
  %487 = vmatprep.subr.bf16.mxu0 0
  %488 = vmatpush1.bf16.msra.mxu0 0
  %489 = vmatprep.subr.bf16.mxu0 0
  %490 = vmatpush1.bf16.msra.mxu0 0
  %491 = vmatprep.subr.bf16.mxu0 0
  %492 = vmatpush1.bf16.msra.mxu0 0
  %493 = vmatprep.subr.bf16.mxu0 0
  %494 = vmatpush1.bf16.msra.mxu0 0
  %495 = vmatprep.subr.bf16.mxu0 0
  %496 = vmatpush1.bf16.msra.mxu0 0
  %497 = vmatprep.subr.bf16.mxu0 0
  %498 = vmatpush1.bf16.msra.mxu0 0
  %499 = vmatprep.subr.bf16.mxu0 0
  %500 = vmatpush1.bf16.msra.mxu0 0
  %501 = vmatprep.subr.bf16.mxu0 0
  %502 = vmatpush1.bf16.msra.mxu0 0
  %503 = vmatprep.subr.bf16.mxu0 0
  %504 = vmatpush1.bf16.msra.mxu0 0
  %505 = vmatprep.subr.bf16.mxu0 0
  %506 = vmatpush1.bf16.msra.mxu0 0
  %507 = vmatprep.subr.bf16.mxu0 0
  %508 = vmatpush1.bf16.msra.mxu0 0
  %509 = vmatprep.mubr.bf16.mxu0 0
  %510 = vmatmul.mubr.bf16.gmra.mrb[0].mxu0 %v475
  %v511 = vpop.f32.mrb[0].mxu0
  %v512 = vadd.f32 0.0, %v511
  %v513 = vpop.f32.mrb[0].mxu0
  %v514 = vpop.f32.mrb[0].mxu0
  %v515 = vpop.f32.mrb[0].mxu0
  %516 = vdwg.mxu0
  %v517 = vadd.f32 %v469, %v512
  %v518 = vxor.u32 %v517, 2147483648
  %v519 = vmul.f32 %v518, 1.442695
  %v520 = vpow.pop %v519
  %v521 = vadd.f32 %v520, 1.0
  %v522 = vrcp.pop %v521
  %v523 = vmul.f32 1.0, %v522
  %v524 = vtanh.pop %v517
  %v525 = vmul.f32 %v523, %v454
  %527 = vrot.lane.b32.xlu0 %v524, 32
  %v528 = vpop.permute.xlu0 %527
  %v530 = vmul.f32 %v523, %v528
  %532 = vrot.lane.b32.xlu0 %v530, 32
  %v533 = vpop.permute.xlu0 %532
  %v535 = vadd.f32 %v525, %v533
  %v536 = vtanh.pop %v535
  %538 = vrot.lane.b32.xlu0 %v536, 32
  %v539 = vpop.permute.xlu0 %538
  %v541 = vmul.f32 %v523, %v539
  %543 = vrot.lane.b32.xlu0 %v541, 64
  %v544 = vpop.permute.xlu0 %543
  %s546 = scalar_lea.vmem [#allocation3], 24
  %547 = vst.msk [vmem:[%s546] sm:$0xff] %vm90, %v544
  %s548 = scalar_lea.vmem [#allocation3], 32
  %549 = vst.msk [vmem:[%s548] sm:$0xff] %vm305, %v544
  %v550 = vld [vmem:[%s207] sm:$0xff]
  %v551 = vpack.c.bf16 %v541, %v541
  %553 = vrot.lane.b32.xlu0 %v551, 64
  %v554 = vpop.permute.xlu0 %553
  %v556 = vsel %vm230, %v554, 0
  %558 = vmatprep.subr.bf16.mxu0 0
  %559 = vmatpush1.bf16.msra.mxu0 %v226
  %560 = vmatprep.subr.bf16.mxu0 0
  %561 = vmatpush1.bf16.msra.mxu0 %v227
  %562 = vmatprep.subr.bf16.mxu0 0
  %563 = vmatpush1.bf16.msra.mxu0 0
  %564 = vmatprep.subr.bf16.mxu0 0
  %565 = vmatpush1.bf16.msra.mxu0 0
  %566 = vmatprep.subr.bf16.mxu0 0
  %567 = vmatpush1.bf16.msra.mxu0 0
  %568 = vmatprep.subr.bf16.mxu0 0
  %569 = vmatpush1.bf16.msra.mxu0 0
  %570 = vmatprep.subr.bf16.mxu0 0
  %571 = vmatpush1.bf16.msra.mxu0 0
  %572 = vmatprep.subr.bf16.mxu0 0
  %573 = vmatpush1.bf16.msra.mxu0 0
  %574 = vmatprep.subr.bf16.mxu0 0
  %575 = vmatpush1.bf16.msra.mxu0 0
  %576 = vmatprep.subr.bf16.mxu0 0
  %577 = vmatpush1.bf16.msra.mxu0 0
  %578 = vmatprep.subr.bf16.mxu0 0
  %579 = vmatpush1.bf16.msra.mxu0 0
  %580 = vmatprep.subr.bf16.mxu0 0
  %581 = vmatpush1.bf16.msra.mxu0 0
  %582 = vmatprep.subr.bf16.mxu0 0
  %583 = vmatpush1.bf16.msra.mxu0 0
  %584 = vmatprep.subr.bf16.mxu0 0
  %585 = vmatpush1.bf16.msra.mxu0 0
  %586 = vmatprep.subr.bf16.mxu0 0
  %587 = vmatpush1.bf16.msra.mxu0 0
  %588 = vmatprep.subr.bf16.mxu0 0
  %589 = vmatpush1.bf16.msra.mxu0 0
  %590 = vmatprep.mubr.bf16.mxu0 0
  %591 = vmatmul.mubr.bf16.gmra.mrb[0].mxu0 %v556
  %v592 = vpop.f32.mrb[0].mxu0
  %v593 = vadd.f32 0.0, %v592
  %v594 = vpop.f32.mrb[0].mxu0
  %v595 = vpop.f32.mrb[0].mxu0
  %v596 = vpop.f32.mrb[0].mxu0
  %597 = vdwg.mxu0
  %v598 = vadd.f32 %v550, %v593
  %v599 = vxor.u32 %v598, 2147483648
  %v600 = vmul.f32 %v599, 1.442695
  %v601 = vpow.pop %v600
  %v602 = vadd.f32 %v601, 1.0
  %v603 = vrcp.pop %v602
  %v604 = vmul.f32 1.0, %v603
  %v605 = vtanh.pop %v598
  %v606 = vmul.f32 %v604, %v535
  %608 = vrot.lane.b32.xlu0 %v605, 32
  %v609 = vpop.permute.xlu0 %608
  %v611 = vmul.f32 %v604, %v609
  %613 = vrot.lane.b32.xlu0 %v611, 32
  %v614 = vpop.permute.xlu0 %613
  %v616 = vadd.f32 %v606, %v614
  %v617 = vtanh.pop %v616
  %619 = vrot.lane.b32.xlu0 %v617, 32
  %v620 = vpop.permute.xlu0 %619
  %v622 = vmul.f32 %v604, %v620
  %624 = vrot.lane.b32.xlu0 %v622, 64
  %v625 = vpop.permute.xlu0 %624
  %627 = vst.msk [vmem:[%s548] sm:$0xff] %vm90, %v625
  %628 = vst.msk [vmem:[%s546] sm:$0xff] %vm305, %v625
  %v629 = vld [vmem:[%s199] sm:$0xff]
  %v630 = vpack.c.bf16 %v622, %v622
  %632 = vrot.lane.b32.xlu0 %v630, 64
  %v633 = vpop.permute.xlu0 %632
  %v635 = vsel %vm230, %v633, 0
  %637 = vmatprep.subr.bf16.mxu0 0
  %638 = vmatpush1.bf16.msra.mxu0 %v226
  %639 = vmatprep.subr.bf16.mxu0 0
  %640 = vmatpush1.bf16.msra.mxu0 %v227
  %641 = vmatprep.subr.bf16.mxu0 0
  %642 = vmatpush1.bf16.msra.mxu0 0
  %643 = vmatprep.subr.bf16.mxu0 0
  %644 = vmatpush1.bf16.msra.mxu0 0
  %645 = vmatprep.subr.bf16.mxu0 0
  %646 = vmatpush1.bf16.msra.mxu0 0
  %647 = vmatprep.subr.bf16.mxu0 0
  %648 = vmatpush1.bf16.msra.mxu0 0
  %649 = vmatprep.subr.bf16.mxu0 0
  %650 = vmatpush1.bf16.msra.mxu0 0
  %651 = vmatprep.subr.bf16.mxu0 0
  %652 = vmatpush1.bf16.msra.mxu0 0
  %653 = vmatprep.subr.bf16.mxu0 0
  %654 = vmatpush1.bf16.msra.mxu0 0
  %655 = vmatprep.subr.bf16.mxu0 0
  %656 = vmatpush1.bf16.msra.mxu0 0
  %657 = vmatprep.subr.bf16.mxu0 0
  %658 = vmatpush1.bf16.msra.mxu0 0
  %659 = vmatprep.subr.bf16.mxu0 0
  %660 = vmatpush1.bf16.msra.mxu0 0
  %661 = vmatprep.subr.bf16.mxu0 0
  %662 = vmatpush1.bf16.msra.mxu0 0
  %663 = vmatprep.subr.bf16.mxu0 0
  %664 = vmatpush1.bf16.msra.mxu0 0
  %665 = vmatprep.subr.bf16.mxu0 0
  %666 = vmatpush1.bf16.msra.mxu0 0
  %667 = vmatprep.subr.bf16.mxu0 0
  %668 = vmatpush1.bf16.msra.mxu0 0
  %669 = vmatprep.mubr.bf16.mxu0 0
  %670 = vmatmul.mubr.bf16.gmra.mrb[0].mxu0 %v635
  %v671 = vpop.f32.mrb[0].mxu0
  %v672 = vadd.f32 0.0, %v671
  %v673 = vpop.f32.mrb[0].mxu0
  %v674 = vpop.f32.mrb[0].mxu0
  %v675 = vpop.f32.mrb[0].mxu0
  %676 = vdwg.mxu0
  %v677 = vadd.f32 %v629, %v672
  %v678 = vxor.u32 %v677, 2147483648
  %v679 = vmul.f32 %v678, 1.442695
  %v680 = vpow.pop %v679
  %v681 = vadd.f32 %v680, 1.0
  %v682 = vrcp.pop %v681
  %v683 = vmul.f32 1.0, %v682
  %v684 = vtanh.pop %v677
  %v685 = vmul.f32 %v683, %v616
  %687 = vrot.lane.b32.xlu0 %v684, 32
  %v688 = vpop.permute.xlu0 %687
  %v690 = vmul.f32 %v683, %v688
  %692 = vrot.lane.b32.xlu0 %v690, 32
  %v693 = vpop.permute.xlu0 %692
  %v695 = vadd.f32 %v685, %v693
  %v696 = vtanh.pop %v695
  %698 = vrot.lane.b32.xlu0 %v696, 32
  %v699 = vpop.permute.xlu0 %698
  %v701 = vmul.f32 %v683, %v699
  %703 = vrot.lane.b32.xlu0 %v701, 64
  %v704 = vpop.permute.xlu0 %703
  %706 = vst.msk [vmem:[%s467] sm:$0xff] %vm90, %v704
  %707 = vst.msk [vmem:[%s465] sm:$0xff] %vm305, %v704
  %v708 = vld [vmem:[%s191] sm:$0xff]
  %v709 = vpack.c.bf16 %v701, %v701
  %711 = vrot.lane.b32.xlu0 %v709, 64
  %v712 = vpop.permute.xlu0 %711
  %v714 = vsel %vm230, %v712, 0
  %716 = vmatprep.subr.bf16.mxu0 0
  %717 = vmatpush1.bf16.msra.mxu0 %v226
  %718 = vmatprep.subr.bf16.mxu0 0
  %719 = vmatpush1.bf16.msra.mxu0 %v227
  %720 = vmatprep.subr.bf16.mxu0 0
  %721 = vmatpush1.bf16.msra.mxu0 0
  %722 = vmatprep.subr.bf16.mxu0 0
  %723 = vmatpush1.bf16.msra.mxu0 0
  %724 = vmatprep.subr.bf16.mxu0 0
  %725 = vmatpush1.bf16.msra.mxu0 0
  %726 = vmatprep.subr.bf16.mxu0 0
  %727 = vmatpush1.bf16.msra.mxu0 0
  %728 = vmatprep.subr.bf16.mxu0 0
  %729 = vmatpush1.bf16.msra.mxu0 0
  %730 = vmatprep.subr.bf16.mxu0 0
  %731 = vmatpush1.bf16.msra.mxu0 0
  %732 = vmatprep.subr.bf16.mxu0 0
  %733 = vmatpush1.bf16.msra.mxu0 0
  %734 = vmatprep.subr.bf16.mxu0 0
  %735 = vmatpush1.bf16.msra.mxu0 0
  %736 = vmatprep.subr.bf16.mxu0 0
  %737 = vmatpush1.bf16.msra.mxu0 0
  %738 = vmatprep.subr.bf16.mxu0 0
  %739 = vmatpush1.bf16.msra.mxu0 0
  %740 = vmatprep.subr.bf16.mxu0 0
  %741 = vmatpush1.bf16.msra.mxu0 0
  %742 = vmatprep.subr.bf16.mxu0 0
  %743 = vmatpush1.bf16.msra.mxu0 0
  %744 = vmatprep.subr.bf16.mxu0 0
  %745 = vmatpush1.bf16.msra.mxu0 0
  %746 = vmatprep.subr.bf16.mxu0 0
  %747 = vmatpush1.bf16.msra.mxu0 0
  %748 = vmatprep.mubr.bf16.mxu0 0
  %749 = vmatmul.mubr.bf16.gmra.mrb[0].mxu0 %v714
  %v750 = vpop.f32.mrb[0].mxu0
  %v751 = vadd.f32 0.0, %v750
  %v752 = vpop.f32.mrb[0].mxu0
  %v753 = vpop.f32.mrb[0].mxu0
  %v754 = vpop.f32.mrb[0].mxu0
  %755 = vdwg.mxu0
  %v756 = vadd.f32 %v708, %v751
  %v757 = vxor.u32 %v756, 2147483648
  %v758 = vmul.f32 %v757, 1.442695
  %v759 = vpow.pop %v758
  %v760 = vadd.f32 %v759, 1.0
  %v761 = vrcp.pop %v760
  %v762 = vmul.f32 1.0, %v761
  %v763 = vtanh.pop %v756
  %v764 = vmul.f32 %v762, %v695
  %766 = vrot.lane.b32.xlu0 %v763, 32
  %v767 = vpop.permute.xlu0 %766
  %v769 = vmul.f32 %v762, %v767
  %771 = vrot.lane.b32.xlu0 %v769, 32
  %v772 = vpop.permute.xlu0 %771
  %v774 = vadd.f32 %v764, %v772
  %v775 = vtanh.pop %v774
  %777 = vrot.lane.b32.xlu0 %v775, 32
  %v778 = vpop.permute.xlu0 %777
  %v780 = vmul.f32 %v762, %v778
  %782 = vrot.lane.b32.xlu0 %v780, 64
  %v783 = vpop.permute.xlu0 %782
  %785 = vst.msk [vmem:[%s386] sm:$0xff] %vm90, %v783
  %786 = vst.msk [vmem:[%s384] sm:$0xff] %vm305, %v783
  %v787 = vld [vmem:[%s177] sm:$0xff]
  %v788 = vpack.c.bf16 %v780, %v780
  %790 = vrot.lane.b32.xlu0 %v788, 64
  %v791 = vpop.permute.xlu0 %790
  %v793 = vsel %vm230, %v791, 0
  %795 = vmatprep.subr.bf16.mxu0 0
  %796 = vmatpush1.bf16.msra.mxu0 %v226
  %797 = vmatprep.subr.bf16.mxu0 0
  %798 = vmatpush1.bf16.msra.mxu0 %v227
  %799 = vmatprep.subr.bf16.mxu0 0
  %800 = vmatpush1.bf16.msra.mxu0 0
  %801 = vmatprep.subr.bf16.mxu0 0
  %802 = vmatpush1.bf16.msra.mxu0 0
  %803 = vmatprep.subr.bf16.mxu0 0
  %804 = vmatpush1.bf16.msra.mxu0 0
  %805 = vmatprep.subr.bf16.mxu0 0
  %806 = vmatpush1.bf16.msra.mxu0 0
  %807 = vmatprep.subr.bf16.mxu0 0
  %808 = vmatpush1.bf16.msra.mxu0 0
  %809 = vmatprep.subr.bf16.mxu0 0
  %810 = vmatpush1.bf16.msra.mxu0 0
  %811 = vmatprep.subr.bf16.mxu0 0
  %812 = vmatpush1.bf16.msra.mxu0 0
  %813 = vmatprep.subr.bf16.mxu0 0
  %814 = vmatpush1.bf16.msra.mxu0 0
  %815 = vmatprep.subr.bf16.mxu0 0
  %816 = vmatpush1.bf16.msra.mxu0 0
  %817 = vmatprep.subr.bf16.mxu0 0
  %818 = vmatpush1.bf16.msra.mxu0 0
  %819 = vmatprep.subr.bf16.mxu0 0
  %820 = vmatpush1.bf16.msra.mxu0 0
  %821 = vmatprep.subr.bf16.mxu0 0
  %822 = vmatpush1.bf16.msra.mxu0 0
  %823 = vmatprep.subr.bf16.mxu0 0
  %824 = vmatpush1.bf16.msra.mxu0 0
  %825 = vmatprep.subr.bf16.mxu0 0
  %826 = vmatpush1.bf16.msra.mxu0 0
  %827 = vmatprep.mubr.bf16.mxu0 0
  %828 = vmatmul.mubr.bf16.gmra.mrb[0].mxu0 %v793
  %v829 = vpop.f32.mrb[0].mxu0
  %v830 = vadd.f32 0.0, %v829
  %v831 = vpop.f32.mrb[0].mxu0
  %v832 = vpop.f32.mrb[0].mxu0
  %v833 = vpop.f32.mrb[0].mxu0
  %834 = vdwg.mxu0
  %v835 = vadd.f32 %v787, %v830
  %v836 = vxor.u32 %v835, 2147483648
  %v837 = vmul.f32 %v836, 1.442695
  %v838 = vpow.pop %v837
  %v839 = vadd.f32 %v838, 1.0
  %v840 = vrcp.pop %v839
  %v841 = vmul.f32 1.0, %v840
  %v842 = vtanh.pop %v835
  %v843 = vmul.f32 %v841, %v774
  %845 = vrot.lane.b32.xlu0 %v842, 32
  %v846 = vpop.permute.xlu0 %845
  %v848 = vmul.f32 %v841, %v846
  %850 = vrot.lane.b32.xlu0 %v848, 32
  %v851 = vpop.permute.xlu0 %850
  %v853 = vadd.f32 %v843, %v851
  %v854 = vtanh.pop %v853
  %856 = vrot.lane.b32.xlu0 %v854, 32
  %v857 = vpop.permute.xlu0 %856
  %v859 = vmul.f32 %v841, %v857
  %861 = vrot.lane.b32.xlu0 %v859, 64
  %v862 = vpop.permute.xlu0 %861
  %864 = vst.msk [vmem:[%s304] sm:$0xff] %vm90, %v862
  %865 = vst.msk [vmem:[#allocation3] sm:$0xff] %vm305, %v862
  %v866 = vld [vmem:[#allocation3] sm:$0xff]
  %v867 = vld [vmem:[#allocation3 + $0x8] sm:$0xff]
  %v868 = vld [vmem:[#allocation3 + $0x10] sm:$0xff]
  %v869 = vld [vmem:[#allocation3 + $0x18] sm:$0xff]
  %v870 = vld [vmem:[#allocation3 + $0x20] sm:$0xff]
  %v871 = vld [vmem:[#allocation3 + $0x28] sm:$0xff]
  %v872 = vld [vmem:[#allocation3 + $0x30] sm:$0xff]
  %v873 = vld [vmem:[#allocation3 + $0x38] sm:$0xff]
  %v874 = vpack.c.bf16 %v867, %v866
  %v875 = vpack.c.bf16 %v869, %v868
  %v876 = vpack.c.bf16 %v871, %v870
  %v877 = vpack.c.bf16 %v873, %v872
  %v878 = vld [vmem:[%s4] sm:$0xf]
  %v879 = vld [vmem:[%s4 + $0x4] sm:$0xf]
  %v880 = vld [vmem:[%s4 + $0x8] sm:$0xf]
  %v881 = vld [vmem:[%s4 + $0xc] sm:$0xf]
  %v882 = vld [vmem:[%s6] sm:$0x1]
  %v884 = vlaneseq
  %v885 = vshrl.u32 %v884, 7
  %v886 = vsub.s32 0, %v885
  %v887 = vrot.slane %v882, %v886
  %v893 = vunpack.c.l.b16 %v878
  %v894 = vunpack.c.l.b16 %v879
  %v895 = vunpack.c.l.b16 %v880
  %v896 = vunpack.c.l.b16 %v881
  %v897 = vpack.c.b16 %v894, %v893
  %v898 = vpack.c.b16 %v896, %v895
  %v902 = vsel %vm230, %v874, 0
  %v905 = vsel %vm230, %v875, 0
  %v908 = vsel %vm230, %v876, 0
  %v911 = vsel %vm230, %v877, 0
  %913 = vmatprep.subr.bf16.mxu0 0
  %914 = vmatpush1.bf16.msra.mxu0 %v897
  %915 = vmatprep.subr.bf16.mxu0 0
  %916 = vmatpush1.bf16.msra.mxu0 %v898
  %917 = vmatprep.subr.bf16.mxu0 0
  %918 = vmatpush1.bf16.msra.mxu0 0
  %919 = vmatprep.subr.bf16.mxu0 0
  %920 = vmatpush1.bf16.msra.mxu0 0
  %921 = vmatprep.subr.bf16.mxu0 0
  %922 = vmatpush1.bf16.msra.mxu0 0
  %923 = vmatprep.subr.bf16.mxu0 0
  %924 = vmatpush1.bf16.msra.mxu0 0
  %925 = vmatprep.subr.bf16.mxu0 0
  %926 = vmatpush1.bf16.msra.mxu0 0
  %927 = vmatprep.subr.bf16.mxu0 0
  %928 = vmatpush1.bf16.msra.mxu0 0
  %929 = vmatprep.subr.bf16.mxu0 0
  %930 = vmatpush1.bf16.msra.mxu0 0
  %931 = vmatprep.subr.bf16.mxu0 0
  %932 = vmatpush1.bf16.msra.mxu0 0
  %933 = vmatprep.subr.bf16.mxu0 0
  %934 = vmatpush1.bf16.msra.mxu0 0
  %935 = vmatprep.subr.bf16.mxu0 0
  %936 = vmatpush1.bf16.msra.mxu0 0
  %937 = vmatprep.subr.bf16.mxu0 0
  %938 = vmatpush1.bf16.msra.mxu0 0
  %939 = vmatprep.subr.bf16.mxu0 0
  %940 = vmatpush1.bf16.msra.mxu0 0
  %941 = vmatprep.subr.bf16.mxu0 0
  %942 = vmatpush1.bf16.msra.mxu0 0
  %943 = vmatprep.subr.bf16.mxu0 0
  %944 = vmatpush1.bf16.msra.mxu0 0
  %945 = vmatprep.mubr.bf16.mxu0 0
  %946 = vmatmul.mubr.bf16.gmra.mrb[0].mxu0 %v902
  %v947 = vpop.f32.mrb[0].mxu0
  %v948 = vadd.f32 %v887, %v947
  %v949 = vpop.f32.mrb[0].mxu0
  %v950 = vpop.f32.mrb[0].mxu0
  %v951 = vadd.f32 %v887, %v950
  %v952 = vpop.f32.mrb[0].mxu0
  %953 = vmatprep.mubr.bf16.mxu0 0
  %954 = vmatmul.mubr.bf16.gmra.mrb[0].mxu0 %v905
  %v955 = vpop.f32.mrb[0].mxu0
  %v956 = vadd.f32 %v887, %v955
  %v957 = vpop.f32.mrb[0].mxu0
  %v958 = vpop.f32.mrb[0].mxu0
  %v959 = vadd.f32 %v887, %v958
  %v960 = vpop.f32.mrb[0].mxu0
  %961 = vmatprep.mubr.bf16.mxu0 0
  %962 = vmatmul.mubr.bf16.gmra.mrb[0].mxu0 %v908
  %v963 = vpop.f32.mrb[0].mxu0
  %v964 = vadd.f32 %v887, %v963
  %v965 = vpop.f32.mrb[0].mxu0
  %v966 = vpop.f32.mrb[0].mxu0
  %v967 = vadd.f32 %v887, %v966
  %v968 = vpop.f32.mrb[0].mxu0
  %969 = vmatprep.mubr.bf16.mxu0 0
  %970 = vmatmul.mubr.bf16.gmra.mrb[0].mxu0 %v911
  %v971 = vpop.f32.mrb[0].mxu0
  %v972 = vadd.f32 %v887, %v971
  %v973 = vpop.f32.mrb[0].mxu0
  %v974 = vpop.f32.mrb[0].mxu0
  %v975 = vadd.f32 %v887, %v974
  %v976 = vpop.f32.mrb[0].mxu0
  %977 = vdwg.mxu0
  %978 = vst [vmem:[#allocation2] sm:$0xff] %v948
  %979 = vst [vmem:[#allocation2 + $0x8] sm:$0xff] %v951
  %980 = vst [vmem:[#allocation2 + $0x10] sm:$0xff] %v956
  %981 = vst [vmem:[#allocation2 + $0x18] sm:$0xff] %v959
  %982 = vst [vmem:[#allocation2 + $0x20] sm:$0xff] %v964
  %983 = vst [vmem:[#allocation2 + $0x28] sm:$0xff] %v967
  %984 = vst [vmem:[#allocation2 + $0x30] sm:$0xff] %v972
  %985 = vst [vmem:[#allocation2 + $0x38] sm:$0xff] %v975
  %v986 = vld [vmem:[#allocation2] sm:$0xff]
  %v987 = vld [vmem:[%s177] sm:$0xff]
  %v988 = vsel %vm184, %v986, %v987
  %989 = vst [vmem:[#allocation2] sm:$0xff] %v988
  %v990 = vsel %vm184, %v987, %v986
  %991 = vst [vmem:[%s177] sm:$0xff] %v990
  %v992 = vld [vmem:[%s189] sm:$0xff]
  %v993 = vld [vmem:[%s191] sm:$0xff]
  %v994 = vsel %vm184, %v992, %v993
  %995 = vst [vmem:[%s189] sm:$0xff] %v994
  %v996 = vsel %vm184, %v993, %v992
  %997 = vst [vmem:[%s191] sm:$0xff] %v996
  %v998 = vld [vmem:[%s197] sm:$0xff]
  %v999 = vld [vmem:[%s199] sm:$0xff]
  %v1000 = vsel %vm184, %v998, %v999
  %1001 = vst [vmem:[%s197] sm:$0xff] %v1000
  %v1002 = vsel %vm184, %v999, %v998
  %1003 = vst [vmem:[%s199] sm:$0xff] %v1002
  %v1004 = vld [vmem:[%s205] sm:$0xff]
  %v1005 = vld [vmem:[%s207] sm:$0xff]
  %v1006 = vsel %vm184, %v1004, %v1005
  %1007 = vst [vmem:[%s205] sm:$0xff] %v1006
  %v1008 = vsel %vm184, %v1005, %v1004
  %1009 = vst [vmem:[%s207] sm:$0xff] %v1008
  %v1010 = vld [vmem:[%s5] sm:$0xf]
  %v1011 = vld [vmem:[%s5 + $0x4] sm:$0xf]
  %v1012 = vld [vmem:[%s5 + $0x8] sm:$0xf]
  %v1013 = vld [vmem:[%s5 + $0xc] sm:$0xf]
  %v1014 = vld [vmem:[#allocation2] sm:$0xff]
  %v1019 = vunpack.c.l.b16 %v1010
  %v1020 = vunpack.c.l.b16 %v1011
  %v1021 = vunpack.c.l.b16 %v1012
  %v1022 = vunpack.c.l.b16 %v1013
  %v1023 = vpack.c.b16 %v1020, %v1019
  %v1024 = vpack.c.b16 %v1022, %v1021
  %1027 = vmatprep.subr.bf16.mxu0 0
  %1028 = vmatpush1.bf16.msra.mxu0 %v1023
  %1029 = vmatprep.subr.bf16.mxu0 0
  %1030 = vmatpush1.bf16.msra.mxu0 %v1024
  %1031 = vmatprep.subr.bf16.mxu0 0
  %1032 = vmatpush1.bf16.msra.mxu0 0
  %1033 = vmatprep.subr.bf16.mxu0 0
  %1034 = vmatpush1.bf16.msra.mxu0 0
  %1035 = vmatprep.subr.bf16.mxu0 0
  %1036 = vmatpush1.bf16.msra.mxu0 0
  %1037 = vmatprep.subr.bf16.mxu0 0
  %1038 = vmatpush1.bf16.msra.mxu0 0
  %1039 = vmatprep.subr.bf16.mxu0 0
  %1040 = vmatpush1.bf16.msra.mxu0 0
  %1041 = vmatprep.subr.bf16.mxu0 0
  %1042 = vmatpush1.bf16.msra.mxu0 0
  %1043 = vmatprep.subr.bf16.mxu0 0
  %1044 = vmatpush1.bf16.msra.mxu0 0
  %1045 = vmatprep.subr.bf16.mxu0 0
  %1046 = vmatpush1.bf16.msra.mxu0 0
  %1047 = vmatprep.subr.bf16.mxu0 0
  %1048 = vmatpush1.bf16.msra.mxu0 0
  %1049 = vmatprep.subr.bf16.mxu0 0
  %1050 = vmatpush1.bf16.msra.mxu0 0
  %1051 = vmatprep.subr.bf16.mxu0 0
  %1052 = vmatpush1.bf16.msra.mxu0 0
  %1053 = vmatprep.subr.bf16.mxu0 0
  %1054 = vmatpush1.bf16.msra.mxu0 0
  %1055 = vmatprep.subr.bf16.mxu0 0
  %1056 = vmatpush1.bf16.msra.mxu0 0
  %1057 = vmatprep.subr.bf16.mxu0 0
  %1058 = vmatpush1.bf16.msra.mxu0 0
  %1059 = vmatprep.mubr.bf16.mxu0 0
  %1060 = vmatmul.mubr.bf16.gmra.mrb[0].mxu0 %v232
  %v1061 = vpop.f32.mrb[0].mxu0
  %v1062 = vadd.f32 0.0, %v1061
  %v1063 = vpop.f32.mrb[0].mxu0
  %v1064 = vpop.f32.mrb[0].mxu0
  %v1065 = vpop.f32.mrb[0].mxu0
  %1066 = vdwg.mxu0
  %v1067 = vadd.f32 %v1014, %v1062
  %v1068 = vxor.u32 %v1067, 2147483648
  %v1069 = vmul.f32 %v1068, 1.442695
  %v1070 = vpow.pop %v1069
  %v1071 = vadd.f32 %v1070, 1.0
  %v1072 = vrcp.pop %v1071
  %v1073 = vmul.f32 1.0, %v1072
  %v1074 = vtanh.pop %v1067
  %v1075 = vmul.f32 %v1073, 0.0
  %1077 = vrot.lane.b32.xlu0 %v1074, 32
  %v1078 = vpop.permute.xlu0 %1077
  %v1080 = vmul.f32 %v1073, %v1078
  %1082 = vrot.lane.b32.xlu0 %v1080, 32
  %v1083 = vpop.permute.xlu0 %1082
  %v1085 = vadd.f32 %v1075, %v1083
  %v1086 = vtanh.pop %v1085
  %1088 = vrot.lane.b32.xlu0 %v1086, 32
  %v1089 = vpop.permute.xlu0 %1088
  %v1091 = vmul.f32 %v1073, %v1089
  %1093 = vrot.lane.b32.xlu0 %v1091, 64
  %v1094 = vpop.permute.xlu0 %1093
  %1096 = vst.msk [vmem:[#allocation4] sm:$0xff] %vm90, %v1094
  %s1097 = scalar_lea.vmem [#allocation4], 56
  %1098 = vst.msk [vmem:[%s1097] sm:$0xff] %vm305, %v1094
  %v1099 = vld [vmem:[%s189] sm:$0xff]
  %v1100 = vpack.c.bf16 %v1091, %v1091
  %1102 = vrot.lane.b32.xlu0 %v1100, 64
  %v1103 = vpop.permute.xlu0 %1102
  %v1105 = vsel %vm230, %v1103, 0
  %1107 = vmatprep.subr.bf16.mxu0 0
  %1108 = vmatpush1.bf16.msra.mxu0 %v1023
  %1109 = vmatprep.subr.bf16.mxu0 0
  %1110 = vmatpush1.bf16.msra.mxu0 %v1024
  %1111 = vmatprep.subr.bf16.mxu0 0
  %1112 = vmatpush1.bf16.msra.mxu0 0
  %1113 = vmatprep.subr.bf16.mxu0 0
  %1114 = vmatpush1.bf16.msra.mxu0 0
  %1115 = vmatprep.subr.bf16.mxu0 0
  %1116 = vmatpush1.bf16.msra.mxu0 0
  %1117 = vmatprep.subr.bf16.mxu0 0
  %1118 = vmatpush1.bf16.msra.mxu0 0
  %1119 = vmatprep.subr.bf16.mxu0 0
  %1120 = vmatpush1.bf16.msra.mxu0 0
  %1121 = vmatprep.subr.bf16.mxu0 0
  %1122 = vmatpush1.bf16.msra.mxu0 0
  %1123 = vmatprep.subr.bf16.mxu0 0
  %1124 = vmatpush1.bf16.msra.mxu0 0
  %1125 = vmatprep.subr.bf16.mxu0 0
  %1126 = vmatpush1.bf16.msra.mxu0 0
  %1127 = vmatprep.subr.bf16.mxu0 0
  %1128 = vmatpush1.bf16.msra.mxu0 0
  %1129 = vmatprep.subr.bf16.mxu0 0
  %1130 = vmatpush1.bf16.msra.mxu0 0
  %1131 = vmatprep.subr.bf16.mxu0 0
  %1132 = vmatpush1.bf16.msra.mxu0 0
  %1133 = vmatprep.subr.bf16.mxu0 0
  %1134 = vmatpush1.bf16.msra.mxu0 0
  %1135 = vmatprep.subr.bf16.mxu0 0
  %1136 = vmatpush1.bf16.msra.mxu0 0
  %1137 = vmatprep.subr.bf16.mxu0 0
  %1138 = vmatpush1.bf16.msra.mxu0 0
  %1139 = vmatprep.mubr.bf16.mxu0 0
  %1140 = vmatmul.mubr.bf16.gmra.mrb[0].mxu0 %v1105
  %v1141 = vpop.f32.mrb[0].mxu0
  %v1142 = vadd.f32 0.0, %v1141
  %v1143 = vpop.f32.mrb[0].mxu0
  %v1144 = vpop.f32.mrb[0].mxu0
  %v1145 = vpop.f32.mrb[0].mxu0
  %1146 = vdwg.mxu0
  %v1147 = vadd.f32 %v1099, %v1142
  %v1148 = vxor.u32 %v1147, 2147483648
  %v1149 = vmul.f32 %v1148, 1.442695
  %v1150 = vpow.pop %v1149
  %v1151 = vadd.f32 %v1150, 1.0
  %v1152 = vrcp.pop %v1151
  %v1153 = vmul.f32 1.0, %v1152
  %v1154 = vtanh.pop %v1147
  %v1155 = vmul.f32 %v1153, %v1085
  %1157 = vrot.lane.b32.xlu0 %v1154, 32
  %v1158 = vpop.permute.xlu0 %1157
  %v1160 = vmul.f32 %v1153, %v1158
  %1162 = vrot.lane.b32.xlu0 %v1160, 32
  %v1163 = vpop.permute.xlu0 %1162
  %v1165 = vadd.f32 %v1155, %v1163
  %v1166 = vtanh.pop %v1165
  %1168 = vrot.lane.b32.xlu0 %v1166, 32
  %v1169 = vpop.permute.xlu0 %1168
  %v1171 = vmul.f32 %v1153, %v1169
  %1173 = vrot.lane.b32.xlu0 %v1171, 64
  %v1174 = vpop.permute.xlu0 %1173
  %s1176 = scalar_lea.vmem [#allocation4], 8
  %1177 = vst.msk [vmem:[%s1176] sm:$0xff] %vm90, %v1174
  %s1178 = scalar_lea.vmem [#allocation4], 48
  %1179 = vst.msk [vmem:[%s1178] sm:$0xff] %vm305, %v1174
  %v1180 = vld [vmem:[%s197] sm:$0xff]
  %v1181 = vpack.c.bf16 %v1171, %v1171
  %1183 = vrot.lane.b32.xlu0 %v1181, 64
  %v1184 = vpop.permute.xlu0 %1183
  %v1186 = vsel %vm230, %v1184, 0
  %1188 = vmatprep.subr.bf16.mxu0 0
  %1189 = vmatpush1.bf16.msra.mxu0 %v1023
  %1190 = vmatprep.subr.bf16.mxu0 0
  %1191 = vmatpush1.bf16.msra.mxu0 %v1024
  %1192 = vmatprep.subr.bf16.mxu0 0
  %1193 = vmatpush1.bf16.msra.mxu0 0
  %1194 = vmatprep.subr.bf16.mxu0 0
  %1195 = vmatpush1.bf16.msra.mxu0 0
  %1196 = vmatprep.subr.bf16.mxu0 0
  %1197 = vmatpush1.bf16.msra.mxu0 0
  %1198 = vmatprep.subr.bf16.mxu0 0
  %1199 = vmatpush1.bf16.msra.mxu0 0
  %1200 = vmatprep.subr.bf16.mxu0 0
  %1201 = vmatpush1.bf16.msra.mxu0 0
  %1202 = vmatprep.subr.bf16.mxu0 0
  %1203 = vmatpush1.bf16.msra.mxu0 0
  %1204 = vmatprep.subr.bf16.mxu0 0
  %1205 = vmatpush1.bf16.msra.mxu0 0
  %1206 = vmatprep.subr.bf16.mxu0 0
  %1207 = vmatpush1.bf16.msra.mxu0 0
  %1208 = vmatprep.subr.bf16.mxu0 0
  %1209 = vmatpush1.bf16.msra.mxu0 0
  %1210 = vmatprep.subr.bf16.mxu0 0
  %1211 = vmatpush1.bf16.msra.mxu0 0
  %1212 = vmatprep.subr.bf16.mxu0 0
  %1213 = vmatpush1.bf16.msra.mxu0 0
  %1214 = vmatprep.subr.bf16.mxu0 0
  %1215 = vmatpush1.bf16.msra.mxu0 0
  %1216 = vmatprep.subr.bf16.mxu0 0
  %1217 = vmatpush1.bf16.msra.mxu0 0
  %1218 = vmatprep.subr.bf16.mxu0 0
  %1219 = vmatpush1.bf16.msra.mxu0 0
  %1220 = vmatprep.mubr.bf16.mxu0 0
  %1221 = vmatmul.mubr.bf16.gmra.mrb[0].mxu0 %v1186
  %v1222 = vpop.f32.mrb[0].mxu0
  %v1223 = vadd.f32 0.0, %v1222
  %v1224 = vpop.f32.mrb[0].mxu0
  %v1225 = vpop.f32.mrb[0].mxu0
  %v1226 = vpop.f32.mrb[0].mxu0
  %1227 = vdwg.mxu0
  %v1228 = vadd.f32 %v1180, %v1223
  %v1229 = vxor.u32 %v1228, 2147483648
  %v1230 = vmul.f32 %v1229, 1.442695
  %v1231 = vpow.pop %v1230
  %v1232 = vadd.f32 %v1231, 1.0
  %v1233 = vrcp.pop %v1232
  %v1234 = vmul.f32 1.0, %v1233
  %v1235 = vtanh.pop %v1228
  %v1236 = vmul.f32 %v1234, %v1165
  %1238 = vrot.lane.b32.xlu0 %v1235, 32
  %v1239 = vpop.permute.xlu0 %1238
  %v1241 = vmul.f32 %v1234, %v1239
  %1243 = vrot.lane.b32.xlu0 %v1241, 32
  %v1244 = vpop.permute.xlu0 %1243
  %v1246 = vadd.f32 %v1236, %v1244
  %v1247 = vtanh.pop %v1246
  %1249 = vrot.lane.b32.xlu0 %v1247, 32
  %v1250 = vpop.permute.xlu0 %1249
  %v1252 = vmul.f32 %v1234, %v1250
  %1254 = vrot.lane.b32.xlu0 %v1252, 64
  %v1255 = vpop.permute.xlu0 %1254
  %s1257 = scalar_lea.vmem [#allocation4], 16
  %1258 = vst.msk [vmem:[%s1257] sm:$0xff] %vm90, %v1255
  %s1259 = scalar_lea.vmem [#allocation4], 40
  %1260 = vst.msk [vmem:[%s1259] sm:$0xff] %vm305, %v1255
  %v1261 = vld [vmem:[%s205] sm:$0xff]
  %v1262 = vpack.c.bf16 %v1252, %v1252
  %1264 = vrot.lane.b32.xlu0 %v1262, 64
  %v1265 = vpop.permute.xlu0 %1264
  %v1267 = vsel %vm230, %v1265, 0
  %1269 = vmatprep.subr.bf16.mxu0 0
  %1270 = vmatpush1.bf16.msra.mxu0 %v1023
  %1271 = vmatprep.subr.bf16.mxu0 0
  %1272 = vmatpush1.bf16.msra.mxu0 %v1024
  %1273 = vmatprep.subr.bf16.mxu0 0
  %1274 = vmatpush1.bf16.msra.mxu0 0
  %1275 = vmatprep.subr.bf16.mxu0 0
  %1276 = vmatpush1.bf16.msra.mxu0 0
  %1277 = vmatprep.subr.bf16.mxu0 0
  %1278 = vmatpush1.bf16.msra.mxu0 0
  %1279 = vmatprep.subr.bf16.mxu0 0
  %1280 = vmatpush1.bf16.msra.mxu0 0
  %1281 = vmatprep.subr.bf16.mxu0 0
  %1282 = vmatpush1.bf16.msra.mxu0 0
  %1283 = vmatprep.subr.bf16.mxu0 0
  %1284 = vmatpush1.bf16.msra.mxu0 0
  %1285 = vmatprep.subr.bf16.mxu0 0
  %1286 = vmatpush1.bf16.msra.mxu0 0
  %1287 = vmatprep.subr.bf16.mxu0 0
  %1288 = vmatpush1.bf16.msra.mxu0 0
  %1289 = vmatprep.subr.bf16.mxu0 0
  %1290 = vmatpush1.bf16.msra.mxu0 0
  %1291 = vmatprep.subr.bf16.mxu0 0
  %1292 = vmatpush1.bf16.msra.mxu0 0
  %1293 = vmatprep.subr.bf16.mxu0 0
  %1294 = vmatpush1.bf16.msra.mxu0 0
  %1295 = vmatprep.subr.bf16.mxu0 0
  %1296 = vmatpush1.bf16.msra.mxu0 0
  %1297 = vmatprep.subr.bf16.mxu0 0
  %1298 = vmatpush1.bf16.msra.mxu0 0
  %1299 = vmatprep.subr.bf16.mxu0 0
  %1300 = vmatpush1.bf16.msra.mxu0 0
  %1301 = vmatprep.mubr.bf16.mxu0 0
  %1302 = vmatmul.mubr.bf16.gmra.mrb[0].mxu0 %v1267
  %v1303 = vpop.f32.mrb[0].mxu0
  %v1304 = vadd.f32 0.0, %v1303
  %v1305 = vpop.f32.mrb[0].mxu0
  %v1306 = vpop.f32.mrb[0].mxu0
  %v1307 = vpop.f32.mrb[0].mxu0
  %1308 = vdwg.mxu0
  %v1309 = vadd.f32 %v1261, %v1304
  %v1310 = vxor.u32 %v1309, 2147483648
  %v1311 = vmul.f32 %v1310, 1.442695
  %v1312 = vpow.pop %v1311
  %v1313 = vadd.f32 %v1312, 1.0
  %v1314 = vrcp.pop %v1313
  %v1315 = vmul.f32 1.0, %v1314
  %v1316 = vtanh.pop %v1309
  %v1317 = vmul.f32 %v1315, %v1246
  %1319 = vrot.lane.b32.xlu0 %v1316, 32
  %v1320 = vpop.permute.xlu0 %1319
  %v1322 = vmul.f32 %v1315, %v1320
  %1324 = vrot.lane.b32.xlu0 %v1322, 32
  %v1325 = vpop.permute.xlu0 %1324
  %v1327 = vadd.f32 %v1317, %v1325
  %v1328 = vtanh.pop %v1327
  %1330 = vrot.lane.b32.xlu0 %v1328, 32
  %v1331 = vpop.permute.xlu0 %1330
  %v1333 = vmul.f32 %v1315, %v1331
  %1335 = vrot.lane.b32.xlu0 %v1333, 64
  %v1336 = vpop.permute.xlu0 %1335
  %s1338 = scalar_lea.vmem [#allocation4], 24
  %1339 = vst.msk [vmem:[%s1338] sm:$0xff] %vm90, %v1336
  %s1340 = scalar_lea.vmem [#allocation4], 32
  %1341 = vst.msk [vmem:[%s1340] sm:$0xff] %vm305, %v1336
  %v1342 = vld [vmem:[%s207] sm:$0xff]
  %v1343 = vpack.c.bf16 %v1333, %v1333
  %1345 = vrot.lane.b32.xlu0 %v1343, 64
  %v1346 = vpop.permute.xlu0 %1345
  %v1348 = vsel %vm230, %v1346, 0
  %1350 = vmatprep.subr.bf16.mxu0 0
  %1351 = vmatpush1.bf16.msra.mxu0 %v1023
  %1352 = vmatprep.subr.bf16.mxu0 0
  %1353 = vmatpush1.bf16.msra.mxu0 %v1024
  %1354 = vmatprep.subr.bf16.mxu0 0
  %1355 = vmatpush1.bf16.msra.mxu0 0
  %1356 = vmatprep.subr.bf16.mxu0 0
  %1357 = vmatpush1.bf16.msra.mxu0 0
  %1358 = vmatprep.subr.bf16.mxu0 0
  %1359 = vmatpush1.bf16.msra.mxu0 0
  %1360 = vmatprep.subr.bf16.mxu0 0
  %1361 = vmatpush1.bf16.msra.mxu0 0
  %1362 = vmatprep.subr.bf16.mxu0 0
  %1363 = vmatpush1.bf16.msra.mxu0 0
  %1364 = vmatprep.subr.bf16.mxu0 0
  %1365 = vmatpush1.bf16.msra.mxu0 0
  %1366 = vmatprep.subr.bf16.mxu0 0
  %1367 = vmatpush1.bf16.msra.mxu0 0
  %1368 = vmatprep.subr.bf16.mxu0 0
  %1369 = vmatpush1.bf16.msra.mxu0 0
  %1370 = vmatprep.subr.bf16.mxu0 0
  %1371 = vmatpush1.bf16.msra.mxu0 0
  %1372 = vmatprep.subr.bf16.mxu0 0
  %1373 = vmatpush1.bf16.msra.mxu0 0
  %1374 = vmatprep.subr.bf16.mxu0 0
  %1375 = vmatpush1.bf16.msra.mxu0 0
  %1376 = vmatprep.subr.bf16.mxu0 0
  %1377 = vmatpush1.bf16.msra.mxu0 0
  %1378 = vmatprep.subr.bf16.mxu0 0
  %1379 = vmatpush1.bf16.msra.mxu0 0
  %1380 = vmatprep.subr.bf16.mxu0 0
  %1381 = vmatpush1.bf16.msra.mxu0 0
  %1382 = vmatprep.mubr.bf16.mxu0 0
  %1383 = vmatmul.mubr.bf16.gmra.mrb[0].mxu0 %v1348
  %v1384 = vpop.f32.mrb[0].mxu0
  %v1385 = vadd.f32 0.0, %v1384
  %v1386 = vpop.f32.mrb[0].mxu0
  %v1387 = vpop.f32.mrb[0].mxu0
  %v1388 = vpop.f32.mrb[0].mxu0
  %1389 = vdwg.mxu0
  %v1390 = vadd.f32 %v1342, %v1385
  %v1391 = vxor.u32 %v1390, 2147483648
  %v1392 = vmul.f32 %v1391, 1.442695
  %v1393 = vpow.pop %v1392
  %v1394 = vadd.f32 %v1393, 1.0
  %v1395 = vrcp.pop %v1394
  %v1396 = vmul.f32 1.0, %v1395
  %v1397 = vtanh.pop %v1390
  %v1398 = vmul.f32 %v1396, %v1327
  %1400 = vrot.lane.b32.xlu0 %v1397, 32
  %v1401 = vpop.permute.xlu0 %1400
  %v1403 = vmul.f32 %v1396, %v1401
  %1405 = vrot.lane.b32.xlu0 %v1403, 32
  %v1406 = vpop.permute.xlu0 %1405
  %v1408 = vadd.f32 %v1398, %v1406
  %v1409 = vtanh.pop %v1408
  %1411 = vrot.lane.b32.xlu0 %v1409, 32
  %v1412 = vpop.permute.xlu0 %1411
  %v1414 = vmul.f32 %v1396, %v1412
  %1416 = vrot.lane.b32.xlu0 %v1414, 64
  %v1417 = vpop.permute.xlu0 %1416
  %1419 = vst.msk [vmem:[%s1340] sm:$0xff] %vm90, %v1417
  %1420 = vst.msk [vmem:[%s1338] sm:$0xff] %vm305, %v1417
  %v1421 = vld [vmem:[%s199] sm:$0xff]
  %v1422 = vpack.c.bf16 %v1414, %v1414
  %1424 = vrot.lane.b32.xlu0 %v1422, 64
  %v1425 = vpop.permute.xlu0 %1424
  %v1427 = vsel %vm230, %v1425, 0
  %1429 = vmatprep.subr.bf16.mxu0 0
  %1430 = vmatpush1.bf16.msra.mxu0 %v1023
  %1431 = vmatprep.subr.bf16.mxu0 0
  %1432 = vmatpush1.bf16.msra.mxu0 %v1024
  %1433 = vmatprep.subr.bf16.mxu0 0
  %1434 = vmatpush1.bf16.msra.mxu0 0
  %1435 = vmatprep.subr.bf16.mxu0 0
  %1436 = vmatpush1.bf16.msra.mxu0 0
  %1437 = vmatprep.subr.bf16.mxu0 0
  %1438 = vmatpush1.bf16.msra.mxu0 0
  %1439 = vmatprep.subr.bf16.mxu0 0
  %1440 = vmatpush1.bf16.msra.mxu0 0
  %1441 = vmatprep.subr.bf16.mxu0 0
  %1442 = vmatpush1.bf16.msra.mxu0 0
  %1443 = vmatprep.subr.bf16.mxu0 0
  %1444 = vmatpush1.bf16.msra.mxu0 0
  %1445 = vmatprep.subr.bf16.mxu0 0
  %1446 = vmatpush1.bf16.msra.mxu0 0
  %1447 = vmatprep.subr.bf16.mxu0 0
  %1448 = vmatpush1.bf16.msra.mxu0 0
  %1449 = vmatprep.subr.bf16.mxu0 0
  %1450 = vmatpush1.bf16.msra.mxu0 0
  %1451 = vmatprep.subr.bf16.mxu0 0
  %1452 = vmatpush1.bf16.msra.mxu0 0
  %1453 = vmatprep.subr.bf16.mxu0 0
  %1454 = vmatpush1.bf16.msra.mxu0 0
  %1455 = vmatprep.subr.bf16.mxu0 0
  %1456 = vmatpush1.bf16.msra.mxu0 0
  %1457 = vmatprep.subr.bf16.mxu0 0
  %1458 = vmatpush1.bf16.msra.mxu0 0
  %1459 = vmatprep.subr.bf16.mxu0 0
  %1460 = vmatpush1.bf16.msra.mxu0 0
  %1461 = vmatprep.mubr.bf16.mxu0 0
  %1462 = vmatmul.mubr.bf16.gmra.mrb[0].mxu0 %v1427
  %v1463 = vpop.f32.mrb[0].mxu0
  %v1464 = vadd.f32 0.0, %v1463
  %v1465 = vpop.f32.mrb[0].mxu0
  %v1466 = vpop.f32.mrb[0].mxu0
  %v1467 = vpop.f32.mrb[0].mxu0
  %1468 = vdwg.mxu0
  %v1469 = vadd.f32 %v1421, %v1464
  %v1470 = vxor.u32 %v1469, 2147483648
  %v1471 = vmul.f32 %v1470, 1.442695
  %v1472 = vpow.pop %v1471
  %v1473 = vadd.f32 %v1472, 1.0
  %v1474 = vrcp.pop %v1473
  %v1475 = vmul.f32 1.0, %v1474
  %v1476 = vtanh.pop %v1469
  %v1477 = vmul.f32 %v1475, %v1408
  %1479 = vrot.lane.b32.xlu0 %v1476, 32
  %v1480 = vpop.permute.xlu0 %1479
  %v1482 = vmul.f32 %v1475, %v1480
  %1484 = vrot.lane.b32.xlu0 %v1482, 32
  %v1485 = vpop.permute.xlu0 %1484
  %v1487 = vadd.f32 %v1477, %v1485
  %v1488 = vtanh.pop %v1487
  %1490 = vrot.lane.b32.xlu0 %v1488, 32
  %v1491 = vpop.permute.xlu0 %1490
  %v1493 = vmul.f32 %v1475, %v1491
  %1495 = vrot.lane.b32.xlu0 %v1493, 64
  %v1496 = vpop.permute.xlu0 %1495
  %1498 = vst.msk [vmem:[%s1259] sm:$0xff] %vm90, %v1496
  %1499 = vst.msk [vmem:[%s1257] sm:$0xff] %vm305, %v1496
  %v1500 = vld [vmem:[%s191] sm:$0xff]
  %v1501 = vpack.c.bf16 %v1493, %v1493
  %1503 = vrot.lane.b32.xlu0 %v1501, 64
  %v1504 = vpop.permute.xlu0 %1503
  %v1506 = vsel %vm230, %v1504, 0
  %1508 = vmatprep.subr.bf16.mxu0 0
  %1509 = vmatpush1.bf16.msra.mxu0 %v1023
  %1510 = vmatprep.subr.bf16.mxu0 0
  %1511 = vmatpush1.bf16.msra.mxu0 %v1024
  %1512 = vmatprep.subr.bf16.mxu0 0
  %1513 = vmatpush1.bf16.msra.mxu0 0
  %1514 = vmatprep.subr.bf16.mxu0 0
  %1515 = vmatpush1.bf16.msra.mxu0 0
  %1516 = vmatprep.subr.bf16.mxu0 0
  %1517 = vmatpush1.bf16.msra.mxu0 0
  %1518 = vmatprep.subr.bf16.mxu0 0
  %1519 = vmatpush1.bf16.msra.mxu0 0
  %1520 = vmatprep.subr.bf16.mxu0 0
  %1521 = vmatpush1.bf16.msra.mxu0 0
  %1522 = vmatprep.subr.bf16.mxu0 0
  %1523 = vmatpush1.bf16.msra.mxu0 0
  %1524 = vmatprep.subr.bf16.mxu0 0
  %1525 = vmatpush1.bf16.msra.mxu0 0
  %1526 = vmatprep.subr.bf16.mxu0 0
  %1527 = vmatpush1.bf16.msra.mxu0 0
  %1528 = vmatprep.subr.bf16.mxu0 0
  %1529 = vmatpush1.bf16.msra.mxu0 0
  %1530 = vmatprep.subr.bf16.mxu0 0
  %1531 = vmatpush1.bf16.msra.mxu0 0
  %1532 = vmatprep.subr.bf16.mxu0 0
  %1533 = vmatpush1.bf16.msra.mxu0 0
  %1534 = vmatprep.subr.bf16.mxu0 0
  %1535 = vmatpush1.bf16.msra.mxu0 0
  %1536 = vmatprep.subr.bf16.mxu0 0
  %1537 = vmatpush1.bf16.msra.mxu0 0
  %1538 = vmatprep.subr.bf16.mxu0 0
  %1539 = vmatpush1.bf16.msra.mxu0 0
  %1540 = vmatprep.mubr.bf16.mxu0 0
  %1541 = vmatmul.mubr.bf16.gmra.mrb[0].mxu0 %v1506
  %v1542 = vpop.f32.mrb[0].mxu0
  %v1543 = vadd.f32 0.0, %v1542
  %v1544 = vpop.f32.mrb[0].mxu0
  %v1545 = vpop.f32.mrb[0].mxu0
  %v1546 = vpop.f32.mrb[0].mxu0
  %1547 = vdwg.mxu0
  %v1548 = vadd.f32 %v1500, %v1543
  %v1549 = vxor.u32 %v1548, 2147483648
  %v1550 = vmul.f32 %v1549, 1.442695
  %v1551 = vpow.pop %v1550
  %v1552 = vadd.f32 %v1551, 1.0
  %v1553 = vrcp.pop %v1552
  %v1554 = vmul.f32 1.0, %v1553
  %v1555 = vtanh.pop %v1548
  %v1556 = vmul.f32 %v1554, %v1487
  %1558 = vrot.lane.b32.xlu0 %v1555, 32
  %v1559 = vpop.permute.xlu0 %1558
  %v1561 = vmul.f32 %v1554, %v1559
  %1563 = vrot.lane.b32.xlu0 %v1561, 32
  %v1564 = vpop.permute.xlu0 %1563
  %v1566 = vadd.f32 %v1556, %v1564
  %v1567 = vtanh.pop %v1566
  %1569 = vrot.lane.b32.xlu0 %v1567, 32
  %v1570 = vpop.permute.xlu0 %1569
  %v1572 = vmul.f32 %v1554, %v1570
  %1574 = vrot.lane.b32.xlu0 %v1572, 64
  %v1575 = vpop.permute.xlu0 %1574
  %1577 = vst.msk [vmem:[%s1178] sm:$0xff] %vm90, %v1575
  %1578 = vst.msk [vmem:[%s1176] sm:$0xff] %vm305, %v1575
  %v1579 = vld [vmem:[%s177] sm:$0xff]
  %v1580 = vpack.c.bf16 %v1572, %v1572
  %1582 = vrot.lane.b32.xlu0 %v1580, 64
  %v1583 = vpop.permute.xlu0 %1582
  %v1585 = vsel %vm230, %v1583, 0
  %1587 = vmatprep.subr.bf16.mxu0 0
  %1588 = vmatpush1.bf16.msra.mxu0 %v1023
  %1589 = vmatprep.subr.bf16.mxu0 0
  %1590 = vmatpush1.bf16.msra.mxu0 %v1024
  %1591 = vmatprep.subr.bf16.mxu0 0
  %1592 = vmatpush1.bf16.msra.mxu0 0
  %1593 = vmatprep.subr.bf16.mxu0 0
  %1594 = vmatpush1.bf16.msra.mxu0 0
  %1595 = vmatprep.subr.bf16.mxu0 0
  %1596 = vmatpush1.bf16.msra.mxu0 0
  %1597 = vmatprep.subr.bf16.mxu0 0
  %1598 = vmatpush1.bf16.msra.mxu0 0
  %1599 = vmatprep.subr.bf16.mxu0 0
  %1600 = vmatpush1.bf16.msra.mxu0 0
  %1601 = vmatprep.subr.bf16.mxu0 0
  %1602 = vmatpush1.bf16.msra.mxu0 0
  %1603 = vmatprep.subr.bf16.mxu0 0
  %1604 = vmatpush1.bf16.msra.mxu0 0
  %1605 = vmatprep.subr.bf16.mxu0 0
  %1606 = vmatpush1.bf16.msra.mxu0 0
  %1607 = vmatprep.subr.bf16.mxu0 0
  %1608 = vmatpush1.bf16.msra.mxu0 0
  %1609 = vmatprep.subr.bf16.mxu0 0
  %1610 = vmatpush1.bf16.msra.mxu0 0
  %1611 = vmatprep.subr.bf16.mxu0 0
  %1612 = vmatpush1.bf16.msra.mxu0 0
  %1613 = vmatprep.subr.bf16.mxu0 0
  %1614 = vmatpush1.bf16.msra.mxu0 0
  %1615 = vmatprep.subr.bf16.mxu0 0
  %1616 = vmatpush1.bf16.msra.mxu0 0
  %1617 = vmatprep.subr.bf16.mxu0 0
  %1618 = vmatpush1.bf16.msra.mxu0 0
  %1619 = vmatprep.mubr.bf16.mxu0 0
  %1620 = vmatmul.mubr.bf16.gmra.mrb[0].mxu0 %v1585
  %v1621 = vpop.f32.mrb[0].mxu0
  %v1622 = vadd.f32 0.0, %v1621
  %v1623 = vpop.f32.mrb[0].mxu0
  %v1624 = vpop.f32.mrb[0].mxu0
  %v1625 = vpop.f32.mrb[0].mxu0
  %1626 = vdwg.mxu0
  %v1627 = vadd.f32 %v1579, %v1622
  %v1628 = vxor.u32 %v1627, 2147483648
  %v1629 = vmul.f32 %v1628, 1.442695
  %v1630 = vpow.pop %v1629
  %v1631 = vadd.f32 %v1630, 1.0
  %v1632 = vrcp.pop %v1631
  %v1633 = vmul.f32 1.0, %v1632
  %v1634 = vtanh.pop %v1627
  %v1635 = vmul.f32 %v1633, %v1566
  %1637 = vrot.lane.b32.xlu0 %v1634, 32
  %v1638 = vpop.permute.xlu0 %1637
  %v1640 = vmul.f32 %v1633, %v1638
  %1642 = vrot.lane.b32.xlu0 %v1640, 32
  %v1643 = vpop.permute.xlu0 %1642
  %v1645 = vadd.f32 %v1635, %v1643
  %v1646 = vtanh.pop %v1645
  %1648 = vrot.lane.b32.xlu0 %v1646, 32
  %v1649 = vpop.permute.xlu0 %1648
  %v1651 = vmul.f32 %v1633, %v1649
  %1653 = vrot.lane.b32.xlu0 %v1651, 64
  %v1654 = vpop.permute.xlu0 %1653
  %1656 = vst.msk [vmem:[%s1097] sm:$0xff] %vm90, %v1654
  %1657 = vst.msk [vmem:[#allocation4] sm:$0xff] %vm305, %v1654
  %v1658 = vld [vmem:[#allocation4] sm:$0xff]
  %v1659 = vld [vmem:[#allocation4 + $0x8] sm:$0xff]
  %v1660 = vld [vmem:[#allocation4 + $0x10] sm:$0xff]
  %v1661 = vld [vmem:[#allocation4 + $0x18] sm:$0xff]
  %v1662 = vld [vmem:[#allocation4 + $0x20] sm:$0xff]
  %v1663 = vld [vmem:[#allocation4 + $0x28] sm:$0xff]
  %v1664 = vld [vmem:[#allocation4 + $0x30] sm:$0xff]
  %v1665 = vld [vmem:[#allocation4 + $0x38] sm:$0xff]
  %v1666 = vsel %vm230, %v1658, 0.0
  %v1667 = vsel %vm230, %v1659, 0.0
  %v1668 = vadd.f32 %v1666, %v1667
  %v1669 = vsel %vm230, %v1660, 0.0
  %v1670 = vadd.f32 %v1668, %v1669
  %v1671 = vsel %vm230, %v1661, 0.0
  %v1672 = vadd.f32 %v1670, %v1671
  %v1673 = vsel %vm230, %v1662, 0.0
  %v1674 = vadd.f32 %v1672, %v1673
  %v1675 = vsel %vm230, %v1663, 0.0
  %v1676 = vadd.f32 %v1674, %v1675
  %v1677 = vsel %vm230, %v1664, 0.0
  %v1678 = vadd.f32 %v1676, %v1677
  %v1679 = vsel %vm230, %v1665, 0.0
  %v1680 = vadd.f32 %v1678, %v1679
  %v1681 = vmul.f32 %v1658, %v1658
  %v1682 = vmul.f32 %v1659, %v1659
  %v1683 = vmul.f32 %v1660, %v1660
  %v1684 = vmul.f32 %v1661, %v1661
  %v1685 = vmul.f32 %v1662, %v1662
  %v1686 = vmul.f32 %v1663, %v1663
  %v1687 = vmul.f32 %v1664, %v1664
  %v1688 = vmul.f32 %v1665, %v1665
  %v1689 = vsel %vm230, %v1681, 0.0
  %v1690 = vsel %vm230, %v1682, 0.0
  %v1691 = vadd.f32 %v1689, %v1690
  %v1692 = vsel %vm230, %v1683, 0.0
  %v1693 = vadd.f32 %v1691, %v1692
  %v1694 = vsel %vm230, %v1684, 0.0
  %v1695 = vadd.f32 %v1693, %v1694
  %v1696 = vsel %vm230, %v1685, 0.0
  %v1697 = vadd.f32 %v1695, %v1696
  %v1698 = vsel %vm230, %v1686, 0.0
  %v1699 = vadd.f32 %v1697, %v1698
  %v1700 = vsel %vm230, %v1687, 0.0
  %v1701 = vadd.f32 %v1699, %v1700
  %v1702 = vsel %vm230, %v1688, 0.0
  %v1703 = vadd.f32 %v1701, %v1702
  %v1704 = vld [vmem:[%s8] sm:$0xff]
  %1706 = vset.pattern.permute.xlu0 0
  %1707 = vperm.xlu0 %1706, %v1704
  %v1708 = vpop.permute.xlu0 %1707
  %v1710 = vmul.f32 %v1680, %v1708
  %v1711 = vsel %vm230, %v1710, 0.0
  %v1712 = vrot.slane %v1711, 4
  %v1713 = vadd.f32 %v1711, %v1712
  %v1714 = vrot.slane %v1713, 2
  %v1715 = vadd.f32 %v1713, %v1714
  %v1716 = vrot.slane %v1715, 1
  %v1717 = vadd.f32 %v1715, %v1716
  %v1718 = vmul.f32 %v1717, 0.0625
  %v1719 = vmul.f32 %v1703, %v1708
  %v1720 = vsel %vm230, %v1719, 0.0
  %v1721 = vrot.slane %v1720, 4
  %v1722 = vadd.f32 %v1720, %v1721
  %v1723 = vrot.slane %v1722, 2
  %v1724 = vadd.f32 %v1722, %v1723
  %v1725 = vrot.slane %v1724, 1
  %v1726 = vadd.f32 %v1724, %v1725
  %v1727 = vmul.f32 %v1726, 0.0625
  %v1728 = vmul.f32 %v1718, %v1718
  %v1729 = vsub.f32 %v1727, %v1728
  %v1730 = vadd.f32 %v1729, 1e-05
  %v1731 = vrsqrt.pop %v1730
  %v1732 = vld [vmem:[%s9] sm:$0x1]
  %v1733 = vmul.f32 %v1731, %v1732
  %v1734 = vmul.f32 %v1680, 0.125
  %v1735 = vsub.f32 %v1734, %v1718
  %v1736 = vlaneseq
  %v1737 = vshrl.u32 %v1736, 7
  %v1738 = vsub.s32 0, %v1737
  %v1739 = vrot.slane %v1733, %v1738
  %v1740 = vmul.f32 %v1735, %v1739
  %v1741 = vld [vmem:[%s10] sm:$0x1]
  %v1743 = vlaneseq
  %v1744 = vshrl.u32 %v1743, 7
  %v1745 = vsub.s32 0, %v1744
  %v1746 = vrot.slane %v1741, %v1745
  %v1748 = vadd.f32 %v1740, %v1746
  %v1749 = vpack.c.bf16 %v1748, %v1748
  %v1750 = vld [vmem:[%s11] sm:$0xf]
  %v1751 = vld [vmem:[%s11 + $0x4] sm:$0xf]
  %v1752 = vld [vmem:[%s11 + $0x8] sm:$0xf]
  %v1753 = vld [vmem:[%s11 + $0xc] sm:$0xf]
  %v1754 = vld [vmem:[%s12] sm:$0x1]
  %v1756 = vlaneseq
  %v1757 = vshrl.u32 %v1756, 7
  %v1758 = vsub.s32 0, %v1757
  %v1759 = vrot.slane %v1754, %v1758
  %v1765 = vunpack.c.l.b16 %v1750
  %v1766 = vunpack.c.l.b16 %v1751
  %v1767 = vunpack.c.l.b16 %v1752
  %v1768 = vunpack.c.l.b16 %v1753
  %v1769 = vpack.c.b16 %v1766, %v1765
  %v1770 = vpack.c.b16 %v1768, %v1767
  %v1774 = vsel %vm230, %v1749, 0
  %1776 = vmatprep.subr.bf16.mxu0 0
  %1777 = vmatpush1.bf16.msra.mxu0 %v1769
  %1778 = vmatprep.subr.bf16.mxu0 0
  %1779 = vmatpush1.bf16.msra.mxu0 %v1770
  %1780 = vmatprep.subr.bf16.mxu0 0
  %1781 = vmatpush1.bf16.msra.mxu0 0
  %1782 = vmatprep.subr.bf16.mxu0 0
  %1783 = vmatpush1.bf16.msra.mxu0 0
  %1784 = vmatprep.subr.bf16.mxu0 0
  %1785 = vmatpush1.bf16.msra.mxu0 0
  %1786 = vmatprep.subr.bf16.mxu0 0
  %1787 = vmatpush1.bf16.msra.mxu0 0
  %1788 = vmatprep.subr.bf16.mxu0 0
  %1789 = vmatpush1.bf16.msra.mxu0 0
  %1790 = vmatprep.subr.bf16.mxu0 0
  %1791 = vmatpush1.bf16.msra.mxu0 0
  %1792 = vmatprep.subr.bf16.mxu0 0
  %1793 = vmatpush1.bf16.msra.mxu0 0
  %1794 = vmatprep.subr.bf16.mxu0 0
  %1795 = vmatpush1.bf16.msra.mxu0 0
  %1796 = vmatprep.subr.bf16.mxu0 0
  %1797 = vmatpush1.bf16.msra.mxu0 0
  %1798 = vmatprep.subr.bf16.mxu0 0
  %1799 = vmatpush1.bf16.msra.mxu0 0
  %1800 = vmatprep.subr.bf16.mxu0 0
  %1801 = vmatpush1.bf16.msra.mxu0 0
  %1802 = vmatprep.subr.bf16.mxu0 0
  %1803 = vmatpush1.bf16.msra.mxu0 0
  %1804 = vmatprep.subr.bf16.mxu0 0
  %1805 = vmatpush1.bf16.msra.mxu0 0
  %1806 = vmatprep.subr.bf16.mxu0 0
  %1807 = vmatpush1.bf16.msra.mxu0 0
  %1808 = vmatprep.mubr.bf16.mxu0 0
  %1809 = vmatmul.mubr.bf16.gmra.mrb[0].mxu0 %v1774
  %v1810 = vpop.f32.mrb[0].mxu0
  %v1811 = vadd.f32 %v1759, %v1810
  %v1812 = vpop.f32.mrb[0].mxu0
  %v1813 = vpop.f32.mrb[0].mxu0
  %v1814 = vpop.f32.mrb[0].mxu0
  %1815 = vdwg.mxu0
  %vm1816 = vcmask 64512
  %1817 = vst.msk [vmem:[%s13] sm:$0xff] %vm1816, %v1811
  // Predicated region
  $region54: #{news_classifier_forward.1} parent=0 // pred_check
    _
  $region55: #{news_classifier_forward.1} parent=0 // pred_check_branch
    %1819 = sbr.rel (0) target = $region57
  $region56: #{news_classifier_forward.1} parent=0 // pred_region
    _
  $region57: #{news_classifier_forward.1} parent=0 // pred_fallthru
    _
  // Predicated region
  $region58: #{news_classifier_forward.1} parent=0 // pred_check
    _
  $region59: #{news_classifier_forward.1} parent=0 // pred_check_branch
    %1821 = sbr.rel (0) target = $region61
  $region60: #{news_classifier_forward.1} parent=0 // pred_region
    _
  $region61: #{news_classifier_forward.1} parent=0 // pred_fallthru
    _

</llo_original>
